<compile_context>
chip_gen: v6e
topology: v6e:2x2x1
jax: 0.10.0
libtpu: 0.0.40
codegen_flags: <defaults>
</compile_context>

<pallas_src>
import jax
import jax.numpy as jnp
from jax.experimental import pallas as pl
from jax.experimental.pallas import tpu as pltpu

EPS = 1e-5

LAYER_DIMS = [(768, 768), (768, 512), (512, 384), (384, 384), (384, 384)]
BN_DIMS = [768, 512, 384, 384]

# Row layout of the packed (VEC_ROWS, 768) f32 slab.
BIAS_ROW = [0, 1, 2, 3, 4]          # fc1..fc5 biases
GAMMA_ROW = [5, 6, 7, 8]            # norm1..norm4 gamma
BETA_ROW = [9, 10, 11, 12]          # norm1..norm4 beta
SCALE_ROW = [13, 14, 15, 16, 17]    # fc1..fc5 per-output-channel weight scales
VEC_ROWS = 24                       # 18 used, padded to a multiple of 8 sublanes


def _embedding_kernel(x_ref, w1_ref, w2_ref, w3_ref, w4_ref, w5_ref, vec_ref,
                      o_ref):
    h = x_ref[...]  # (B, 768) float32

    def linear(h, w_ref, idx, dout):
        # int8 -> bf16 is exact (|q| <= 127); bf16 x bf16 single-pass MXU
        # matmul with f32 accumulation.  Per-output-channel dequant scale is
        # applied post-matmul in f32, bias added in f32.
        w = w_ref[...].astype(jnp.bfloat16)
        y = jnp.dot(h.astype(jnp.bfloat16), w,
                    preferred_element_type=jnp.float32)
        s = vec_ref[SCALE_ROW[idx]:SCALE_ROW[idx] + 1, :dout]
        b = vec_ref[BIAS_ROW[idx]:BIAS_ROW[idx] + 1, :dout]
        return y * s + b

    def batchnorm(h, idx, dout):
        g = vec_ref[GAMMA_ROW[idx]:GAMMA_ROW[idx] + 1, :dout]
        be = vec_ref[BETA_ROW[idx]:BETA_ROW[idx] + 1, :dout]
        mu = jnp.mean(h, axis=0, keepdims=True)
        c = h - mu
        var = jnp.mean(c * c, axis=0, keepdims=True)      # biased batch var
        return c * (g * jax.lax.rsqrt(var + EPS)) + be    # folded scale

    h = batchnorm(jnp.maximum(linear(h, w1_ref, 0, 768), 0.0), 0, 768)
    h = batchnorm(jnp.maximum(linear(h, w2_ref, 1, 512), 0.0), 1, 512)
    h = batchnorm(jnp.maximum(linear(h, w3_ref, 2, 384), 0.0), 2, 384)
    h = batchnorm(jnp.maximum(linear(h, w4_ref, 3, 384), 0.0), 3, 384)
    o_ref[...] = jnp.tanh(linear(h, w5_ref, 4, 384))


def embedding_layers_forward(x, weights, vec):
    """x: (B, S, 768) f32, weights: 5 int8 (din, dout), vec: (24, 768) f32.

    Returns (B, 384) float32.  Intended to be called under jax.jit so the
    x[:, 0, :] slice can fuse into the Pallas call (allow_input_fusion).
    """
    B, S, D = x.shape
    assert D == 768
    assert B % 8 == 0, "keep B a multiple of 8 so the (B, .) blocks are aligned"

    # Slice the first token; under jit this fuses into the kernel's input DMA.
    x2d = x[:, 0, :]

    flops = 2 * B * sum(din * dout for din, dout in LAYER_DIMS)
    bytes_accessed = (
        B * D * 4                            # x[:, 0] tile (f32)
        + sum(w.size for w in weights)       # int8 weights: 1 byte / elem
        + vec.size * 4                       # packed vector slab (f32)
        + B * 384 * 4                        # output (f32)
    )
    cost = pl.CostEstimate(
        flops=flops,
        transcendentals=B * 384 + sum(BN_DIMS),  # tanh + rsqrt
        bytes_accessed=bytes_accessed,
    )

    in_specs = [pl.BlockSpec((B, D), lambda: (0, 0))]
    for w in weights:
        in_specs.append(pl.BlockSpec(w.shape, lambda: (0, 0)))
    in_specs.append(pl.BlockSpec(vec.shape, lambda: (0, 0)))

    n_inputs = 1 + len(weights) + 1
    compiler_params = pltpu.CompilerParams(
        allow_input_fusion=[True] + [False] * (n_inputs - 1))

    return pl.pallas_call(
        _embedding_kernel,
        out_shape=jax.ShapeDtypeStruct((B, 384), jnp.float32),
        in_specs=in_specs,
        out_specs=pl.BlockSpec((B, 384), lambda: (0, 0)),
        compiler_params=compiler_params,
        cost_estimate=cost,
    )(x2d, *weights, vec)


def init_params(key):
    """Deterministic synthetic params matching the nn.Module shapes.

    Linear weights are symmetrically quantized to int8 per output channel;
    the per-channel scales, biases, and BN gamma/beta are packed row-wise
    into one (24, 768) f32 slab (unused columns zero).
    """
    keys = jax.random.split(key, 2 * len(LAYER_DIMS))
    qweights = []
    vec = jnp.zeros((VEC_ROWS, 768), jnp.float32)
    for idx, (din, dout) in enumerate(LAYER_DIMS):
        lim = 1.0 / jnp.sqrt(jnp.float32(din))
        w = jax.random.uniform(keys[2 * idx], (din, dout), jnp.float32,
                               -lim, lim)
        b = jax.random.uniform(keys[2 * idx + 1], (dout,), jnp.float32,
                               -lim, lim)
        scale = jnp.maximum(jnp.max(jnp.abs(w), axis=0) / 127.0, 1e-12)
        q = jnp.clip(jnp.round(w / scale), -127.0, 127.0).astype(jnp.int8)
        qweights.append(q)
        vec = vec.at[BIAS_ROW[idx], :dout].set(b)
        vec = vec.at[SCALE_ROW[idx], :dout].set(scale)
    for idx, d in enumerate(BN_DIMS):
        # PyTorch BatchNorm1d default init: gamma = 1, beta = 0.
        vec = vec.at[GAMMA_ROW[idx], :d].set(jnp.ones((d,), jnp.float32))
    return qweights, vec


def reference_forward(x, weights, vec):
    """Pure-JAX reference with the same arithmetic as the kernel:
    bf16 activations/weights into an f32-accumulating matmul, then f32
    scale + bias + BN/ReLU/tanh."""
    h = x[:, 0]
    for idx, (q, (_, dout)) in enumerate(zip(weights, LAYER_DIMS)):
        s = vec[SCALE_ROW[idx]:SCALE_ROW[idx] + 1, :dout]
        b = vec[BIAS_ROW[idx]:BIAS_ROW[idx] + 1, :dout]
        y = jnp.dot(h.astype(jnp.bfloat16), q.astype(jnp.bfloat16),
                    preferred_element_type=jnp.float32)
        h = y * s + b
        if idx < 4:
            h = jnp.maximum(h, 0.0)
            g = vec[GAMMA_ROW[idx]:GAMMA_ROW[idx] + 1, :dout]
            be = vec[BETA_ROW[idx]:BETA_ROW[idx] + 1, :dout]
            mu = jnp.mean(h, axis=0, keepdims=True)
            c = h - mu
            var = jnp.mean(c * c, axis=0, keepdims=True)
            h = c * (g * jax.lax.rsqrt(var + EPS)) + be
        else:
            h = jnp.tanh(h)
    return h


if __name__ == "__main__":
    key = jax.random.PRNGKey(0)
    kx, kp = jax.random.split(key)

    B, S, D = 8, 4, 768  # feature dim 768 is fixed by the module
    x = jax.random.normal(kx, (B, S, D), jnp.float32)
    weights, vec = init_params(kp)

    fwd = jax.jit(embedding_layers_forward)
    out = jax.block_until_ready(fwd(x, weights, vec))

    ref = reference_forward(x, weights, vec)
    assert out.shape == (B, 384)
    assert jnp.allclose(out, ref, atol=2e-3, rtol=2e-3), "mismatch vs reference"

    print("KERNEL_OK")
</pallas_src>

<mosaic_0001>
module attributes {stable_mosaic.version = 11 : i64} {
  func.func @_embedding_kernel(%arg0: memref<8x768xf32, #tpu.memory_space<vmem>>, %arg1: memref<768x768xi8, #tpu.memory_space<vmem>>, %arg2: memref<768x512xi8, #tpu.memory_space<vmem>>, %arg3: memref<512x384xi8, #tpu.memory_space<vmem>>, %arg4: memref<384x384xi8, #tpu.memory_space<vmem>>, %arg5: memref<384x384xi8, #tpu.memory_space<vmem>>, %arg6: memref<24x768xf32, #tpu.memory_space<vmem>>, %arg7: memref<8x384xf32, #tpu.memory_space<vmem>>) attributes {dimension_semantics = [], scalar_prefetch = 0 : i64, scratch_operands = 0 : i64, tpu.core_type = #tpu.core_type<tc>} {
    %c0 = arith.constant 0 : index
    %c0_0 = arith.constant 0 : index
    %0 = vector.load %arg0[%c0, %c0_0] : memref<8x768xf32, #tpu.memory_space<vmem>>, vector<8x768xf32>
    %c0_1 = arith.constant 0 : index
    %c0_2 = arith.constant 0 : index
    %1 = vector.load %arg1[%c0_1, %c0_2] : memref<768x768xi8, #tpu.memory_space<vmem>>, vector<768x768xi8>
    %2 = arith.sitofp %1 : vector<768x768xi8> to vector<768x768xbf16>
    %3 = arith.truncf %0 : vector<8x768xf32> to vector<8x768xbf16>
    %cst = arith.constant dense<0.000000e+00> : vector<8x768xf32>
    %4 = tpu.matmul %3, %2, %cst {dimension_numbers = #tpu.dot_dimension_numbers<[1], [0], [0], [1], [0, 0, 1, 1], [], []>} : vector<8x768xbf16>, vector<768x768xbf16>, vector<8x768xf32> -> vector<8x768xf32>
    %c13 = arith.constant 13 : index
    %c0_3 = arith.constant 0 : index
    %5 = vector.load %arg6[%c13, %c0_3] : memref<24x768xf32, #tpu.memory_space<vmem>>, vector<1x768xf32>
    %c0_4 = arith.constant 0 : index
    %c0_5 = arith.constant 0 : index
    %6 = vector.load %arg6[%c0_4, %c0_5] : memref<24x768xf32, #tpu.memory_space<vmem>>, vector<1x768xf32>
    %7 = vector.broadcast %5 : vector<1x768xf32> to vector<8x768xf32>
    %8 = arith.mulf %4, %7 : vector<8x768xf32>
    %9 = vector.broadcast %6 : vector<1x768xf32> to vector<8x768xf32>
    %10 = arith.addf %8, %9 : vector<8x768xf32>
    %cst_6 = arith.constant 0.000000e+00 : f32
    %11 = vector.broadcast %cst_6 : f32 to vector<8x768xf32>
    %12 = arith.maximumf %10, %11 : vector<8x768xf32>
    %c5 = arith.constant 5 : index
    %c0_7 = arith.constant 0 : index
    %13 = vector.load %arg6[%c5, %c0_7] : memref<24x768xf32, #tpu.memory_space<vmem>>, vector<1x768xf32>
    %c9 = arith.constant 9 : index
    %c0_8 = arith.constant 0 : index
    %14 = vector.load %arg6[%c9, %c0_8] : memref<24x768xf32, #tpu.memory_space<vmem>>, vector<1x768xf32>
    %cst_9 = arith.constant dense<0.000000e+00> : vector<768xf32>
    %15 = vector.multi_reduction <add>, %12, %cst_9 [0] : vector<8x768xf32> to vector<768xf32>
    %16 = vector.shape_cast %15 : vector<768xf32> to vector<1x768xf32>
    %cst_10 = arith.constant 8.000000e+00 : f32
    %17 = vector.broadcast %cst_10 : f32 to vector<1x768xf32>
    %18 = arith.divf %16, %17 : vector<1x768xf32>
    %19 = vector.broadcast %18 : vector<1x768xf32> to vector<8x768xf32>
    %20 = arith.subf %12, %19 : vector<8x768xf32>
    %21 = arith.mulf %20, %20 : vector<8x768xf32>
    %cst_11 = arith.constant dense<0.000000e+00> : vector<768xf32>
    %22 = vector.multi_reduction <add>, %21, %cst_11 [0] : vector<8x768xf32> to vector<768xf32>
    %23 = vector.shape_cast %22 : vector<768xf32> to vector<1x768xf32>
    %cst_12 = arith.constant 8.000000e+00 : f32
    %24 = vector.broadcast %cst_12 : f32 to vector<1x768xf32>
    %25 = arith.divf %23, %24 : vector<1x768xf32>
    %cst_13 = arith.constant 9.99999974E-6 : f32
    %26 = vector.broadcast %cst_13 : f32 to vector<1x768xf32>
    %27 = arith.addf %25, %26 : vector<1x768xf32>
    %28 = math.rsqrt %27 : vector<1x768xf32>
    %29 = arith.mulf %13, %28 : vector<1x768xf32>
    %30 = vector.broadcast %29 : vector<1x768xf32> to vector<8x768xf32>
    %31 = arith.mulf %20, %30 : vector<8x768xf32>
    %32 = vector.broadcast %14 : vector<1x768xf32> to vector<8x768xf32>
    %33 = arith.addf %31, %32 : vector<8x768xf32>
    %c0_14 = arith.constant 0 : index
    %c0_15 = arith.constant 0 : index
    %34 = vector.load %arg2[%c0_14, %c0_15] : memref<768x512xi8, #tpu.memory_space<vmem>>, vector<768x512xi8>
    %35 = arith.sitofp %34 : vector<768x512xi8> to vector<768x512xbf16>
    %36 = arith.truncf %33 : vector<8x768xf32> to vector<8x768xbf16>
    %cst_16 = arith.constant dense<0.000000e+00> : vector<8x512xf32>
    %37 = tpu.matmul %36, %35, %cst_16 {dimension_numbers = #tpu.dot_dimension_numbers<[1], [0], [0], [1], [0, 0, 1, 1], [], []>} : vector<8x768xbf16>, vector<768x512xbf16>, vector<8x512xf32> -> vector<8x512xf32>
    %c14 = arith.constant 14 : index
    %c0_17 = arith.constant 0 : index
    %38 = vector.load %arg6[%c14, %c0_17] : memref<24x768xf32, #tpu.memory_space<vmem>>, vector<1x512xf32>
    %c1 = arith.constant 1 : index
    %c0_18 = arith.constant 0 : index
    %39 = vector.load %arg6[%c1, %c0_18] : memref<24x768xf32, #tpu.memory_space<vmem>>, vector<1x512xf32>
    %40 = vector.broadcast %38 : vector<1x512xf32> to vector<8x512xf32>
    %41 = arith.mulf %37, %40 : vector<8x512xf32>
    %42 = vector.broadcast %39 : vector<1x512xf32> to vector<8x512xf32>
    %43 = arith.addf %41, %42 : vector<8x512xf32>
    %cst_19 = arith.constant 0.000000e+00 : f32
    %44 = vector.broadcast %cst_19 : f32 to vector<8x512xf32>
    %45 = arith.maximumf %43, %44 : vector<8x512xf32>
    %c6 = arith.constant 6 : index
    %c0_20 = arith.constant 0 : index
    %46 = vector.load %arg6[%c6, %c0_20] : memref<24x768xf32, #tpu.memory_space<vmem>>, vector<1x512xf32>
    %c10 = arith.constant 10 : index
    %c0_21 = arith.constant 0 : index
    %47 = vector.load %arg6[%c10, %c0_21] : memref<24x768xf32, #tpu.memory_space<vmem>>, vector<1x512xf32>
    %cst_22 = arith.constant dense<0.000000e+00> : vector<512xf32>
    %48 = vector.multi_reduction <add>, %45, %cst_22 [0] : vector<8x512xf32> to vector<512xf32>
    %49 = vector.shape_cast %48 : vector<512xf32> to vector<1x512xf32>
    %cst_23 = arith.constant 8.000000e+00 : f32
    %50 = vector.broadcast %cst_23 : f32 to vector<1x512xf32>
    %51 = arith.divf %49, %50 : vector<1x512xf32>
    %52 = vector.broadcast %51 : vector<1x512xf32> to vector<8x512xf32>
    %53 = arith.subf %45, %52 : vector<8x512xf32>
    %54 = arith.mulf %53, %53 : vector<8x512xf32>
    %cst_24 = arith.constant dense<0.000000e+00> : vector<512xf32>
    %55 = vector.multi_reduction <add>, %54, %cst_24 [0] : vector<8x512xf32> to vector<512xf32>
    %56 = vector.shape_cast %55 : vector<512xf32> to vector<1x512xf32>
    %cst_25 = arith.constant 8.000000e+00 : f32
    %57 = vector.broadcast %cst_25 : f32 to vector<1x512xf32>
    %58 = arith.divf %56, %57 : vector<1x512xf32>
    %cst_26 = arith.constant 9.99999974E-6 : f32
    %59 = vector.broadcast %cst_26 : f32 to vector<1x512xf32>
    %60 = arith.addf %58, %59 : vector<1x512xf32>
    %61 = math.rsqrt %60 : vector<1x512xf32>
    %62 = arith.mulf %46, %61 : vector<1x512xf32>
    %63 = vector.broadcast %62 : vector<1x512xf32> to vector<8x512xf32>
    %64 = arith.mulf %53, %63 : vector<8x512xf32>
    %65 = vector.broadcast %47 : vector<1x512xf32> to vector<8x512xf32>
    %66 = arith.addf %64, %65 : vector<8x512xf32>
    %c0_27 = arith.constant 0 : index
    %c0_28 = arith.constant 0 : index
    %67 = vector.load %arg3[%c0_27, %c0_28] : memref<512x384xi8, #tpu.memory_space<vmem>>, vector<512x384xi8>
    %68 = arith.sitofp %67 : vector<512x384xi8> to vector<512x384xbf16>
    %69 = arith.truncf %66 : vector<8x512xf32> to vector<8x512xbf16>
    %cst_29 = arith.constant dense<0.000000e+00> : vector<8x384xf32>
    %70 = tpu.matmul %69, %68, %cst_29 {dimension_numbers = #tpu.dot_dimension_numbers<[1], [0], [0], [1], [0, 0, 1, 1], [], []>} : vector<8x512xbf16>, vector<512x384xbf16>, vector<8x384xf32> -> vector<8x384xf32>
    %c15 = arith.constant 15 : index
    %c0_30 = arith.constant 0 : index
    %71 = vector.load %arg6[%c15, %c0_30] : memref<24x768xf32, #tpu.memory_space<vmem>>, vector<1x384xf32>
    %c2 = arith.constant 2 : index
    %c0_31 = arith.constant 0 : index
    %72 = vector.load %arg6[%c2, %c0_31] : memref<24x768xf32, #tpu.memory_space<vmem>>, vector<1x384xf32>
    %73 = vector.broadcast %71 : vector<1x384xf32> to vector<8x384xf32>
    %74 = arith.mulf %70, %73 : vector<8x384xf32>
    %75 = vector.broadcast %72 : vector<1x384xf32> to vector<8x384xf32>
    %76 = arith.addf %74, %75 : vector<8x384xf32>
    %cst_32 = arith.constant 0.000000e+00 : f32
    %77 = vector.broadcast %cst_32 : f32 to vector<8x384xf32>
    %78 = arith.maximumf %76, %77 : vector<8x384xf32>
    %c7 = arith.constant 7 : index
    %c0_33 = arith.constant 0 : index
    %79 = vector.load %arg6[%c7, %c0_33] : memref<24x768xf32, #tpu.memory_space<vmem>>, vector<1x384xf32>
    %c11 = arith.constant 11 : index
    %c0_34 = arith.constant 0 : index
    %80 = vector.load %arg6[%c11, %c0_34] : memref<24x768xf32, #tpu.memory_space<vmem>>, vector<1x384xf32>
    %cst_35 = arith.constant dense<0.000000e+00> : vector<384xf32>
    %81 = vector.multi_reduction <add>, %78, %cst_35 [0] : vector<8x384xf32> to vector<384xf32>
    %82 = vector.shape_cast %81 : vector<384xf32> to vector<1x384xf32>
    %cst_36 = arith.constant 8.000000e+00 : f32
    %83 = vector.broadcast %cst_36 : f32 to vector<1x384xf32>
    %84 = arith.divf %82, %83 : vector<1x384xf32>
    %85 = vector.broadcast %84 : vector<1x384xf32> to vector<8x384xf32>
    %86 = arith.subf %78, %85 : vector<8x384xf32>
    %87 = arith.mulf %86, %86 : vector<8x384xf32>
    %cst_37 = arith.constant dense<0.000000e+00> : vector<384xf32>
    %88 = vector.multi_reduction <add>, %87, %cst_37 [0] : vector<8x384xf32> to vector<384xf32>
    %89 = vector.shape_cast %88 : vector<384xf32> to vector<1x384xf32>
    %cst_38 = arith.constant 8.000000e+00 : f32
    %90 = vector.broadcast %cst_38 : f32 to vector<1x384xf32>
    %91 = arith.divf %89, %90 : vector<1x384xf32>
    %cst_39 = arith.constant 9.99999974E-6 : f32
    %92 = vector.broadcast %cst_39 : f32 to vector<1x384xf32>
    %93 = arith.addf %91, %92 : vector<1x384xf32>
    %94 = math.rsqrt %93 : vector<1x384xf32>
    %95 = arith.mulf %79, %94 : vector<1x384xf32>
    %96 = vector.broadcast %95 : vector<1x384xf32> to vector<8x384xf32>
    %97 = arith.mulf %86, %96 : vector<8x384xf32>
    %98 = vector.broadcast %80 : vector<1x384xf32> to vector<8x384xf32>
    %99 = arith.addf %97, %98 : vector<8x384xf32>
    %c0_40 = arith.constant 0 : index
    %c0_41 = arith.constant 0 : index
    %100 = vector.load %arg4[%c0_40, %c0_41] : memref<384x384xi8, #tpu.memory_space<vmem>>, vector<384x384xi8>
    %101 = arith.sitofp %100 : vector<384x384xi8> to vector<384x384xbf16>
    %102 = arith.truncf %99 : vector<8x384xf32> to vector<8x384xbf16>
    %cst_42 = arith.constant dense<0.000000e+00> : vector<8x384xf32>
    %103 = tpu.matmul %102, %101, %cst_42 {dimension_numbers = #tpu.dot_dimension_numbers<[1], [0], [0], [1], [0, 0, 1, 1], [], []>} : vector<8x384xbf16>, vector<384x384xbf16>, vector<8x384xf32> -> vector<8x384xf32>
    %c16 = arith.constant 16 : index
    %c0_43 = arith.constant 0 : index
    %104 = vector.load %arg6[%c16, %c0_43] : memref<24x768xf32, #tpu.memory_space<vmem>>, vector<1x384xf32>
    %c3 = arith.constant 3 : index
    %c0_44 = arith.constant 0 : index
    %105 = vector.load %arg6[%c3, %c0_44] : memref<24x768xf32, #tpu.memory_space<vmem>>, vector<1x384xf32>
    %106 = vector.broadcast %104 : vector<1x384xf32> to vector<8x384xf32>
    %107 = arith.mulf %103, %106 : vector<8x384xf32>
    %108 = vector.broadcast %105 : vector<1x384xf32> to vector<8x384xf32>
    %109 = arith.addf %107, %108 : vector<8x384xf32>
    %cst_45 = arith.constant 0.000000e+00 : f32
    %110 = vector.broadcast %cst_45 : f32 to vector<8x384xf32>
    %111 = arith.maximumf %109, %110 : vector<8x384xf32>
    %c8 = arith.constant 8 : index
    %c0_46 = arith.constant 0 : index
    %112 = vector.load %arg6[%c8, %c0_46] : memref<24x768xf32, #tpu.memory_space<vmem>>, vector<1x384xf32>
    %c12 = arith.constant 12 : index
    %c0_47 = arith.constant 0 : index
    %113 = vector.load %arg6[%c12, %c0_47] : memref<24x768xf32, #tpu.memory_space<vmem>>, vector<1x384xf32>
    %cst_48 = arith.constant dense<0.000000e+00> : vector<384xf32>
    %114 = vector.multi_reduction <add>, %111, %cst_48 [0] : vector<8x384xf32> to vector<384xf32>
    %115 = vector.shape_cast %114 : vector<384xf32> to vector<1x384xf32>
    %cst_49 = arith.constant 8.000000e+00 : f32
    %116 = vector.broadcast %cst_49 : f32 to vector<1x384xf32>
    %117 = arith.divf %115, %116 : vector<1x384xf32>
    %118 = vector.broadcast %117 : vector<1x384xf32> to vector<8x384xf32>
    %119 = arith.subf %111, %118 : vector<8x384xf32>
    %120 = arith.mulf %119, %119 : vector<8x384xf32>
    %cst_50 = arith.constant dense<0.000000e+00> : vector<384xf32>
    %121 = vector.multi_reduction <add>, %120, %cst_50 [0] : vector<8x384xf32> to vector<384xf32>
    %122 = vector.shape_cast %121 : vector<384xf32> to vector<1x384xf32>
    %cst_51 = arith.constant 8.000000e+00 : f32
    %123 = vector.broadcast %cst_51 : f32 to vector<1x384xf32>
    %124 = arith.divf %122, %123 : vector<1x384xf32>
    %cst_52 = arith.constant 9.99999974E-6 : f32
    %125 = vector.broadcast %cst_52 : f32 to vector<1x384xf32>
    %126 = arith.addf %124, %125 : vector<1x384xf32>
    %127 = math.rsqrt %126 : vector<1x384xf32>
    %128 = arith.mulf %112, %127 : vector<1x384xf32>
    %129 = vector.broadcast %128 : vector<1x384xf32> to vector<8x384xf32>
    %130 = arith.mulf %119, %129 : vector<8x384xf32>
    %131 = vector.broadcast %113 : vector<1x384xf32> to vector<8x384xf32>
    %132 = arith.addf %130, %131 : vector<8x384xf32>
    %c0_53 = arith.constant 0 : index
    %c0_54 = arith.constant 0 : index
    %133 = vector.load %arg5[%c0_53, %c0_54] : memref<384x384xi8, #tpu.memory_space<vmem>>, vector<384x384xi8>
    %134 = arith.sitofp %133 : vector<384x384xi8> to vector<384x384xbf16>
    %135 = arith.truncf %132 : vector<8x384xf32> to vector<8x384xbf16>
    %cst_55 = arith.constant dense<0.000000e+00> : vector<8x384xf32>
    %136 = tpu.matmul %135, %134, %cst_55 {dimension_numbers = #tpu.dot_dimension_numbers<[1], [0], [0], [1], [0, 0, 1, 1], [], []>} : vector<8x384xbf16>, vector<384x384xbf16>, vector<8x384xf32> -> vector<8x384xf32>
    %c17 = arith.constant 17 : index
    %c0_56 = arith.constant 0 : index
    %137 = vector.load %arg6[%c17, %c0_56] : memref<24x768xf32, #tpu.memory_space<vmem>>, vector<1x384xf32>
    %c4 = arith.constant 4 : index
    %c0_57 = arith.constant 0 : index
    %138 = vector.load %arg6[%c4, %c0_57] : memref<24x768xf32, #tpu.memory_space<vmem>>, vector<1x384xf32>
    %139 = vector.broadcast %137 : vector<1x384xf32> to vector<8x384xf32>
    %140 = arith.mulf %136, %139 : vector<8x384xf32>
    %141 = vector.broadcast %138 : vector<1x384xf32> to vector<8x384xf32>
    %142 = arith.addf %140, %141 : vector<8x384xf32>
    %143 = math.tanh %142 : vector<8x384xf32>
    %c0_58 = arith.constant 0 : index
    %c0_59 = arith.constant 0 : index
    %144 = vector.load %arg7[%c0_58, %c0_59] : memref<8x384xf32, #tpu.memory_space<vmem>>, vector<8x384xf32>
    tpu.vector_store %arg7[%c0_58, %c0_59], %143 {strides = array<i32>} : memref<8x384xf32, #tpu.memory_space<vmem>>, vector<8x384xf32>,
    return
  }
}

</mosaic_0001>

<llo_original>
// kernel: embedding_layers_forward.2
$region0: #{embedding_layers_forward.2}
  #allocation0 [shape = 'u32[]', space=smem, size = 0x4, offset = 0x4, fixed_abs, tag = 'smem constant byte address 0x4 - core index']
  #allocation1 [shape = 'u32[144,128]{1,0:T(1,128)}', space=vmem, size = 0x12000, scoped, tag = 'internal scratch']
  %s0 = inlined_call_operand.hbm [shape: s8[768,768], index: 0, kind: input, shape index: {}]
  %s1 = inlined_call_operand.hbm [shape: s8[768,512], index: 1, kind: input, shape index: {}]
  %s2 = inlined_call_operand.hbm [shape: s8[512,384], index: 2, kind: input, shape index: {}]
  %s3 = inlined_call_operand.hbm [shape: s8[384,384], index: 3, kind: input, shape index: {}]
  %s4 = inlined_call_operand.hbm [shape: s8[384,384], index: 4, kind: input, shape index: {}]
  %s5 = inlined_call_operand.hbm [shape: f32[24,768], index: 5, kind: input, shape index: {}]
  %s6 = inlined_call_operand.vmem [shape: f32[8,1,768], index: 6, kind: input, shape index: {}]
  %s7 = inlined_call_operand.hbm [shape: f32[8,384], index: 7, kind: output, shape index: {}]
  %s8 = sld [smem:[#allocation0]]
  $region62: #{embedding_layers_forward.2} parent=0
    _
  %s10 = ssub.s32 1, %s8
  %s11 = scalar_select 0, %s10, %s8
  $region1: #{embedding_layers_forward.2} parent=0
    #allocation2 [shape = 'u8[589824]{0}', space=vmem, size = 0x90000, scoped, tag = 'input window, operand 1, single buffered']
    #allocation3 [shape = 's32[1]{0}', space=sflag, size = 0x4, scoped, tag = 'scoped memory for embedding_layers_forward.2']
    #allocation4 [shape = 's32[1]{0}', space=sflag, size = 0x4, scoped, tag = 'scoped memory for embedding_layers_forward.2']
    #allocation5 [shape = 'u8[393216]{0}', space=vmem, size = 0x60000, scoped, tag = 'input window, operand 2, single buffered']
    #allocation6 [shape = 's32[1]{0}', space=sflag, size = 0x4, scoped, tag = 'scoped memory for embedding_layers_forward.2']
    #allocation7 [shape = 'u8[196608]{0}', space=vmem, size = 0x30000, scoped, tag = 'input window, operand 3, single buffered']
    #allocation8 [shape = 'u8[147456]{0}', space=vmem, size = 0x24000, scoped, tag = 'input window, operand 4, single buffered']
    #allocation9 [shape = 's32[1]{0}', space=sflag, size = 0x4, scoped, tag = 'scoped memory for embedding_layers_forward.2']
    #allocation10 [shape = 'u8[147456]{0}', space=vmem, size = 0x24000, scoped, tag = 'input window, operand 5, single buffered']
    #allocation11 [shape = 'u8[73728]{0}', space=vmem, size = 0x12000, scoped, tag = 'input window, operand 6, single buffered']
    #allocation12 [shape = 's32[1]{0}', space=sflag, size = 0x4, scoped, tag = 'scoped memory for embedding_layers_forward.2']
    #allocation13 [shape = 'u8[12288]{0}', space=vmem, size = 0x3000, scoped, tag = 'output window, operand 0, single buffered']
    #allocation14 [shape = 'u8[24576]{0}', space=vmem, size = 0x6000, dematerialized = true, scoped, tag = 'FusionAdapter Buffer %copy_bitcast_fusion.1 = f32[8,768]{1,0:T(8,128)} fusion(%param_6.1), kind=kLoop, calls=%fused_computation.clone.clone, metadata={op_name="jit(embedding_layers_forward)/squeeze" stack_frame_id=7}']
    %12 = vsyncpa [#allocation3], 0
    %13 = vsyncpa [#allocation6], 0
    %14 = vsyncpa [#allocation9], 0
    %15 = vsyncpa [#allocation12], 0
    %16 = vsyncpa [#allocation4], 0
    // Predicated region
    $region2: #{embedding_layers_forward.2} parent=1 // pred_check
      _
    $region3: #{embedding_layers_forward.2} parent=1 // pred_check_branch
      %18 = sbr.rel (0) target = $region5
    $region4: #{embedding_layers_forward.2} parent=1 // pred_region
      _
    $region5: #{embedding_layers_forward.2} parent=1 // pred_fallthru
      _
    // Predicated region
    $region6: #{embedding_layers_forward.2} parent=1 // pred_check
      _
    $region7: #{embedding_layers_forward.2} parent=1 // pred_check_branch
      %20 = sbr.rel (0) target = $region9
    $region8: #{embedding_layers_forward.2} parent=1 // pred_region
      %s22 = ssub.s32 18432, 18432
      %23 = vsyncadd [#allocation3], %s22
      %s24 = sshll.u32 [#allocation2], 4
      %s25 = int_to_ptr.vmem [resolvable:$true] %s24
      %30 = dma.hbm_to_vmem [thread:$0]  %s0, 18432, %s25, [#allocation3], 768, 768, 48
    $region9: #{embedding_layers_forward.2} parent=1 // pred_fallthru
      _
    // Predicated region
    $region10: #{embedding_layers_forward.2} parent=1 // pred_check
      _
    $region11: #{embedding_layers_forward.2} parent=1 // pred_check_branch
      %32 = sbr.rel (0) target = $region13
    $region12: #{embedding_layers_forward.2} parent=1 // pred_region
      %s34 = ssub.s32 12288, 12288
      %35 = vsyncadd [#allocation6], %s34
      %s36 = sshll.u32 [#allocation5], 4
      %s37 = int_to_ptr.vmem [resolvable:$true] %s36
      %42 = dma.hbm_to_vmem [thread:$0]  %s1, 12288, %s37, [#allocation6], 512, 512, 32
    $region13: #{embedding_layers_forward.2} parent=1 // pred_fallthru
      _
    // Predicated region
    $region14: #{embedding_layers_forward.2} parent=1 // pred_check
      _
    $region15: #{embedding_layers_forward.2} parent=1 // pred_check_branch
      %44 = sbr.rel (0) target = $region17
    $region16: #{embedding_layers_forward.2} parent=1 // pred_region
      %s46 = ssub.s32 6144, 6144
      %47 = vsyncadd [#allocation6], %s46
      %s48 = sshll.u32 [#allocation7], 4
      %s49 = int_to_ptr.vmem [resolvable:$true] %s48
      %54 = dma.hbm_to_vmem [thread:$0]  %s2, 6144, %s49, [#allocation6], 384, 384, 24
    $region17: #{embedding_layers_forward.2} parent=1 // pred_fallthru
      _
    // Predicated region
    $region18: #{embedding_layers_forward.2} parent=1 // pred_check
      _
    $region19: #{embedding_layers_forward.2} parent=1 // pred_check_branch
      %56 = sbr.rel (0) target = $region21
    $region20: #{embedding_layers_forward.2} parent=1 // pred_region
      %s58 = ssub.s32 4608, 4608
      %59 = vsyncadd [#allocation9], %s58
      %s60 = sshll.u32 [#allocation8], 4
      %s61 = int_to_ptr.vmem [resolvable:$true] %s60
      %66 = dma.hbm_to_vmem [thread:$0]  %s3, 4608, %s61, [#allocation9], 384, 384, 24
    $region21: #{embedding_layers_forward.2} parent=1 // pred_fallthru
      _
    // Predicated region
    $region22: #{embedding_layers_forward.2} parent=1 // pred_check
      _
    $region23: #{embedding_layers_forward.2} parent=1 // pred_check_branch
      %68 = sbr.rel (0) target = $region25
    $region24: #{embedding_layers_forward.2} parent=1 // pred_region
      %s70 = ssub.s32 4608, 4608
      %71 = vsyncadd [#allocation9], %s70
      %s72 = sshll.u32 [#allocation10], 4
      %s73 = int_to_ptr.vmem [resolvable:$true] %s72
      %78 = dma.hbm_to_vmem [thread:$0]  %s4, 4608, %s73, [#allocation9], 384, 384, 24
    $region25: #{embedding_layers_forward.2} parent=1 // pred_fallthru
      _
    // Predicated region
    $region26: #{embedding_layers_forward.2} parent=1 // pred_check
      _
    $region27: #{embedding_layers_forward.2} parent=1 // pred_check_branch
      %80 = sbr.rel (0) target = $region29
    $region28: #{embedding_layers_forward.2} parent=1 // pred_region
      %s82 = ssub.s32 2304, 2304
      %83 = vsyncadd [#allocation12], %s82
      %s84 = sshll.u32 [#allocation11], 4
      %s85 = int_to_ptr.vmem [resolvable:$true] %s84
      %90 = dma.hbm_to_vmem [thread:$0]  %s5, 2304, %s85, [#allocation12], 768, 768, 48
    $region29: #{embedding_layers_forward.2} parent=1 // pred_fallthru
      _
    // Predicated region
    $region30: #{embedding_layers_forward.2} parent=1 // pred_check
      _
    $region31: #{embedding_layers_forward.2} parent=1 // pred_check_branch
      %92 = sbr.rel (0) target = $region33
    $region32: #{embedding_layers_forward.2} parent=1 // pred_region
      %93 = dma.done [#allocation3], 18432
    $region33: #{embedding_layers_forward.2} parent=1 // pred_fallthru
      _
    // Predicated region
    $region34: #{embedding_layers_forward.2} parent=1 // pred_check
      _
    $region35: #{embedding_layers_forward.2} parent=1 // pred_check_branch
      %95 = sbr.rel (0) target = $region37
    $region36: #{embedding_layers_forward.2} parent=1 // pred_region
      %96 = dma.done [#allocation6], 12288
    $region37: #{embedding_layers_forward.2} parent=1 // pred_fallthru
      _
    // Predicated region
    $region38: #{embedding_layers_forward.2} parent=1 // pred_check
      _
    $region39: #{embedding_layers_forward.2} parent=1 // pred_check_branch
      %98 = sbr.rel (0) target = $region41
    $region40: #{embedding_layers_forward.2} parent=1 // pred_region
      %99 = dma.done [#allocation6], 6144
    $region41: #{embedding_layers_forward.2} parent=1 // pred_fallthru
      _
    // Predicated region
    $region42: #{embedding_layers_forward.2} parent=1 // pred_check
      _
    $region43: #{embedding_layers_forward.2} parent=1 // pred_check_branch
      %101 = sbr.rel (0) target = $region45
    $region44: #{embedding_layers_forward.2} parent=1 // pred_region
      %102 = dma.done [#allocation9], 4608
    $region45: #{embedding_layers_forward.2} parent=1 // pred_fallthru
      _
    // Predicated region
    $region46: #{embedding_layers_forward.2} parent=1 // pred_check
      _
    $region47: #{embedding_layers_forward.2} parent=1 // pred_check_branch
      %104 = sbr.rel (0) target = $region49
    $region48: #{embedding_layers_forward.2} parent=1 // pred_region
      %105 = dma.done [#allocation9], 4608
    $region49: #{embedding_layers_forward.2} parent=1 // pred_fallthru
      _
    // Predicated region
    $region50: #{embedding_layers_forward.2} parent=1 // pred_check
      _
    $region51: #{embedding_layers_forward.2} parent=1 // pred_check_branch
      %107 = sbr.rel (0) target = $region53
    $region52: #{embedding_layers_forward.2} parent=1 // pred_region
      %108 = dma.done [#allocation12], 2304
    $region53: #{embedding_layers_forward.2} parent=1 // pred_fallthru
      _
    %s110 = ssub.s32 256, 1
    %s111 = sand.u32 255, %s110
    %v112 = vld [vmem:[%s6] ss:$6 sm:%s111]
    %s114 = ssub.s32 256, 1
    %115 = vst [vmem:[#allocation14] sm:%s114] %v112
    %s116 = scalar_lea.vmem %s6, 1
    %s118 = ssub.s32 256, 1
    %s119 = sand.u32 255, %s118
    %v120 = vld [vmem:[%s116] ss:$6 sm:%s119]
    %s121 = scalar_lea.vmem [#allocation14], 8
    %s123 = ssub.s32 256, 1
    %124 = vst [vmem:[%s121] sm:%s123] %v120
    %s125 = scalar_lea.vmem %s6, 2
    %s127 = ssub.s32 256, 1
    %s128 = sand.u32 255, %s127
    %v129 = vld [vmem:[%s125] ss:$6 sm:%s128]
    %s130 = scalar_lea.vmem [#allocation14], 16
    %s132 = ssub.s32 256, 1
    %133 = vst [vmem:[%s130] sm:%s132] %v129
    %s134 = scalar_lea.vmem %s6, 3
    %s136 = ssub.s32 256, 1
    %s137 = sand.u32 255, %s136
    %v138 = vld [vmem:[%s134] ss:$6 sm:%s137]
    %s139 = scalar_lea.vmem [#allocation14], 24
    %s141 = ssub.s32 256, 1
    %142 = vst [vmem:[%s139] sm:%s141] %v138
    %s143 = scalar_lea.vmem %s6, 4
    %s145 = ssub.s32 256, 1
    %s146 = sand.u32 255, %s145
    %v147 = vld [vmem:[%s143] ss:$6 sm:%s146]
    %s148 = scalar_lea.vmem [#allocation14], 32
    %s150 = ssub.s32 256, 1
    %151 = vst [vmem:[%s148] sm:%s150] %v147
    %s152 = scalar_lea.vmem %s6, 5
    %s154 = ssub.s32 256, 1
    %s155 = sand.u32 255, %s154
    %v156 = vld [vmem:[%s152] ss:$6 sm:%s155]
    %s157 = scalar_lea.vmem [#allocation14], 40
    %s159 = ssub.s32 256, 1
    %160 = vst [vmem:[%s157] sm:%s159] %v156
    %v162 = vld [vmem:[#allocation14] sm:$0xff]
    %v163 = vld [vmem:[#allocation14 + $0x8] sm:$0xff]
    %v164 = vld [vmem:[#allocation14 + $0x10] sm:$0xff]
    %v165 = vld [vmem:[#allocation14 + $0x18] sm:$0xff]
    %v166 = vld [vmem:[#allocation14 + $0x20] sm:$0xff]
    %v167 = vld [vmem:[#allocation14 + $0x28] sm:$0xff]
    %v168 = vld [vmem:[#allocation2] sm:$0xff]
    %v169 = vld [vmem:[#allocation2 + $0x8] sm:$0xff]
    %v170 = vld [vmem:[#allocation2 + $0x10] sm:$0xff]
    %v171 = vld [vmem:[#allocation2 + $0x18] sm:$0xff]
    %v172 = vld [vmem:[#allocation2 + $0x20] sm:$0xff]
    %v173 = vld [vmem:[#allocation2 + $0x28] sm:$0xff]
    %v174 = vld [vmem:[#allocation2 + $0x30] sm:$0xff]
    %v175 = vld [vmem:[#allocation2 + $0x38] sm:$0xff]
    %v176 = vld [vmem:[#allocation2 + $0x40] sm:$0xff]
    %v177 = vld [vmem:[#allocation2 + $0x48] sm:$0xff]
    %v178 = vld [vmem:[#allocation2 + $0x50] sm:$0xff]
    %v179 = vld [vmem:[#allocation2 + $0x58] sm:$0xff]
    %v180 = vld [vmem:[#allocation2 + $0x60] sm:$0xff]
    %v181 = vld [vmem:[#allocation2 + $0x68] sm:$0xff]
    %v182 = vld [vmem:[#allocation2 + $0x70] sm:$0xff]
    %v183 = vld [vmem:[#allocation2 + $0x78] sm:$0xff]
    %v184 = vld [vmem:[#allocation2 + $0x80] sm:$0xff]
    %v185 = vld [vmem:[#allocation2 + $0x88] sm:$0xff]
    %v186 = vld [vmem:[#allocation2 + $0x90] sm:$0xff]
    %v187 = vld [vmem:[#allocation2 + $0x98] sm:$0xff]
    %v188 = vld [vmem:[#allocation2 + $0xa0] sm:$0xff]
    %v189 = vld [vmem:[#allocation2 + $0xa8] sm:$0xff]
    %v190 = vld [vmem:[#allocation2 + $0xb0] sm:$0xff]
    %v191 = vld [vmem:[#allocation2 + $0xb8] sm:$0xff]
    %v192 = vld [vmem:[#allocation2 + $0xc0] sm:$0xff]
    %v193 = vld [vmem:[#allocation2 + $0xc8] sm:$0xff]
    %v194 = vld [vmem:[#allocation2 + $0xd0] sm:$0xff]
    %v195 = vld [vmem:[#allocation2 + $0xd8] sm:$0xff]
    %v196 = vld [vmem:[#allocation2 + $0xe0] sm:$0xff]
    %v197 = vld [vmem:[#allocation2 + $0xe8] sm:$0xff]
    %v198 = vld [vmem:[#allocation2 + $0xf0] sm:$0xff]
    %v199 = vld [vmem:[#allocation2 + $0xf8] sm:$0xff]
    %v200 = vld [vmem:[#allocation2 + $0x100] sm:$0xff]
    %v201 = vld [vmem:[#allocation2 + $0x108] sm:$0xff]
    %v202 = vld [vmem:[#allocation2 + $0x110] sm:$0xff]
    %v203 = vld [vmem:[#allocation2 + $0x118] sm:$0xff]
    %v204 = vld [vmem:[#allocation2 + $0x120] sm:$0xff]
    %v205 = vld [vmem:[#allocation2 + $0x128] sm:$0xff]
    %v206 = vld [vmem:[#allocation2 + $0x130] sm:$0xff]
    %v207 = vld [vmem:[#allocation2 + $0x138] sm:$0xff]
    %v208 = vld [vmem:[#allocation2 + $0x140] sm:$0xff]
    %v209 = vld [vmem:[#allocation2 + $0x148] sm:$0xff]
    %v210 = vld [vmem:[#allocation2 + $0x150] sm:$0xff]
    %v211 = vld [vmem:[#allocation2 + $0x158] sm:$0xff]
    %v212 = vld [vmem:[#allocation2 + $0x160] sm:$0xff]
    %v213 = vld [vmem:[#allocation2 + $0x168] sm:$0xff]
    %v214 = vld [vmem:[#allocation2 + $0x170] sm:$0xff]
    %v215 = vld [vmem:[#allocation2 + $0x178] sm:$0xff]
    %v216 = vld [vmem:[#allocation2 + $0x180] sm:$0xff]
    %v217 = vld [vmem:[#allocation2 + $0x188] sm:$0xff]
    %v218 = vld [vmem:[#allocation2 + $0x190] sm:$0xff]
    %v219 = vld [vmem:[#allocation2 + $0x198] sm:$0xff]
    %v220 = vld [vmem:[#allocation2 + $0x1a0] sm:$0xff]
    %v221 = vld [vmem:[#allocation2 + $0x1a8] sm:$0xff]
    %v222 = vld [vmem:[#allocation2 + $0x1b0] sm:$0xff]
    %v223 = vld [vmem:[#allocation2 + $0x1b8] sm:$0xff]
    %v224 = vld [vmem:[#allocation2 + $0x1c0] sm:$0xff]
    %v225 = vld [vmem:[#allocation2 + $0x1c8] sm:$0xff]
    %v226 = vld [vmem:[#allocation2 + $0x1d0] sm:$0xff]
    %v227 = vld [vmem:[#allocation2 + $0x1d8] sm:$0xff]
    %v228 = vld [vmem:[#allocation2 + $0x1e0] sm:$0xff]
    %v229 = vld [vmem:[#allocation2 + $0x1e8] sm:$0xff]
    %v230 = vld [vmem:[#allocation2 + $0x1f0] sm:$0xff]
    %v231 = vld [vmem:[#allocation2 + $0x1f8] sm:$0xff]
    %v232 = vld [vmem:[#allocation2 + $0x200] sm:$0xff]
    %v233 = vld [vmem:[#allocation2 + $0x208] sm:$0xff]
    %v234 = vld [vmem:[#allocation2 + $0x210] sm:$0xff]
    %v235 = vld [vmem:[#allocation2 + $0x218] sm:$0xff]
    %v236 = vld [vmem:[#allocation2 + $0x220] sm:$0xff]
    %v237 = vld [vmem:[#allocation2 + $0x228] sm:$0xff]
    %v238 = vld [vmem:[#allocation2 + $0x230] sm:$0xff]
    %v239 = vld [vmem:[#allocation2 + $0x238] sm:$0xff]
    %v240 = vld [vmem:[#allocation2 + $0x240] sm:$0xff]
    %v241 = vld [vmem:[#allocation2 + $0x248] sm:$0xff]
    %v242 = vld [vmem:[#allocation2 + $0x250] sm:$0xff]
    %v243 = vld [vmem:[#allocation2 + $0x258] sm:$0xff]
    %v244 = vld [vmem:[#allocation2 + $0x260] sm:$0xff]
    %v245 = vld [vmem:[#allocation2 + $0x268] sm:$0xff]
    %v246 = vld [vmem:[#allocation2 + $0x270] sm:$0xff]
    %v247 = vld [vmem:[#allocation2 + $0x278] sm:$0xff]
    %v248 = vld [vmem:[#allocation2 + $0x280] sm:$0xff]
    %v249 = vld [vmem:[#allocation2 + $0x288] sm:$0xff]
    %v250 = vld [vmem:[#allocation2 + $0x290] sm:$0xff]
    %v251 = vld [vmem:[#allocation2 + $0x298] sm:$0xff]
    %v252 = vld [vmem:[#allocation2 + $0x2a0] sm:$0xff]
    %v253 = vld [vmem:[#allocation2 + $0x2a8] sm:$0xff]
    %v254 = vld [vmem:[#allocation2 + $0x2b0] sm:$0xff]
    %v255 = vld [vmem:[#allocation2 + $0x2b8] sm:$0xff]
    %v256 = vld [vmem:[#allocation2 + $0x2c0] sm:$0xff]
    %v257 = vld [vmem:[#allocation2 + $0x2c8] sm:$0xff]
    %v258 = vld [vmem:[#allocation2 + $0x2d0] sm:$0xff]
    %v259 = vld [vmem:[#allocation2 + $0x2d8] sm:$0xff]
    %v260 = vld [vmem:[#allocation2 + $0x2e0] sm:$0xff]
    %v261 = vld [vmem:[#allocation2 + $0x2e8] sm:$0xff]
    %v262 = vld [vmem:[#allocation2 + $0x2f0] sm:$0xff]
    %v263 = vld [vmem:[#allocation2 + $0x2f8] sm:$0xff]
    %v264 = vld [vmem:[#allocation2 + $0x300] sm:$0xff]
    %v265 = vld [vmem:[#allocation2 + $0x308] sm:$0xff]
    %v266 = vld [vmem:[#allocation2 + $0x310] sm:$0xff]
    %v267 = vld [vmem:[#allocation2 + $0x318] sm:$0xff]
    %v268 = vld [vmem:[#allocation2 + $0x320] sm:$0xff]
    %v269 = vld [vmem:[#allocation2 + $0x328] sm:$0xff]
    %v270 = vld [vmem:[#allocation2 + $0x330] sm:$0xff]
    %v271 = vld [vmem:[#allocation2 + $0x338] sm:$0xff]
    %v272 = vld [vmem:[#allocation2 + $0x340] sm:$0xff]
    %v273 = vld [vmem:[#allocation2 + $0x348] sm:$0xff]
    %v274 = vld [vmem:[#allocation2 + $0x350] sm:$0xff]
    %v275 = vld [vmem:[#allocation2 + $0x358] sm:$0xff]
    %v276 = vld [vmem:[#allocation2 + $0x360] sm:$0xff]
    %v277 = vld [vmem:[#allocation2 + $0x368] sm:$0xff]
    %v278 = vld [vmem:[#allocation2 + $0x370] sm:$0xff]
    %v279 = vld [vmem:[#allocation2 + $0x378] sm:$0xff]
    %v280 = vld [vmem:[#allocation2 + $0x380] sm:$0xff]
    %v281 = vld [vmem:[#allocation2 + $0x388] sm:$0xff]
    %v282 = vld [vmem:[#allocation2 + $0x390] sm:$0xff]
    %v283 = vld [vmem:[#allocation2 + $0x398] sm:$0xff]
    %v284 = vld [vmem:[#allocation2 + $0x3a0] sm:$0xff]
    %v285 = vld [vmem:[#allocation2 + $0x3a8] sm:$0xff]
    %v286 = vld [vmem:[#allocation2 + $0x3b0] sm:$0xff]
    %v287 = vld [vmem:[#allocation2 + $0x3b8] sm:$0xff]
    %v288 = vld [vmem:[#allocation2 + $0x3c0] sm:$0xff]
    %v289 = vld [vmem:[#allocation2 + $0x3c8] sm:$0xff]
    %v290 = vld [vmem:[#allocation2 + $0x3d0] sm:$0xff]
    %v291 = vld [vmem:[#allocation2 + $0x3d8] sm:$0xff]
    %v292 = vld [vmem:[#allocation2 + $0x3e0] sm:$0xff]
    %v293 = vld [vmem:[#allocation2 + $0x3e8] sm:$0xff]
    %v294 = vld [vmem:[#allocation2 + $0x3f0] sm:$0xff]
    %v295 = vld [vmem:[#allocation2 + $0x3f8] sm:$0xff]
    %v296 = vld [vmem:[#allocation2 + $0x400] sm:$0xff]
    %v297 = vld [vmem:[#allocation2 + $0x408] sm:$0xff]
    %v298 = vld [vmem:[#allocation2 + $0x410] sm:$0xff]
    %v299 = vld [vmem:[#allocation2 + $0x418] sm:$0xff]
    %v300 = vld [vmem:[#allocation2 + $0x420] sm:$0xff]
    %v301 = vld [vmem:[#allocation2 + $0x428] sm:$0xff]
    %v302 = vld [vmem:[#allocation2 + $0x430] sm:$0xff]
    %v303 = vld [vmem:[#allocation2 + $0x438] sm:$0xff]
    %v304 = vld [vmem:[#allocation2 + $0x440] sm:$0xff]
    %v305 = vld [vmem:[#allocation2 + $0x448] sm:$0xff]
    %v306 = vld [vmem:[#allocation2 + $0x450] sm:$0xff]
    %v307 = vld [vmem:[#allocation2 + $0x458] sm:$0xff]
    %v308 = vld [vmem:[#allocation2 + $0x460] sm:$0xff]
    %v309 = vld [vmem:[#allocation2 + $0x468] sm:$0xff]
    %v310 = vld [vmem:[#allocation2 + $0x470] sm:$0xff]
    %v311 = vld [vmem:[#allocation2 + $0x478] sm:$0xff]
    %v312 = vunpack.c.l.s8.bf16 %v168
    %v313 = vunpack.c.l.s8.bf16 %v169
    %v314 = vunpack.c.l.s8.bf16 %v170
    %v315 = vunpack.c.l.s8.bf16 %v171
    %v316 = vunpack.c.l.s8.bf16 %v172
    %v317 = vunpack.c.l.s8.bf16 %v173
    %v318 = vunpack.c.h.s8.bf16 %v168
    %v319 = vunpack.c.h.s8.bf16 %v169
    %v320 = vunpack.c.h.s8.bf16 %v170
    %v321 = vunpack.c.h.s8.bf16 %v171
    %v322 = vunpack.c.h.s8.bf16 %v172
    %v323 = vunpack.c.h.s8.bf16 %v173
    %v324 = vunpack.c.l.s8.bf16 %v174
    %v325 = vunpack.c.l.s8.bf16 %v175
    %v326 = vunpack.c.l.s8.bf16 %v176
    %v327 = vunpack.c.l.s8.bf16 %v177
    %v328 = vunpack.c.l.s8.bf16 %v178
    %v329 = vunpack.c.l.s8.bf16 %v179
    %v330 = vunpack.c.h.s8.bf16 %v174
    %v331 = vunpack.c.h.s8.bf16 %v175
    %v332 = vunpack.c.h.s8.bf16 %v176
    %v333 = vunpack.c.h.s8.bf16 %v177
    %v334 = vunpack.c.h.s8.bf16 %v178
    %v335 = vunpack.c.h.s8.bf16 %v179
    %v336 = vunpack.c.l.s8.bf16 %v180
    %v337 = vunpack.c.l.s8.bf16 %v181
    %v338 = vunpack.c.l.s8.bf16 %v182
    %v339 = vunpack.c.l.s8.bf16 %v183
    %v340 = vunpack.c.l.s8.bf16 %v184
    %v341 = vunpack.c.l.s8.bf16 %v185
    %v342 = vunpack.c.h.s8.bf16 %v180
    %v343 = vunpack.c.h.s8.bf16 %v181
    %v344 = vunpack.c.h.s8.bf16 %v182
    %v345 = vunpack.c.h.s8.bf16 %v183
    %v346 = vunpack.c.h.s8.bf16 %v184
    %v347 = vunpack.c.h.s8.bf16 %v185
    %v348 = vunpack.c.l.s8.bf16 %v186
    %v349 = vunpack.c.l.s8.bf16 %v187
    %v350 = vunpack.c.l.s8.bf16 %v188
    %v351 = vunpack.c.l.s8.bf16 %v189
    %v352 = vunpack.c.l.s8.bf16 %v190
    %v353 = vunpack.c.l.s8.bf16 %v191
    %v354 = vunpack.c.h.s8.bf16 %v186
    %v355 = vunpack.c.h.s8.bf16 %v187
    %v356 = vunpack.c.h.s8.bf16 %v188
    %v357 = vunpack.c.h.s8.bf16 %v189
    %v358 = vunpack.c.h.s8.bf16 %v190
    %v359 = vunpack.c.h.s8.bf16 %v191
    %v360 = vunpack.c.l.s8.bf16 %v192
    %v361 = vunpack.c.l.s8.bf16 %v193
    %v362 = vunpack.c.l.s8.bf16 %v194
    %v363 = vunpack.c.l.s8.bf16 %v195
    %v364 = vunpack.c.l.s8.bf16 %v196
    %v365 = vunpack.c.l.s8.bf16 %v197
    %v366 = vunpack.c.h.s8.bf16 %v192
    %v367 = vunpack.c.h.s8.bf16 %v193
    %v368 = vunpack.c.h.s8.bf16 %v194
    %v369 = vunpack.c.h.s8.bf16 %v195
    %v370 = vunpack.c.h.s8.bf16 %v196
    %v371 = vunpack.c.h.s8.bf16 %v197
    %v372 = vunpack.c.l.s8.bf16 %v198
    %v373 = vunpack.c.l.s8.bf16 %v199
    %v374 = vunpack.c.l.s8.bf16 %v200
    %v375 = vunpack.c.l.s8.bf16 %v201
    %v376 = vunpack.c.l.s8.bf16 %v202
    %v377 = vunpack.c.l.s8.bf16 %v203
    %v378 = vunpack.c.h.s8.bf16 %v198
    %v379 = vunpack.c.h.s8.bf16 %v199
    %v380 = vunpack.c.h.s8.bf16 %v200
    %v381 = vunpack.c.h.s8.bf16 %v201
    %v382 = vunpack.c.h.s8.bf16 %v202
    %v383 = vunpack.c.h.s8.bf16 %v203
    %v384 = vunpack.c.l.s8.bf16 %v204
    %v385 = vunpack.c.l.s8.bf16 %v205
    %v386 = vunpack.c.l.s8.bf16 %v206
    %v387 = vunpack.c.l.s8.bf16 %v207
    %v388 = vunpack.c.l.s8.bf16 %v208
    %v389 = vunpack.c.l.s8.bf16 %v209
    %v390 = vunpack.c.h.s8.bf16 %v204
    %v391 = vunpack.c.h.s8.bf16 %v205
    %v392 = vunpack.c.h.s8.bf16 %v206
    %v393 = vunpack.c.h.s8.bf16 %v207
    %v394 = vunpack.c.h.s8.bf16 %v208
    %v395 = vunpack.c.h.s8.bf16 %v209
    %v396 = vunpack.c.l.s8.bf16 %v210
    %v397 = vunpack.c.l.s8.bf16 %v211
    %v398 = vunpack.c.l.s8.bf16 %v212
    %v399 = vunpack.c.l.s8.bf16 %v213
    %v400 = vunpack.c.l.s8.bf16 %v214
    %v401 = vunpack.c.l.s8.bf16 %v215
    %v402 = vunpack.c.h.s8.bf16 %v210
    %v403 = vunpack.c.h.s8.bf16 %v211
    %v404 = vunpack.c.h.s8.bf16 %v212
    %v405 = vunpack.c.h.s8.bf16 %v213
    %v406 = vunpack.c.h.s8.bf16 %v214
    %v407 = vunpack.c.h.s8.bf16 %v215
    %v408 = vunpack.c.l.s8.bf16 %v216
    %v409 = vunpack.c.l.s8.bf16 %v217
    %v410 = vunpack.c.l.s8.bf16 %v218
    %v411 = vunpack.c.l.s8.bf16 %v219
    %v412 = vunpack.c.l.s8.bf16 %v220
    %v413 = vunpack.c.l.s8.bf16 %v221
    %v414 = vunpack.c.h.s8.bf16 %v216
    %v415 = vunpack.c.h.s8.bf16 %v217
    %v416 = vunpack.c.h.s8.bf16 %v218
    %v417 = vunpack.c.h.s8.bf16 %v219
    %v418 = vunpack.c.h.s8.bf16 %v220
    %v419 = vunpack.c.h.s8.bf16 %v221
    %v420 = vunpack.c.l.s8.bf16 %v222
    %v421 = vunpack.c.l.s8.bf16 %v223
    %v422 = vunpack.c.l.s8.bf16 %v224
    %v423 = vunpack.c.l.s8.bf16 %v225
    %v424 = vunpack.c.l.s8.bf16 %v226
    %v425 = vunpack.c.l.s8.bf16 %v227
    %v426 = vunpack.c.h.s8.bf16 %v222
    %v427 = vunpack.c.h.s8.bf16 %v223
    %v428 = vunpack.c.h.s8.bf16 %v224
    %v429 = vunpack.c.h.s8.bf16 %v225
    %v430 = vunpack.c.h.s8.bf16 %v226
    %v431 = vunpack.c.h.s8.bf16 %v227
    %v432 = vunpack.c.l.s8.bf16 %v228
    %v433 = vunpack.c.l.s8.bf16 %v229
    %v434 = vunpack.c.l.s8.bf16 %v230
    %v435 = vunpack.c.l.s8.bf16 %v231
    %v436 = vunpack.c.l.s8.bf16 %v232
    %v437 = vunpack.c.l.s8.bf16 %v233
    %v438 = vunpack.c.h.s8.bf16 %v228
    %v439 = vunpack.c.h.s8.bf16 %v229
    %v440 = vunpack.c.h.s8.bf16 %v230
    %v441 = vunpack.c.h.s8.bf16 %v231
    %v442 = vunpack.c.h.s8.bf16 %v232
    %v443 = vunpack.c.h.s8.bf16 %v233
    %v444 = vunpack.c.l.s8.bf16 %v234
    %v445 = vunpack.c.l.s8.bf16 %v235
    %v446 = vunpack.c.l.s8.bf16 %v236
    %v447 = vunpack.c.l.s8.bf16 %v237
    %v448 = vunpack.c.l.s8.bf16 %v238
    %v449 = vunpack.c.l.s8.bf16 %v239
    %v450 = vunpack.c.h.s8.bf16 %v234
    %v451 = vunpack.c.h.s8.bf16 %v235
    %v452 = vunpack.c.h.s8.bf16 %v236
    %v453 = vunpack.c.h.s8.bf16 %v237
    %v454 = vunpack.c.h.s8.bf16 %v238
    %v455 = vunpack.c.h.s8.bf16 %v239
    %v456 = vunpack.c.l.s8.bf16 %v240
    %v457 = vunpack.c.l.s8.bf16 %v241
    %v458 = vunpack.c.l.s8.bf16 %v242
    %v459 = vunpack.c.l.s8.bf16 %v243
    %v460 = vunpack.c.l.s8.bf16 %v244
    %v461 = vunpack.c.l.s8.bf16 %v245
    %v462 = vunpack.c.h.s8.bf16 %v240
    %v463 = vunpack.c.h.s8.bf16 %v241
    %v464 = vunpack.c.h.s8.bf16 %v242
    %v465 = vunpack.c.h.s8.bf16 %v243
    %v466 = vunpack.c.h.s8.bf16 %v244
    %v467 = vunpack.c.h.s8.bf16 %v245
    %v468 = vunpack.c.l.s8.bf16 %v246
    %v469 = vunpack.c.l.s8.bf16 %v247
    %v470 = vunpack.c.l.s8.bf16 %v248
    %v471 = vunpack.c.l.s8.bf16 %v249
    %v472 = vunpack.c.l.s8.bf16 %v250
    %v473 = vunpack.c.l.s8.bf16 %v251
    %v474 = vunpack.c.h.s8.bf16 %v246
    %v475 = vunpack.c.h.s8.bf16 %v247
    %v476 = vunpack.c.h.s8.bf16 %v248
    %v477 = vunpack.c.h.s8.bf16 %v249
    %v478 = vunpack.c.h.s8.bf16 %v250
    %v479 = vunpack.c.h.s8.bf16 %v251
    %v480 = vunpack.c.l.s8.bf16 %v252
    %v481 = vunpack.c.l.s8.bf16 %v253
    %v482 = vunpack.c.l.s8.bf16 %v254
    %v483 = vunpack.c.l.s8.bf16 %v255
    %v484 = vunpack.c.l.s8.bf16 %v256
    %v485 = vunpack.c.l.s8.bf16 %v257
    %v486 = vunpack.c.h.s8.bf16 %v252
    %v487 = vunpack.c.h.s8.bf16 %v253
    %v488 = vunpack.c.h.s8.bf16 %v254
    %v489 = vunpack.c.h.s8.bf16 %v255
    %v490 = vunpack.c.h.s8.bf16 %v256
    %v491 = vunpack.c.h.s8.bf16 %v257
    %v492 = vunpack.c.l.s8.bf16 %v258
    %v493 = vunpack.c.l.s8.bf16 %v259
    %v494 = vunpack.c.l.s8.bf16 %v260
    %v495 = vunpack.c.l.s8.bf16 %v261
    %v496 = vunpack.c.l.s8.bf16 %v262
    %v497 = vunpack.c.l.s8.bf16 %v263
    %v498 = vunpack.c.h.s8.bf16 %v258
    %v499 = vunpack.c.h.s8.bf16 %v259
    %v500 = vunpack.c.h.s8.bf16 %v260
    %v501 = vunpack.c.h.s8.bf16 %v261
    %v502 = vunpack.c.h.s8.bf16 %v262
    %v503 = vunpack.c.h.s8.bf16 %v263
    %v504 = vunpack.c.l.s8.bf16 %v264
    %v505 = vunpack.c.l.s8.bf16 %v265
    %v506 = vunpack.c.l.s8.bf16 %v266
    %v507 = vunpack.c.l.s8.bf16 %v267
    %v508 = vunpack.c.l.s8.bf16 %v268
    %v509 = vunpack.c.l.s8.bf16 %v269
    %v510 = vunpack.c.h.s8.bf16 %v264
    %v511 = vunpack.c.h.s8.bf16 %v265
    %v512 = vunpack.c.h.s8.bf16 %v266
    %v513 = vunpack.c.h.s8.bf16 %v267
    %v514 = vunpack.c.h.s8.bf16 %v268
    %v515 = vunpack.c.h.s8.bf16 %v269
    %v516 = vunpack.c.l.s8.bf16 %v270
    %v517 = vunpack.c.l.s8.bf16 %v271
    %v518 = vunpack.c.l.s8.bf16 %v272
    %v519 = vunpack.c.l.s8.bf16 %v273
    %v520 = vunpack.c.l.s8.bf16 %v274
    %v521 = vunpack.c.l.s8.bf16 %v275
    %v522 = vunpack.c.h.s8.bf16 %v270
    %v523 = vunpack.c.h.s8.bf16 %v271
    %v524 = vunpack.c.h.s8.bf16 %v272
    %v525 = vunpack.c.h.s8.bf16 %v273
    %v526 = vunpack.c.h.s8.bf16 %v274
    %v527 = vunpack.c.h.s8.bf16 %v275
    %v528 = vunpack.c.l.s8.bf16 %v276
    %v529 = vunpack.c.l.s8.bf16 %v277
    %v530 = vunpack.c.l.s8.bf16 %v278
    %v531 = vunpack.c.l.s8.bf16 %v279
    %v532 = vunpack.c.l.s8.bf16 %v280
    %v533 = vunpack.c.l.s8.bf16 %v281
    %v534 = vunpack.c.h.s8.bf16 %v276
    %v535 = vunpack.c.h.s8.bf16 %v277
    %v536 = vunpack.c.h.s8.bf16 %v278
    %v537 = vunpack.c.h.s8.bf16 %v279
    %v538 = vunpack.c.h.s8.bf16 %v280
    %v539 = vunpack.c.h.s8.bf16 %v281
    %v540 = vunpack.c.l.s8.bf16 %v282
    %v541 = vunpack.c.l.s8.bf16 %v283
    %v542 = vunpack.c.l.s8.bf16 %v284
    %v543 = vunpack.c.l.s8.bf16 %v285
    %v544 = vunpack.c.l.s8.bf16 %v286
    %v545 = vunpack.c.l.s8.bf16 %v287
    %v546 = vunpack.c.h.s8.bf16 %v282
    %v547 = vunpack.c.h.s8.bf16 %v283
    %v548 = vunpack.c.h.s8.bf16 %v284
    %v549 = vunpack.c.h.s8.bf16 %v285
    %v550 = vunpack.c.h.s8.bf16 %v286
    %v551 = vunpack.c.h.s8.bf16 %v287
    %v552 = vunpack.c.l.s8.bf16 %v288
    %v553 = vunpack.c.l.s8.bf16 %v289
    %v554 = vunpack.c.l.s8.bf16 %v290
    %v555 = vunpack.c.l.s8.bf16 %v291
    %v556 = vunpack.c.l.s8.bf16 %v292
    %v557 = vunpack.c.l.s8.bf16 %v293
    %v558 = vunpack.c.h.s8.bf16 %v288
    %v559 = vunpack.c.h.s8.bf16 %v289
    %v560 = vunpack.c.h.s8.bf16 %v290
    %v561 = vunpack.c.h.s8.bf16 %v291
    %v562 = vunpack.c.h.s8.bf16 %v292
    %v563 = vunpack.c.h.s8.bf16 %v293
    %v564 = vunpack.c.l.s8.bf16 %v294
    %v565 = vunpack.c.l.s8.bf16 %v295
    %v566 = vunpack.c.l.s8.bf16 %v296
    %v567 = vunpack.c.l.s8.bf16 %v297
    %v568 = vunpack.c.l.s8.bf16 %v298
    %v569 = vunpack.c.l.s8.bf16 %v299
    %v570 = vunpack.c.h.s8.bf16 %v294
    %v571 = vunpack.c.h.s8.bf16 %v295
    %v572 = vunpack.c.h.s8.bf16 %v296
    %v573 = vunpack.c.h.s8.bf16 %v297
    %v574 = vunpack.c.h.s8.bf16 %v298
    %v575 = vunpack.c.h.s8.bf16 %v299
    %v576 = vunpack.c.l.s8.bf16 %v300
    %v577 = vunpack.c.l.s8.bf16 %v301
    %v578 = vunpack.c.l.s8.bf16 %v302
    %v579 = vunpack.c.l.s8.bf16 %v303
    %v580 = vunpack.c.l.s8.bf16 %v304
    %v581 = vunpack.c.l.s8.bf16 %v305
    %v582 = vunpack.c.h.s8.bf16 %v300
    %v583 = vunpack.c.h.s8.bf16 %v301
    %v584 = vunpack.c.h.s8.bf16 %v302
    %v585 = vunpack.c.h.s8.bf16 %v303
    %v586 = vunpack.c.h.s8.bf16 %v304
    %v587 = vunpack.c.h.s8.bf16 %v305
    %v588 = vunpack.c.l.s8.bf16 %v306
    %v589 = vunpack.c.l.s8.bf16 %v307
    %v590 = vunpack.c.l.s8.bf16 %v308
    %v591 = vunpack.c.l.s8.bf16 %v309
    %v592 = vunpack.c.l.s8.bf16 %v310
    %v593 = vunpack.c.l.s8.bf16 %v311
    %v594 = vunpack.c.h.s8.bf16 %v306
    %v595 = vunpack.c.h.s8.bf16 %v307
    %v596 = vunpack.c.h.s8.bf16 %v308
    %v597 = vunpack.c.h.s8.bf16 %v309
    %v598 = vunpack.c.h.s8.bf16 %v310
    %v599 = vunpack.c.h.s8.bf16 %v311
    %v600 = vpack.c.bf16 %v162, %v162
    %v601 = vpack.c.bf16 %v163, %v163
    %v602 = vpack.c.bf16 %v164, %v164
    %v603 = vpack.c.bf16 %v165, %v165
    %v604 = vpack.c.bf16 %v166, %v166
    %v605 = vpack.c.bf16 %v167, %v167
    %606 = vmatprep.subr.bf16.mxu0 %v355
    %607 = vmatpush1.bf16.msra.mxu0 %v354
    %608 = vmatprep.subr.bf16.mxu0 %v349
    %609 = vmatpush1.bf16.msra.mxu0 %v348
    %610 = vmatprep.subr.bf16.mxu0 %v343
    %611 = vmatpush1.bf16.msra.mxu0 %v342
    %612 = vmatprep.subr.bf16.mxu0 %v337
    %613 = vmatpush1.bf16.msra.mxu0 %v336
    %614 = vmatprep.subr.bf16.mxu0 %v331
    %615 = vmatpush1.bf16.msra.mxu0 %v330
    %616 = vmatprep.subr.bf16.mxu0 %v325
    %617 = vmatpush1.bf16.msra.mxu0 %v324
    %618 = vmatprep.subr.bf16.mxu0 %v319
    %619 = vmatpush1.bf16.msra.mxu0 %v318
    %620 = vmatprep.subr.bf16.mxu0 %v313
    %621 = vmatpush1.bf16.msra.mxu0 %v312
    %622 = vmatprep.subr.bf16.mxu0 %v403
    %623 = vmatpush2.bf16.msra.mxu0 %v402
    %624 = vmatprep.subr.bf16.mxu0 %v397
    %625 = vmatpush2.bf16.msra.mxu0 %v396
    %626 = vmatprep.subr.bf16.mxu0 %v391
    %627 = vmatpush2.bf16.msra.mxu0 %v390
    %628 = vmatprep.subr.bf16.mxu0 %v385
    %629 = vmatpush2.bf16.msra.mxu0 %v384
    %630 = vmatprep.subr.bf16.mxu0 %v379
    %631 = vmatpush2.bf16.msra.mxu0 %v378
    %632 = vmatprep.subr.bf16.mxu0 %v373
    %633 = vmatpush2.bf16.msra.mxu0 %v372
    %634 = vmatprep.subr.bf16.mxu0 %v367
    %635 = vmatpush2.bf16.msra.mxu0 %v366
    %636 = vmatprep.subr.bf16.mxu0 %v361
    %637 = vmatpush2.bf16.msra.mxu0 %v360
    %638 = vmatprep.mubr.bf16.mxu0 %v601
    %639 = vmatmul.mubr.bf16.gmra.mxu0 %v600
    %v640 = vpop.f32.mrf.mxu0
    %v641 = vadd.f32 0.0, %v640
    %v642 = vpop.f32.mrf.mxu0
    %v643 = vadd.f32 0.0, %v642
    %v644 = vpop.f32.mrf.mxu0
    %v645 = vpop.f32.mrf.mxu0
    %646 = vdwg.mxu0
    %647 = vmatprep.subr.bf16.mxu0 %v451
    %648 = vmatpush1.bf16.msra.mxu0 %v450
    %649 = vmatprep.subr.bf16.mxu0 %v445
    %650 = vmatpush1.bf16.msra.mxu0 %v444
    %651 = vmatprep.subr.bf16.mxu0 %v439
    %652 = vmatpush1.bf16.msra.mxu0 %v438
    %653 = vmatprep.subr.bf16.mxu0 %v433
    %654 = vmatpush1.bf16.msra.mxu0 %v432
    %655 = vmatprep.subr.bf16.mxu0 %v427
    %656 = vmatpush1.bf16.msra.mxu0 %v426
    %657 = vmatprep.subr.bf16.mxu0 %v421
    %658 = vmatpush1.bf16.msra.mxu0 %v420
    %659 = vmatprep.subr.bf16.mxu0 %v415
    %660 = vmatpush1.bf16.msra.mxu0 %v414
    %661 = vmatprep.subr.bf16.mxu0 %v409
    %662 = vmatpush1.bf16.msra.mxu0 %v408
    %663 = vmatprep.subr.bf16.mxu0 %v499
    %664 = vmatpush2.bf16.msra.mxu0 %v498
    %665 = vmatprep.subr.bf16.mxu0 %v493
    %666 = vmatpush2.bf16.msra.mxu0 %v492
    %667 = vmatprep.subr.bf16.mxu0 %v487
    %668 = vmatpush2.bf16.msra.mxu0 %v486
    %669 = vmatprep.subr.bf16.mxu0 %v481
    %670 = vmatpush2.bf16.msra.mxu0 %v480
    %671 = vmatprep.subr.bf16.mxu0 %v475
    %672 = vmatpush2.bf16.msra.mxu0 %v474
    %673 = vmatprep.subr.bf16.mxu0 %v469
    %674 = vmatpush2.bf16.msra.mxu0 %v468
    %675 = vmatprep.subr.bf16.mxu0 %v463
    %676 = vmatpush2.bf16.msra.mxu0 %v462
    %677 = vmatprep.subr.bf16.mxu0 %v457
    %678 = vmatpush2.bf16.msra.mxu0 %v456
    %679 = vmatprep.mubr.bf16.mxu0 %v603
    %680 = vmatmul.mubr.bf16.gmra.mxu0 %v602
    %v681 = vpop.f32.mrf.mxu0
    %v682 = vadd.f32 %v641, %v681
    %v683 = vpop.f32.mrf.mxu0
    %v684 = vadd.f32 %v643, %v683
    %v685 = vpop.f32.mrf.mxu0
    %v686 = vpop.f32.mrf.mxu0
    %687 = vdwg.mxu0
    %688 = vmatprep.subr.bf16.mxu0 %v547
    %689 = vmatpush1.bf16.msra.mxu0 %v546
    %690 = vmatprep.subr.bf16.mxu0 %v541
    %691 = vmatpush1.bf16.msra.mxu0 %v540
    %692 = vmatprep.subr.bf16.mxu0 %v535
    %693 = vmatpush1.bf16.msra.mxu0 %v534
    %694 = vmatprep.subr.bf16.mxu0 %v529
    %695 = vmatpush1.bf16.msra.mxu0 %v528
    %696 = vmatprep.subr.bf16.mxu0 %v523
    %697 = vmatpush1.bf16.msra.mxu0 %v522
    %698 = vmatprep.subr.bf16.mxu0 %v517
    %699 = vmatpush1.bf16.msra.mxu0 %v516
    %700 = vmatprep.subr.bf16.mxu0 %v511
    %701 = vmatpush1.bf16.msra.mxu0 %v510
    %702 = vmatprep.subr.bf16.mxu0 %v505
    %703 = vmatpush1.bf16.msra.mxu0 %v504
    %704 = vmatprep.subr.bf16.mxu0 %v595
    %705 = vmatpush2.bf16.msra.mxu0 %v594
    %706 = vmatprep.subr.bf16.mxu0 %v589
    %707 = vmatpush2.bf16.msra.mxu0 %v588
    %708 = vmatprep.subr.bf16.mxu0 %v583
    %709 = vmatpush2.bf16.msra.mxu0 %v582
    %710 = vmatprep.subr.bf16.mxu0 %v577
    %711 = vmatpush2.bf16.msra.mxu0 %v576
    %712 = vmatprep.subr.bf16.mxu0 %v571
    %713 = vmatpush2.bf16.msra.mxu0 %v570
    %714 = vmatprep.subr.bf16.mxu0 %v565
    %715 = vmatpush2.bf16.msra.mxu0 %v564
    %716 = vmatprep.subr.bf16.mxu0 %v559
    %717 = vmatpush2.bf16.msra.mxu0 %v558
    %718 = vmatprep.subr.bf16.mxu0 %v553
    %719 = vmatpush2.bf16.msra.mxu0 %v552
    %720 = vmatprep.mubr.bf16.mxu0 %v605
    %721 = vmatmul.mubr.bf16.gmra.mxu0 %v604
    %v722 = vpop.f32.mrf.mxu0
    %v723 = vadd.f32 %v682, %v722
    %v724 = vpop.f32.mrf.mxu0
    %v725 = vadd.f32 %v684, %v724
    %v726 = vpop.f32.mrf.mxu0
    %v727 = vpop.f32.mrf.mxu0
    %728 = vdwg.mxu0
    %729 = vmatprep.subr.bf16.mxu0 %v357
    %730 = vmatpush1.bf16.msra.mxu0 %v356
    %731 = vmatprep.subr.bf16.mxu0 %v351
    %732 = vmatpush1.bf16.msra.mxu0 %v350
    %733 = vmatprep.subr.bf16.mxu0 %v345
    %734 = vmatpush1.bf16.msra.mxu0 %v344
    %735 = vmatprep.subr.bf16.mxu0 %v339
    %736 = vmatpush1.bf16.msra.mxu0 %v338
    %737 = vmatprep.subr.bf16.mxu0 %v333
    %738 = vmatpush1.bf16.msra.mxu0 %v332
    %739 = vmatprep.subr.bf16.mxu0 %v327
    %740 = vmatpush1.bf16.msra.mxu0 %v326
    %741 = vmatprep.subr.bf16.mxu0 %v321
    %742 = vmatpush1.bf16.msra.mxu0 %v320
    %743 = vmatprep.subr.bf16.mxu0 %v315
    %744 = vmatpush1.bf16.msra.mxu0 %v314
    %745 = vmatprep.subr.bf16.mxu0 %v405
    %746 = vmatpush2.bf16.msra.mxu0 %v404
    %747 = vmatprep.subr.bf16.mxu0 %v399
    %748 = vmatpush2.bf16.msra.mxu0 %v398
    %749 = vmatprep.subr.bf16.mxu0 %v393
    %750 = vmatpush2.bf16.msra.mxu0 %v392
    %751 = vmatprep.subr.bf16.mxu0 %v387
    %752 = vmatpush2.bf16.msra.mxu0 %v386
    %753 = vmatprep.subr.bf16.mxu0 %v381
    %754 = vmatpush2.bf16.msra.mxu0 %v380
    %755 = vmatprep.subr.bf16.mxu0 %v375
    %756 = vmatpush2.bf16.msra.mxu0 %v374
    %757 = vmatprep.subr.bf16.mxu0 %v369
    %758 = vmatpush2.bf16.msra.mxu0 %v368
    %759 = vmatprep.subr.bf16.mxu0 %v363
    %760 = vmatpush2.bf16.msra.mxu0 %v362
    %761 = vmatprep.mubr.bf16.mxu0 %v601
    %762 = vmatmul.mubr.bf16.gmra.mxu0 %v600
    %v763 = vpop.f32.mrf.mxu0
    %v764 = vadd.f32 0.0, %v763
    %v765 = vpop.f32.mrf.mxu0
    %v766 = vadd.f32 0.0, %v765
    %v767 = vpop.f32.mrf.mxu0
    %v768 = vpop.f32.mrf.mxu0
    %769 = vdwg.mxu0
    %770 = vmatprep.subr.bf16.mxu0 %v453
    %771 = vmatpush1.bf16.msra.mxu0 %v452
    %772 = vmatprep.subr.bf16.mxu0 %v447
    %773 = vmatpush1.bf16.msra.mxu0 %v446
    %774 = vmatprep.subr.bf16.mxu0 %v441
    %775 = vmatpush1.bf16.msra.mxu0 %v440
    %776 = vmatprep.subr.bf16.mxu0 %v435
    %777 = vmatpush1.bf16.msra.mxu0 %v434
    %778 = vmatprep.subr.bf16.mxu0 %v429
    %779 = vmatpush1.bf16.msra.mxu0 %v428
    %780 = vmatprep.subr.bf16.mxu0 %v423
    %781 = vmatpush1.bf16.msra.mxu0 %v422
    %782 = vmatprep.subr.bf16.mxu0 %v417
    %783 = vmatpush1.bf16.msra.mxu0 %v416
    %784 = vmatprep.subr.bf16.mxu0 %v411
    %785 = vmatpush1.bf16.msra.mxu0 %v410
    %786 = vmatprep.subr.bf16.mxu0 %v501
    %787 = vmatpush2.bf16.msra.mxu0 %v500
    %788 = vmatprep.subr.bf16.mxu0 %v495
    %789 = vmatpush2.bf16.msra.mxu0 %v494
    %790 = vmatprep.subr.bf16.mxu0 %v489
    %791 = vmatpush2.bf16.msra.mxu0 %v488
    %792 = vmatprep.subr.bf16.mxu0 %v483
    %793 = vmatpush2.bf16.msra.mxu0 %v482
    %794 = vmatprep.subr.bf16.mxu0 %v477
    %795 = vmatpush2.bf16.msra.mxu0 %v476
    %796 = vmatprep.subr.bf16.mxu0 %v471
    %797 = vmatpush2.bf16.msra.mxu0 %v470
    %798 = vmatprep.subr.bf16.mxu0 %v465
    %799 = vmatpush2.bf16.msra.mxu0 %v464
    %800 = vmatprep.subr.bf16.mxu0 %v459
    %801 = vmatpush2.bf16.msra.mxu0 %v458
    %802 = vmatprep.mubr.bf16.mxu0 %v603
    %803 = vmatmul.mubr.bf16.gmra.mxu0 %v602
    %v804 = vpop.f32.mrf.mxu0
    %v805 = vadd.f32 %v764, %v804
    %v806 = vpop.f32.mrf.mxu0
    %v807 = vadd.f32 %v766, %v806
    %v808 = vpop.f32.mrf.mxu0
    %v809 = vpop.f32.mrf.mxu0
    %810 = vdwg.mxu0
    %811 = vmatprep.subr.bf16.mxu0 %v549
    %812 = vmatpush1.bf16.msra.mxu0 %v548
    %813 = vmatprep.subr.bf16.mxu0 %v543
    %814 = vmatpush1.bf16.msra.mxu0 %v542
    %815 = vmatprep.subr.bf16.mxu0 %v537
    %816 = vmatpush1.bf16.msra.mxu0 %v536
    %817 = vmatprep.subr.bf16.mxu0 %v531
    %818 = vmatpush1.bf16.msra.mxu0 %v530
    %819 = vmatprep.subr.bf16.mxu0 %v525
    %820 = vmatpush1.bf16.msra.mxu0 %v524
    %821 = vmatprep.subr.bf16.mxu0 %v519
    %822 = vmatpush1.bf16.msra.mxu0 %v518
    %823 = vmatprep.subr.bf16.mxu0 %v513
    %824 = vmatpush1.bf16.msra.mxu0 %v512
    %825 = vmatprep.subr.bf16.mxu0 %v507
    %826 = vmatpush1.bf16.msra.mxu0 %v506
    %827 = vmatprep.subr.bf16.mxu0 %v597
    %828 = vmatpush2.bf16.msra.mxu0 %v596
    %829 = vmatprep.subr.bf16.mxu0 %v591
    %830 = vmatpush2.bf16.msra.mxu0 %v590
    %831 = vmatprep.subr.bf16.mxu0 %v585
    %832 = vmatpush2.bf16.msra.mxu0 %v584
    %833 = vmatprep.subr.bf16.mxu0 %v579
    %834 = vmatpush2.bf16.msra.mxu0 %v578
    %835 = vmatprep.subr.bf16.mxu0 %v573
    %836 = vmatpush2.bf16.msra.mxu0 %v572
    %837 = vmatprep.subr.bf16.mxu0 %v567
    %838 = vmatpush2.bf16.msra.mxu0 %v566
    %839 = vmatprep.subr.bf16.mxu0 %v561
    %840 = vmatpush2.bf16.msra.mxu0 %v560
    %841 = vmatprep.subr.bf16.mxu0 %v555
    %842 = vmatpush2.bf16.msra.mxu0 %v554
    %843 = vmatprep.mubr.bf16.mxu0 %v605
    %844 = vmatmul.mubr.bf16.gmra.mxu0 %v604
    %v845 = vpop.f32.mrf.mxu0
    %v846 = vadd.f32 %v805, %v845
    %v847 = vpop.f32.mrf.mxu0
    %v848 = vadd.f32 %v807, %v847
    %v849 = vpop.f32.mrf.mxu0
    %v850 = vpop.f32.mrf.mxu0
    %851 = vdwg.mxu0
    %852 = vmatprep.subr.bf16.mxu0 %v359
    %853 = vmatpush1.bf16.msra.mxu0 %v358
    %854 = vmatprep.subr.bf16.mxu0 %v353
    %855 = vmatpush1.bf16.msra.mxu0 %v352
    %856 = vmatprep.subr.bf16.mxu0 %v347
    %857 = vmatpush1.bf16.msra.mxu0 %v346
    %858 = vmatprep.subr.bf16.mxu0 %v341
    %859 = vmatpush1.bf16.msra.mxu0 %v340
    %860 = vmatprep.subr.bf16.mxu0 %v335
    %861 = vmatpush1.bf16.msra.mxu0 %v334
    %862 = vmatprep.subr.bf16.mxu0 %v329
    %863 = vmatpush1.bf16.msra.mxu0 %v328
    %864 = vmatprep.subr.bf16.mxu0 %v323
    %865 = vmatpush1.bf16.msra.mxu0 %v322
    %866 = vmatprep.subr.bf16.mxu0 %v317
    %867 = vmatpush1.bf16.msra.mxu0 %v316
    %868 = vmatprep.subr.bf16.mxu0 %v407
    %869 = vmatpush2.bf16.msra.mxu0 %v406
    %870 = vmatprep.subr.bf16.mxu0 %v401
    %871 = vmatpush2.bf16.msra.mxu0 %v400
    %872 = vmatprep.subr.bf16.mxu0 %v395
    %873 = vmatpush2.bf16.msra.mxu0 %v394
    %874 = vmatprep.subr.bf16.mxu0 %v389
    %875 = vmatpush2.bf16.msra.mxu0 %v388
    %876 = vmatprep.subr.bf16.mxu0 %v383
    %877 = vmatpush2.bf16.msra.mxu0 %v382
    %878 = vmatprep.subr.bf16.mxu0 %v377
    %879 = vmatpush2.bf16.msra.mxu0 %v376
    %880 = vmatprep.subr.bf16.mxu0 %v371
    %881 = vmatpush2.bf16.msra.mxu0 %v370
    %882 = vmatprep.subr.bf16.mxu0 %v365
    %883 = vmatpush2.bf16.msra.mxu0 %v364
    %884 = vmatprep.mubr.bf16.mxu0 %v601
    %885 = vmatmul.mubr.bf16.gmra.mxu0 %v600
    %v886 = vpop.f32.mrf.mxu0
    %v887 = vadd.f32 0.0, %v886
    %v888 = vpop.f32.mrf.mxu0
    %v889 = vadd.f32 0.0, %v888
    %v890 = vpop.f32.mrf.mxu0
    %v891 = vpop.f32.mrf.mxu0
    %892 = vdwg.mxu0
    %893 = vmatprep.subr.bf16.mxu0 %v455
    %894 = vmatpush1.bf16.msra.mxu0 %v454
    %895 = vmatprep.subr.bf16.mxu0 %v449
    %896 = vmatpush1.bf16.msra.mxu0 %v448
    %897 = vmatprep.subr.bf16.mxu0 %v443
    %898 = vmatpush1.bf16.msra.mxu0 %v442
    %899 = vmatprep.subr.bf16.mxu0 %v437
    %900 = vmatpush1.bf16.msra.mxu0 %v436
    %901 = vmatprep.subr.bf16.mxu0 %v431
    %902 = vmatpush1.bf16.msra.mxu0 %v430
    %903 = vmatprep.subr.bf16.mxu0 %v425
    %904 = vmatpush1.bf16.msra.mxu0 %v424
    %905 = vmatprep.subr.bf16.mxu0 %v419
    %906 = vmatpush1.bf16.msra.mxu0 %v418
    %907 = vmatprep.subr.bf16.mxu0 %v413
    %908 = vmatpush1.bf16.msra.mxu0 %v412
    %909 = vmatprep.subr.bf16.mxu0 %v503
    %910 = vmatpush2.bf16.msra.mxu0 %v502
    %911 = vmatprep.subr.bf16.mxu0 %v497
    %912 = vmatpush2.bf16.msra.mxu0 %v496
    %913 = vmatprep.subr.bf16.mxu0 %v491
    %914 = vmatpush2.bf16.msra.mxu0 %v490
    %915 = vmatprep.subr.bf16.mxu0 %v485
    %916 = vmatpush2.bf16.msra.mxu0 %v484
    %917 = vmatprep.subr.bf16.mxu0 %v479
    %918 = vmatpush2.bf16.msra.mxu0 %v478
    %919 = vmatprep.subr.bf16.mxu0 %v473
    %920 = vmatpush2.bf16.msra.mxu0 %v472
    %921 = vmatprep.subr.bf16.mxu0 %v467
    %922 = vmatpush2.bf16.msra.mxu0 %v466
    %923 = vmatprep.subr.bf16.mxu0 %v461
    %924 = vmatpush2.bf16.msra.mxu0 %v460
    %925 = vmatprep.mubr.bf16.mxu0 %v603
    %926 = vmatmul.mubr.bf16.gmra.mxu0 %v602
    %v927 = vpop.f32.mrf.mxu0
    %v928 = vadd.f32 %v887, %v927
    %v929 = vpop.f32.mrf.mxu0
    %v930 = vadd.f32 %v889, %v929
    %v931 = vpop.f32.mrf.mxu0
    %v932 = vpop.f32.mrf.mxu0
    %933 = vdwg.mxu0
    %934 = vmatprep.subr.bf16.mxu0 %v551
    %935 = vmatpush1.bf16.msra.mxu0 %v550
    %936 = vmatprep.subr.bf16.mxu0 %v545
    %937 = vmatpush1.bf16.msra.mxu0 %v544
    %938 = vmatprep.subr.bf16.mxu0 %v539
    %939 = vmatpush1.bf16.msra.mxu0 %v538
    %940 = vmatprep.subr.bf16.mxu0 %v533
    %941 = vmatpush1.bf16.msra.mxu0 %v532
    %942 = vmatprep.subr.bf16.mxu0 %v527
    %943 = vmatpush1.bf16.msra.mxu0 %v526
    %944 = vmatprep.subr.bf16.mxu0 %v521
    %945 = vmatpush1.bf16.msra.mxu0 %v520
    %946 = vmatprep.subr.bf16.mxu0 %v515
    %947 = vmatpush1.bf16.msra.mxu0 %v514
    %948 = vmatprep.subr.bf16.mxu0 %v509
    %949 = vmatpush1.bf16.msra.mxu0 %v508
    %950 = vmatprep.subr.bf16.mxu0 %v599
    %951 = vmatpush2.bf16.msra.mxu0 %v598
    %952 = vmatprep.subr.bf16.mxu0 %v593
    %953 = vmatpush2.bf16.msra.mxu0 %v592
    %954 = vmatprep.subr.bf16.mxu0 %v587
    %955 = vmatpush2.bf16.msra.mxu0 %v586
    %956 = vmatprep.subr.bf16.mxu0 %v581
    %957 = vmatpush2.bf16.msra.mxu0 %v580
    %958 = vmatprep.subr.bf16.mxu0 %v575
    %959 = vmatpush2.bf16.msra.mxu0 %v574
    %960 = vmatprep.subr.bf16.mxu0 %v569
    %961 = vmatpush2.bf16.msra.mxu0 %v568
    %962 = vmatprep.subr.bf16.mxu0 %v563
    %963 = vmatpush2.bf16.msra.mxu0 %v562
    %964 = vmatprep.subr.bf16.mxu0 %v557
    %965 = vmatpush2.bf16.msra.mxu0 %v556
    %966 = vmatprep.mubr.bf16.mxu0 %v605
    %967 = vmatmul.mubr.bf16.gmra.mxu0 %v604
    %v968 = vpop.f32.mrf.mxu0
    %v969 = vadd.f32 %v928, %v968
    %v970 = vpop.f32.mrf.mxu0
    %v971 = vadd.f32 %v930, %v970
    %v972 = vpop.f32.mrf.mxu0
    %v973 = vpop.f32.mrf.mxu0
    %974 = vdwg.mxu0
    %s975 = scalar_lea.vmem [#allocation11], 53
    %v976 = vld [vmem:[%s975] ss:$8 sm:$0xf]
    %v977 = vld [vmem:[%s975] ss:$8 sm:$0x30]
    %v978 = vor.u32 %v976, %v977
    %v979 = vld [vmem:[#allocation11] ss:$8 sm:$0xf]
    %v980 = vld [vmem:[#allocation11] ss:$8 sm:$0x30]
    %v981 = vor.u32 %v979, %v980
    %v983 = vlaneseq
    %v984 = vshrl.u32 %v983, 7
    %v985 = vsub.s32 0, %v984
    %v986 = vrot.slane %v978, %v985
    %v987 = vlaneseq
    %v988 = vshrl.u32 %v987, 7
    %v989 = vsub.s32 1, %v988
    %v990 = vrot.slane %v978, %v989
    %v991 = vlaneseq
    %v992 = vshrl.u32 %v991, 7
    %v993 = vsub.s32 2, %v992
    %v994 = vrot.slane %v978, %v993
    %v995 = vlaneseq
    %v996 = vshrl.u32 %v995, 7
    %v997 = vsub.s32 3, %v996
    %v998 = vrot.slane %v978, %v997
    %v999 = vlaneseq
    %v1000 = vshrl.u32 %v999, 7
    %v1001 = vsub.s32 4, %v1000
    %v1002 = vrot.slane %v978, %v1001
    %v1003 = vlaneseq
    %v1004 = vshrl.u32 %v1003, 7
    %v1005 = vsub.s32 5, %v1004
    %v1006 = vrot.slane %v978, %v1005
    %v1013 = vmul.f32 %v723, %v986
    %v1014 = vmul.f32 %v725, %v990
    %v1015 = vmul.f32 %v846, %v994
    %v1016 = vmul.f32 %v848, %v998
    %v1017 = vmul.f32 %v969, %v1002
    %v1018 = vmul.f32 %v971, %v1006
    %v1020 = vlaneseq
    %v1021 = vshrl.u32 %v1020, 7
    %v1022 = vsub.s32 0, %v1021
    %v1023 = vrot.slane %v981, %v1022
    %v1024 = vlaneseq
    %v1025 = vshrl.u32 %v1024, 7
    %v1026 = vsub.s32 1, %v1025
    %v1027 = vrot.slane %v981, %v1026
    %v1028 = vlaneseq
    %v1029 = vshrl.u32 %v1028, 7
    %v1030 = vsub.s32 2, %v1029
    %v1031 = vrot.slane %v981, %v1030
    %v1032 = vlaneseq
    %v1033 = vshrl.u32 %v1032, 7
    %v1034 = vsub.s32 3, %v1033
    %v1035 = vrot.slane %v981, %v1034
    %v1036 = vlaneseq
    %v1037 = vshrl.u32 %v1036, 7
    %v1038 = vsub.s32 4, %v1037
    %v1039 = vrot.slane %v981, %v1038
    %v1040 = vlaneseq
    %v1041 = vshrl.u32 %v1040, 7
    %v1042 = vsub.s32 5, %v1041
    %v1043 = vrot.slane %v981, %v1042
    %v1050 = vadd.f32 %v1013, %v1023
    %v1051 = vadd.f32 %v1014, %v1027
    %v1052 = vadd.f32 %v1015, %v1031
    %v1053 = vadd.f32 %v1016, %v1035
    %v1054 = vadd.f32 %v1017, %v1039
    %v1055 = vadd.f32 %v1018, %v1043
    %v1056 = vmax.f32 %v1050, 0.0
    %v1057 = vmax.f32 %v1051, 0.0
    %v1058 = vmax.f32 %v1052, 0.0
    %v1059 = vmax.f32 %v1053, 0.0
    %v1060 = vmax.f32 %v1054, 0.0
    %v1061 = vmax.f32 %v1055, 0.0
    %s1062 = scalar_lea.vmem [#allocation11], 5
    %v1063 = vld [vmem:[%s1062] ss:$8 sm:$0xf]
    %v1064 = vld [vmem:[%s1062] ss:$8 sm:$0x30]
    %v1065 = vor.u32 %v1063, %v1064
    %s1066 = scalar_lea.vmem [#allocation11], 49
    %v1067 = vld [vmem:[%s1066] ss:$8 sm:$0xf]
    %v1068 = vld [vmem:[%s1066] ss:$8 sm:$0x30]
    %v1069 = vor.u32 %v1067, %v1068
    %v1070 = vrot.slane %v1056, 4
    %v1071 = vadd.f32 %v1056, %v1070
    %v1072 = vrot.slane %v1071, 2
    %v1073 = vadd.f32 %v1071, %v1072
    %v1074 = vrot.slane %v1073, 1
    %v1075 = vadd.f32 %v1073, %v1074
    %v1076 = vrot.slane %v1057, 4
    %v1077 = vadd.f32 %v1057, %v1076
    %v1078 = vrot.slane %v1077, 2
    %v1079 = vadd.f32 %v1077, %v1078
    %v1080 = vrot.slane %v1079, 1
    %v1081 = vadd.f32 %v1079, %v1080
    %v1082 = vrot.slane %v1058, 4
    %v1083 = vadd.f32 %v1058, %v1082
    %v1084 = vrot.slane %v1083, 2
    %v1085 = vadd.f32 %v1083, %v1084
    %v1086 = vrot.slane %v1085, 1
    %v1087 = vadd.f32 %v1085, %v1086
    %v1088 = vrot.slane %v1059, 4
    %v1089 = vadd.f32 %v1059, %v1088
    %v1090 = vrot.slane %v1089, 2
    %v1091 = vadd.f32 %v1089, %v1090
    %v1092 = vrot.slane %v1091, 1
    %v1093 = vadd.f32 %v1091, %v1092
    %v1094 = vrot.slane %v1060, 4
    %v1095 = vadd.f32 %v1060, %v1094
    %v1096 = vrot.slane %v1095, 2
    %v1097 = vadd.f32 %v1095, %v1096
    %v1098 = vrot.slane %v1097, 1
    %v1099 = vadd.f32 %v1097, %v1098
    %v1100 = vrot.slane %v1061, 4
    %v1101 = vadd.f32 %v1061, %v1100
    %v1102 = vrot.slane %v1101, 2
    %v1103 = vadd.f32 %v1101, %v1102
    %v1104 = vrot.slane %v1103, 1
    %v1105 = vadd.f32 %v1103, %v1104
    %v1106 = vrcp.pop 8.0
    %v1107 = vmul.f32 %v1075, %v1106
    %v1108 = vmul.f32 %v1081, %v1106
    %v1109 = vmul.f32 %v1087, %v1106
    %v1110 = vmul.f32 %v1093, %v1106
    %v1111 = vmul.f32 %v1099, %v1106
    %v1112 = vmul.f32 %v1105, %v1106
    %v1113 = vsub.f32 %v1056, %v1107
    %v1114 = vsub.f32 %v1057, %v1108
    %v1115 = vsub.f32 %v1058, %v1109
    %v1116 = vsub.f32 %v1059, %v1110
    %v1117 = vsub.f32 %v1060, %v1111
    %v1118 = vsub.f32 %v1061, %v1112
    %v1119 = vmul.f32 %v1113, %v1113
    %v1120 = vmul.f32 %v1114, %v1114
    %v1121 = vmul.f32 %v1115, %v1115
    %v1122 = vmul.f32 %v1116, %v1116
    %v1123 = vmul.f32 %v1117, %v1117
    %v1124 = vmul.f32 %v1118, %v1118
    %v1125 = vrot.slane %v1119, 4
    %v1126 = vadd.f32 %v1119, %v1125
    %v1127 = vrot.slane %v1126, 2
    %v1128 = vadd.f32 %v1126, %v1127
    %v1129 = vrot.slane %v1128, 1
    %v1130 = vadd.f32 %v1128, %v1129
    %v1131 = vrot.slane %v1120, 4
    %v1132 = vadd.f32 %v1120, %v1131
    %v1133 = vrot.slane %v1132, 2
    %v1134 = vadd.f32 %v1132, %v1133
    %v1135 = vrot.slane %v1134, 1
    %v1136 = vadd.f32 %v1134, %v1135
    %v1137 = vrot.slane %v1121, 4
    %v1138 = vadd.f32 %v1121, %v1137
    %v1139 = vrot.slane %v1138, 2
    %v1140 = vadd.f32 %v1138, %v1139
    %v1141 = vrot.slane %v1140, 1
    %v1142 = vadd.f32 %v1140, %v1141
    %v1143 = vrot.slane %v1122, 4
    %v1144 = vadd.f32 %v1122, %v1143
    %v1145 = vrot.slane %v1144, 2
    %v1146 = vadd.f32 %v1144, %v1145
    %v1147 = vrot.slane %v1146, 1
    %v1148 = vadd.f32 %v1146, %v1147
    %v1149 = vrot.slane %v1123, 4
    %v1150 = vadd.f32 %v1123, %v1149
    %v1151 = vrot.slane %v1150, 2
    %v1152 = vadd.f32 %v1150, %v1151
    %v1153 = vrot.slane %v1152, 1
    %v1154 = vadd.f32 %v1152, %v1153
    %v1155 = vrot.slane %v1124, 4
    %v1156 = vadd.f32 %v1124, %v1155
    %v1157 = vrot.slane %v1156, 2
    %v1158 = vadd.f32 %v1156, %v1157
    %v1159 = vrot.slane %v1158, 1
    %v1160 = vadd.f32 %v1158, %v1159
    %v1161 = vmul.f32 %v1130, %v1106
    %v1162 = vmul.f32 %v1136, %v1106
    %v1163 = vmul.f32 %v1142, %v1106
    %v1164 = vmul.f32 %v1148, %v1106
    %v1165 = vmul.f32 %v1154, %v1106
    %v1166 = vmul.f32 %v1160, %v1106
    %v1167 = vadd.f32 %v1161, 1e-05
    %v1168 = vadd.f32 %v1162, 1e-05
    %v1169 = vadd.f32 %v1163, 1e-05
    %v1170 = vadd.f32 %v1164, 1e-05
    %v1171 = vadd.f32 %v1165, 1e-05
    %v1172 = vadd.f32 %v1166, 1e-05
    %v1173 = vrsqrt.pop %v1167
    %v1174 = vrsqrt.pop %v1168
    %v1175 = vrsqrt.pop %v1169
    %v1176 = vrsqrt.pop %v1170
    %v1177 = vrsqrt.pop %v1171
    %v1178 = vrsqrt.pop %v1172
    %v1185 = vcombine.low %v1173, %v1174
    %v1186 = vcombine.low %v1175, %v1176
    %v1187 = vcombine.low %v1177, %v1178
    %v1189 = vunpack.c.l.s4 1966171168
    %v1190 = vunpack.c.0.s8 %v1189
    %v1191 = vlaneseq
    %v1192 = vshrl.u32 %v1191, 7
    %v1193 = vsub.s32 %v1190, %v1192
    %v1194 = vrot.slane %v1185, %v1193
    %v1196 = vunpack.c.l.s4 1966171168
    %v1197 = vunpack.c.0.s8 %v1196
    %v1198 = vlaneseq
    %v1199 = vshrl.u32 %v1198, 7
    %v1200 = vsub.s32 %v1197, %v1199
    %v1201 = vrot.slane %v1186, %v1200
    %v1203 = vunpack.c.l.s4 1966171168
    %v1204 = vunpack.c.0.s8 %v1203
    %v1205 = vlaneseq
    %v1206 = vshrl.u32 %v1205, 7
    %v1207 = vsub.s32 %v1204, %v1206
    %v1208 = vrot.slane %v1187, %v1207
    %v1209 = vcombine.low %v1194, %v1201
    %v1211 = vunpack.c.l.s4 1966171168
    %v1212 = vunpack.c.0.s8 %v1211
    %v1213 = vlaneseq
    %v1214 = vshrl.u32 %v1213, 7
    %v1215 = vsub.s32 %v1212, %v1214
    %v1216 = vrot.slane %v1209, %v1215
    %v1218 = vunpack.c.l.s4 1966171168
    %v1219 = vunpack.c.0.s8 %v1218
    %v1220 = vlaneseq
    %v1221 = vshrl.u32 %v1220, 7
    %v1222 = vsub.s32 %v1219, %v1221
    %v1223 = vrot.slane %v1208, %v1222
    %v1224 = vcombine.low %v1216, %v1223
    %v1226 = vmul.f32 %v1065, %v1224
    %v1228 = vlaneseq
    %v1229 = vshrl.u32 %v1228, 7
    %v1230 = vsub.s32 0, %v1229
    %v1231 = vrot.slane %v1226, %v1230
    %v1232 = vlaneseq
    %v1233 = vshrl.u32 %v1232, 7
    %v1234 = vsub.s32 1, %v1233
    %v1235 = vrot.slane %v1226, %v1234
    %v1236 = vlaneseq
    %v1237 = vshrl.u32 %v1236, 7
    %v1238 = vsub.s32 2, %v1237
    %v1239 = vrot.slane %v1226, %v1238
    %v1240 = vlaneseq
    %v1241 = vshrl.u32 %v1240, 7
    %v1242 = vsub.s32 3, %v1241
    %v1243 = vrot.slane %v1226, %v1242
    %v1244 = vlaneseq
    %v1245 = vshrl.u32 %v1244, 7
    %v1246 = vsub.s32 4, %v1245
    %v1247 = vrot.slane %v1226, %v1246
    %v1248 = vlaneseq
    %v1249 = vshrl.u32 %v1248, 7
    %v1250 = vsub.s32 5, %v1249
    %v1251 = vrot.slane %v1226, %v1250
    %v1258 = vmul.f32 %v1113, %v1231
    %v1259 = vmul.f32 %v1114, %v1235
    %v1260 = vmul.f32 %v1115, %v1239
    %v1261 = vmul.f32 %v1116, %v1243
    %v1262 = vmul.f32 %v1117, %v1247
    %v1263 = vmul.f32 %v1118, %v1251
    %v1265 = vlaneseq
    %v1266 = vshrl.u32 %v1265, 7
    %v1267 = vsub.s32 0, %v1266
    %v1268 = vrot.slane %v1069, %v1267
    %v1269 = vlaneseq
    %v1270 = vshrl.u32 %v1269, 7
    %v1271 = vsub.s32 1, %v1270
    %v1272 = vrot.slane %v1069, %v1271
    %v1273 = vlaneseq
    %v1274 = vshrl.u32 %v1273, 7
    %v1275 = vsub.s32 2, %v1274
    %v1276 = vrot.slane %v1069, %v1275
    %v1277 = vlaneseq
    %v1278 = vshrl.u32 %v1277, 7
    %v1279 = vsub.s32 3, %v1278
    %v1280 = vrot.slane %v1069, %v1279
    %v1281 = vlaneseq
    %v1282 = vshrl.u32 %v1281, 7
    %v1283 = vsub.s32 4, %v1282
    %v1284 = vrot.slane %v1069, %v1283
    %v1285 = vlaneseq
    %v1286 = vshrl.u32 %v1285, 7
    %v1287 = vsub.s32 5, %v1286
    %v1288 = vrot.slane %v1069, %v1287
    %v1295 = vadd.f32 %v1258, %v1268
    %v1296 = vadd.f32 %v1259, %v1272
    %v1297 = vadd.f32 %v1260, %v1276
    %v1298 = vadd.f32 %v1261, %v1280
    %v1299 = vadd.f32 %v1262, %v1284
    %v1300 = vadd.f32 %v1263, %v1288
    %v1301 = vld [vmem:[#allocation5] sm:$0xff]
    %v1302 = vld [vmem:[#allocation5 + $0x8] sm:$0xff]
    %v1303 = vld [vmem:[#allocation5 + $0x10] sm:$0xff]
    %v1304 = vld [vmem:[#allocation5 + $0x18] sm:$0xff]
    %v1305 = vld [vmem:[#allocation5 + $0x20] sm:$0xff]
    %v1306 = vld [vmem:[#allocation5 + $0x28] sm:$0xff]
    %v1307 = vld [vmem:[#allocation5 + $0x30] sm:$0xff]
    %v1308 = vld [vmem:[#allocation5 + $0x38] sm:$0xff]
    %v1309 = vld [vmem:[#allocation5 + $0x40] sm:$0xff]
    %v1310 = vld [vmem:[#allocation5 + $0x48] sm:$0xff]
    %v1311 = vld [vmem:[#allocation5 + $0x50] sm:$0xff]
    %v1312 = vld [vmem:[#allocation5 + $0x58] sm:$0xff]
    %v1313 = vld [vmem:[#allocation5 + $0x60] sm:$0xff]
    %v1314 = vld [vmem:[#allocation5 + $0x68] sm:$0xff]
    %v1315 = vld [vmem:[#allocation5 + $0x70] sm:$0xff]
    %v1316 = vld [vmem:[#allocation5 + $0x78] sm:$0xff]
    %v1317 = vld [vmem:[#allocation5 + $0x80] sm:$0xff]
    %v1318 = vld [vmem:[#allocation5 + $0x88] sm:$0xff]
    %v1319 = vld [vmem:[#allocation5 + $0x90] sm:$0xff]
    %v1320 = vld [vmem:[#allocation5 + $0x98] sm:$0xff]
    %v1321 = vld [vmem:[#allocation5 + $0xa0] sm:$0xff]
    %v1322 = vld [vmem:[#allocation5 + $0xa8] sm:$0xff]
    %v1323 = vld [vmem:[#allocation5 + $0xb0] sm:$0xff]
    %v1324 = vld [vmem:[#allocation5 + $0xb8] sm:$0xff]
    %v1325 = vld [vmem:[#allocation5 + $0xc0] sm:$0xff]
    %v1326 = vld [vmem:[#allocation5 + $0xc8] sm:$0xff]
    %v1327 = vld [vmem:[#allocation5 + $0xd0] sm:$0xff]
    %v1328 = vld [vmem:[#allocation5 + $0xd8] sm:$0xff]
    %v1329 = vld [vmem:[#allocation5 + $0xe0] sm:$0xff]
    %v1330 = vld [vmem:[#allocation5 + $0xe8] sm:$0xff]
    %v1331 = vld [vmem:[#allocation5 + $0xf0] sm:$0xff]
    %v1332 = vld [vmem:[#allocation5 + $0xf8] sm:$0xff]
    %v1333 = vld [vmem:[#allocation5 + $0x100] sm:$0xff]
    %v1334 = vld [vmem:[#allocation5 + $0x108] sm:$0xff]
    %v1335 = vld [vmem:[#allocation5 + $0x110] sm:$0xff]
    %v1336 = vld [vmem:[#allocation5 + $0x118] sm:$0xff]
    %v1337 = vld [vmem:[#allocation5 + $0x120] sm:$0xff]
    %v1338 = vld [vmem:[#allocation5 + $0x128] sm:$0xff]
    %v1339 = vld [vmem:[#allocation5 + $0x130] sm:$0xff]
    %v1340 = vld [vmem:[#allocation5 + $0x138] sm:$0xff]
    %v1341 = vld [vmem:[#allocation5 + $0x140] sm:$0xff]
    %v1342 = vld [vmem:[#allocation5 + $0x148] sm:$0xff]
    %v1343 = vld [vmem:[#allocation5 + $0x150] sm:$0xff]
    %v1344 = vld [vmem:[#allocation5 + $0x158] sm:$0xff]
    %v1345 = vld [vmem:[#allocation5 + $0x160] sm:$0xff]
    %v1346 = vld [vmem:[#allocation5 + $0x168] sm:$0xff]
    %v1347 = vld [vmem:[#allocation5 + $0x170] sm:$0xff]
    %v1348 = vld [vmem:[#allocation5 + $0x178] sm:$0xff]
    %v1349 = vld [vmem:[#allocation5 + $0x180] sm:$0xff]
    %v1350 = vld [vmem:[#allocation5 + $0x188] sm:$0xff]
    %v1351 = vld [vmem:[#allocation5 + $0x190] sm:$0xff]
    %v1352 = vld [vmem:[#allocation5 + $0x198] sm:$0xff]
    %v1353 = vld [vmem:[#allocation5 + $0x1a0] sm:$0xff]
    %v1354 = vld [vmem:[#allocation5 + $0x1a8] sm:$0xff]
    %v1355 = vld [vmem:[#allocation5 + $0x1b0] sm:$0xff]
    %v1356 = vld [vmem:[#allocation5 + $0x1b8] sm:$0xff]
    %v1357 = vld [vmem:[#allocation5 + $0x1c0] sm:$0xff]
    %v1358 = vld [vmem:[#allocation5 + $0x1c8] sm:$0xff]
    %v1359 = vld [vmem:[#allocation5 + $0x1d0] sm:$0xff]
    %v1360 = vld [vmem:[#allocation5 + $0x1d8] sm:$0xff]
    %v1361 = vld [vmem:[#allocation5 + $0x1e0] sm:$0xff]
    %v1362 = vld [vmem:[#allocation5 + $0x1e8] sm:$0xff]
    %v1363 = vld [vmem:[#allocation5 + $0x1f0] sm:$0xff]
    %v1364 = vld [vmem:[#allocation5 + $0x1f8] sm:$0xff]
    %v1365 = vld [vmem:[#allocation5 + $0x200] sm:$0xff]
    %v1366 = vld [vmem:[#allocation5 + $0x208] sm:$0xff]
    %v1367 = vld [vmem:[#allocation5 + $0x210] sm:$0xff]
    %v1368 = vld [vmem:[#allocation5 + $0x218] sm:$0xff]
    %v1369 = vld [vmem:[#allocation5 + $0x220] sm:$0xff]
    %v1370 = vld [vmem:[#allocation5 + $0x228] sm:$0xff]
    %v1371 = vld [vmem:[#allocation5 + $0x230] sm:$0xff]
    %v1372 = vld [vmem:[#allocation5 + $0x238] sm:$0xff]
    %v1373 = vld [vmem:[#allocation5 + $0x240] sm:$0xff]
    %v1374 = vld [vmem:[#allocation5 + $0x248] sm:$0xff]
    %v1375 = vld [vmem:[#allocation5 + $0x250] sm:$0xff]
    %v1376 = vld [vmem:[#allocation5 + $0x258] sm:$0xff]
    %v1377 = vld [vmem:[#allocation5 + $0x260] sm:$0xff]
    %v1378 = vld [vmem:[#allocation5 + $0x268] sm:$0xff]
    %v1379 = vld [vmem:[#allocation5 + $0x270] sm:$0xff]
    %v1380 = vld [vmem:[#allocation5 + $0x278] sm:$0xff]
    %v1381 = vld [vmem:[#allocation5 + $0x280] sm:$0xff]
    %v1382 = vld [vmem:[#allocation5 + $0x288] sm:$0xff]
    %v1383 = vld [vmem:[#allocation5 + $0x290] sm:$0xff]
    %v1384 = vld [vmem:[#allocation5 + $0x298] sm:$0xff]
    %v1385 = vld [vmem:[#allocation5 + $0x2a0] sm:$0xff]
    %v1386 = vld [vmem:[#allocation5 + $0x2a8] sm:$0xff]
    %v1387 = vld [vmem:[#allocation5 + $0x2b0] sm:$0xff]
    %v1388 = vld [vmem:[#allocation5 + $0x2b8] sm:$0xff]
    %v1389 = vld [vmem:[#allocation5 + $0x2c0] sm:$0xff]
    %v1390 = vld [vmem:[#allocation5 + $0x2c8] sm:$0xff]
    %v1391 = vld [vmem:[#allocation5 + $0x2d0] sm:$0xff]
    %v1392 = vld [vmem:[#allocation5 + $0x2d8] sm:$0xff]
    %v1393 = vld [vmem:[#allocation5 + $0x2e0] sm:$0xff]
    %v1394 = vld [vmem:[#allocation5 + $0x2e8] sm:$0xff]
    %v1395 = vld [vmem:[#allocation5 + $0x2f0] sm:$0xff]
    %v1396 = vld [vmem:[#allocation5 + $0x2f8] sm:$0xff]
    %v1397 = vunpack.c.l.s8.bf16 %v1301
    %v1398 = vunpack.c.l.s8.bf16 %v1302
    %v1399 = vunpack.c.l.s8.bf16 %v1303
    %v1400 = vunpack.c.l.s8.bf16 %v1304
    %v1401 = vunpack.c.h.s8.bf16 %v1301
    %v1402 = vunpack.c.h.s8.bf16 %v1302
    %v1403 = vunpack.c.h.s8.bf16 %v1303
    %v1404 = vunpack.c.h.s8.bf16 %v1304
    %v1405 = vunpack.c.l.s8.bf16 %v1305
    %v1406 = vunpack.c.l.s8.bf16 %v1306
    %v1407 = vunpack.c.l.s8.bf16 %v1307
    %v1408 = vunpack.c.l.s8.bf16 %v1308
    %v1409 = vunpack.c.h.s8.bf16 %v1305
    %v1410 = vunpack.c.h.s8.bf16 %v1306
    %v1411 = vunpack.c.h.s8.bf16 %v1307
    %v1412 = vunpack.c.h.s8.bf16 %v1308
    %v1413 = vunpack.c.l.s8.bf16 %v1309
    %v1414 = vunpack.c.l.s8.bf16 %v1310
    %v1415 = vunpack.c.l.s8.bf16 %v1311
    %v1416 = vunpack.c.l.s8.bf16 %v1312
    %v1417 = vunpack.c.h.s8.bf16 %v1309
    %v1418 = vunpack.c.h.s8.bf16 %v1310
    %v1419 = vunpack.c.h.s8.bf16 %v1311
    %v1420 = vunpack.c.h.s8.bf16 %v1312
    %v1421 = vunpack.c.l.s8.bf16 %v1313
    %v1422 = vunpack.c.l.s8.bf16 %v1314
    %v1423 = vunpack.c.l.s8.bf16 %v1315
    %v1424 = vunpack.c.l.s8.bf16 %v1316
    %v1425 = vunpack.c.h.s8.bf16 %v1313
    %v1426 = vunpack.c.h.s8.bf16 %v1314
    %v1427 = vunpack.c.h.s8.bf16 %v1315
    %v1428 = vunpack.c.h.s8.bf16 %v1316
    %v1429 = vunpack.c.l.s8.bf16 %v1317
    %v1430 = vunpack.c.l.s8.bf16 %v1318
    %v1431 = vunpack.c.l.s8.bf16 %v1319
    %v1432 = vunpack.c.l.s8.bf16 %v1320
    %v1433 = vunpack.c.h.s8.bf16 %v1317
    %v1434 = vunpack.c.h.s8.bf16 %v1318
    %v1435 = vunpack.c.h.s8.bf16 %v1319
    %v1436 = vunpack.c.h.s8.bf16 %v1320
    %v1437 = vunpack.c.l.s8.bf16 %v1321
    %v1438 = vunpack.c.l.s8.bf16 %v1322
    %v1439 = vunpack.c.l.s8.bf16 %v1323
    %v1440 = vunpack.c.l.s8.bf16 %v1324
    %v1441 = vunpack.c.h.s8.bf16 %v1321
    %v1442 = vunpack.c.h.s8.bf16 %v1322
    %v1443 = vunpack.c.h.s8.bf16 %v1323
    %v1444 = vunpack.c.h.s8.bf16 %v1324
    %v1445 = vunpack.c.l.s8.bf16 %v1325
    %v1446 = vunpack.c.l.s8.bf16 %v1326
    %v1447 = vunpack.c.l.s8.bf16 %v1327
    %v1448 = vunpack.c.l.s8.bf16 %v1328
    %v1449 = vunpack.c.h.s8.bf16 %v1325
    %v1450 = vunpack.c.h.s8.bf16 %v1326
    %v1451 = vunpack.c.h.s8.bf16 %v1327
    %v1452 = vunpack.c.h.s8.bf16 %v1328
    %v1453 = vunpack.c.l.s8.bf16 %v1329
    %v1454 = vunpack.c.l.s8.bf16 %v1330
    %v1455 = vunpack.c.l.s8.bf16 %v1331
    %v1456 = vunpack.c.l.s8.bf16 %v1332
    %v1457 = vunpack.c.h.s8.bf16 %v1329
    %v1458 = vunpack.c.h.s8.bf16 %v1330
    %v1459 = vunpack.c.h.s8.bf16 %v1331
    %v1460 = vunpack.c.h.s8.bf16 %v1332
    %v1461 = vunpack.c.l.s8.bf16 %v1333
    %v1462 = vunpack.c.l.s8.bf16 %v1334
    %v1463 = vunpack.c.l.s8.bf16 %v1335
    %v1464 = vunpack.c.l.s8.bf16 %v1336
    %v1465 = vunpack.c.h.s8.bf16 %v1333
    %v1466 = vunpack.c.h.s8.bf16 %v1334
    %v1467 = vunpack.c.h.s8.bf16 %v1335
    %v1468 = vunpack.c.h.s8.bf16 %v1336
    %v1469 = vunpack.c.l.s8.bf16 %v1337
    %v1470 = vunpack.c.l.s8.bf16 %v1338
    %v1471 = vunpack.c.l.s8.bf16 %v1339
    %v1472 = vunpack.c.l.s8.bf16 %v1340
    %v1473 = vunpack.c.h.s8.bf16 %v1337
    %v1474 = vunpack.c.h.s8.bf16 %v1338
    %v1475 = vunpack.c.h.s8.bf16 %v1339
    %v1476 = vunpack.c.h.s8.bf16 %v1340
    %v1477 = vunpack.c.l.s8.bf16 %v1341
    %v1478 = vunpack.c.l.s8.bf16 %v1342
    %v1479 = vunpack.c.l.s8.bf16 %v1343
    %v1480 = vunpack.c.l.s8.bf16 %v1344
    %v1481 = vunpack.c.h.s8.bf16 %v1341
    %v1482 = vunpack.c.h.s8.bf16 %v1342
    %v1483 = vunpack.c.h.s8.bf16 %v1343
    %v1484 = vunpack.c.h.s8.bf16 %v1344
    %v1485 = vunpack.c.l.s8.bf16 %v1345
    %v1486 = vunpack.c.l.s8.bf16 %v1346
    %v1487 = vunpack.c.l.s8.bf16 %v1347
    %v1488 = vunpack.c.l.s8.bf16 %v1348
    %v1489 = vunpack.c.h.s8.bf16 %v1345
    %v1490 = vunpack.c.h.s8.bf16 %v1346
    %v1491 = vunpack.c.h.s8.bf16 %v1347
    %v1492 = vunpack.c.h.s8.bf16 %v1348
    %v1493 = vunpack.c.l.s8.bf16 %v1349
    %v1494 = vunpack.c.l.s8.bf16 %v1350
    %v1495 = vunpack.c.l.s8.bf16 %v1351
    %v1496 = vunpack.c.l.s8.bf16 %v1352
    %v1497 = vunpack.c.h.s8.bf16 %v1349
    %v1498 = vunpack.c.h.s8.bf16 %v1350
    %v1499 = vunpack.c.h.s8.bf16 %v1351
    %v1500 = vunpack.c.h.s8.bf16 %v1352
    %v1501 = vunpack.c.l.s8.bf16 %v1353
    %v1502 = vunpack.c.l.s8.bf16 %v1354
    %v1503 = vunpack.c.l.s8.bf16 %v1355
    %v1504 = vunpack.c.l.s8.bf16 %v1356
    %v1505 = vunpack.c.h.s8.bf16 %v1353
    %v1506 = vunpack.c.h.s8.bf16 %v1354
    %v1507 = vunpack.c.h.s8.bf16 %v1355
    %v1508 = vunpack.c.h.s8.bf16 %v1356
    %v1509 = vunpack.c.l.s8.bf16 %v1357
    %v1510 = vunpack.c.l.s8.bf16 %v1358
    %v1511 = vunpack.c.l.s8.bf16 %v1359
    %v1512 = vunpack.c.l.s8.bf16 %v1360
    %v1513 = vunpack.c.h.s8.bf16 %v1357
    %v1514 = vunpack.c.h.s8.bf16 %v1358
    %v1515 = vunpack.c.h.s8.bf16 %v1359
    %v1516 = vunpack.c.h.s8.bf16 %v1360
    %v1517 = vunpack.c.l.s8.bf16 %v1361
    %v1518 = vunpack.c.l.s8.bf16 %v1362
    %v1519 = vunpack.c.l.s8.bf16 %v1363
    %v1520 = vunpack.c.l.s8.bf16 %v1364
    %v1521 = vunpack.c.h.s8.bf16 %v1361
    %v1522 = vunpack.c.h.s8.bf16 %v1362
    %v1523 = vunpack.c.h.s8.bf16 %v1363
    %v1524 = vunpack.c.h.s8.bf16 %v1364
    %v1525 = vunpack.c.l.s8.bf16 %v1365
    %v1526 = vunpack.c.l.s8.bf16 %v1366
    %v1527 = vunpack.c.l.s8.bf16 %v1367
    %v1528 = vunpack.c.l.s8.bf16 %v1368
    %v1529 = vunpack.c.h.s8.bf16 %v1365
    %v1530 = vunpack.c.h.s8.bf16 %v1366
    %v1531 = vunpack.c.h.s8.bf16 %v1367
    %v1532 = vunpack.c.h.s8.bf16 %v1368
    %v1533 = vunpack.c.l.s8.bf16 %v1369
    %v1534 = vunpack.c.l.s8.bf16 %v1370
    %v1535 = vunpack.c.l.s8.bf16 %v1371
    %v1536 = vunpack.c.l.s8.bf16 %v1372
    %v1537 = vunpack.c.h.s8.bf16 %v1369
    %v1538 = vunpack.c.h.s8.bf16 %v1370
    %v1539 = vunpack.c.h.s8.bf16 %v1371
    %v1540 = vunpack.c.h.s8.bf16 %v1372
    %v1541 = vunpack.c.l.s8.bf16 %v1373
    %v1542 = vunpack.c.l.s8.bf16 %v1374
    %v1543 = vunpack.c.l.s8.bf16 %v1375
    %v1544 = vunpack.c.l.s8.bf16 %v1376
    %v1545 = vunpack.c.h.s8.bf16 %v1373
    %v1546 = vunpack.c.h.s8.bf16 %v1374
    %v1547 = vunpack.c.h.s8.bf16 %v1375
    %v1548 = vunpack.c.h.s8.bf16 %v1376
    %v1549 = vunpack.c.l.s8.bf16 %v1377
    %v1550 = vunpack.c.l.s8.bf16 %v1378
    %v1551 = vunpack.c.l.s8.bf16 %v1379
    %v1552 = vunpack.c.l.s8.bf16 %v1380
    %v1553 = vunpack.c.h.s8.bf16 %v1377
    %v1554 = vunpack.c.h.s8.bf16 %v1378
    %v1555 = vunpack.c.h.s8.bf16 %v1379
    %v1556 = vunpack.c.h.s8.bf16 %v1380
    %v1557 = vunpack.c.l.s8.bf16 %v1381
    %v1558 = vunpack.c.l.s8.bf16 %v1382
    %v1559 = vunpack.c.l.s8.bf16 %v1383
    %v1560 = vunpack.c.l.s8.bf16 %v1384
    %v1561 = vunpack.c.h.s8.bf16 %v1381
    %v1562 = vunpack.c.h.s8.bf16 %v1382
    %v1563 = vunpack.c.h.s8.bf16 %v1383
    %v1564 = vunpack.c.h.s8.bf16 %v1384
    %v1565 = vunpack.c.l.s8.bf16 %v1385
    %v1566 = vunpack.c.l.s8.bf16 %v1386
    %v1567 = vunpack.c.l.s8.bf16 %v1387
    %v1568 = vunpack.c.l.s8.bf16 %v1388
    %v1569 = vunpack.c.h.s8.bf16 %v1385
    %v1570 = vunpack.c.h.s8.bf16 %v1386
    %v1571 = vunpack.c.h.s8.bf16 %v1387
    %v1572 = vunpack.c.h.s8.bf16 %v1388
    %v1573 = vunpack.c.l.s8.bf16 %v1389
    %v1574 = vunpack.c.l.s8.bf16 %v1390
    %v1575 = vunpack.c.l.s8.bf16 %v1391
    %v1576 = vunpack.c.l.s8.bf16 %v1392
    %v1577 = vunpack.c.h.s8.bf16 %v1389
    %v1578 = vunpack.c.h.s8.bf16 %v1390
    %v1579 = vunpack.c.h.s8.bf16 %v1391
    %v1580 = vunpack.c.h.s8.bf16 %v1392
    %v1581 = vunpack.c.l.s8.bf16 %v1393
    %v1582 = vunpack.c.l.s8.bf16 %v1394
    %v1583 = vunpack.c.l.s8.bf16 %v1395
    %v1584 = vunpack.c.l.s8.bf16 %v1396
    %v1585 = vunpack.c.h.s8.bf16 %v1393
    %v1586 = vunpack.c.h.s8.bf16 %v1394
    %v1587 = vunpack.c.h.s8.bf16 %v1395
    %v1588 = vunpack.c.h.s8.bf16 %v1396
    %v1589 = vpack.c.bf16 %v1295, %v1295
    %v1590 = vpack.c.bf16 %v1296, %v1296
    %v1591 = vpack.c.bf16 %v1297, %v1297
    %v1592 = vpack.c.bf16 %v1298, %v1298
    %v1593 = vpack.c.bf16 %v1299, %v1299
    %v1594 = vpack.c.bf16 %v1300, %v1300
    %1595 = vmatprep.subr.bf16.mxu0 %v1426
    %1596 = vmatpush1.bf16.msra.mxu0 %v1425
    %1597 = vmatprep.subr.bf16.mxu0 %v1422
    %1598 = vmatpush1.bf16.msra.mxu0 %v1421
    %1599 = vmatprep.subr.bf16.mxu0 %v1418
    %1600 = vmatpush1.bf16.msra.mxu0 %v1417
    %1601 = vmatprep.subr.bf16.mxu0 %v1414
    %1602 = vmatpush1.bf16.msra.mxu0 %v1413
    %1603 = vmatprep.subr.bf16.mxu0 %v1410
    %1604 = vmatpush1.bf16.msra.mxu0 %v1409
    %1605 = vmatprep.subr.bf16.mxu0 %v1406
    %1606 = vmatpush1.bf16.msra.mxu0 %v1405
    %1607 = vmatprep.subr.bf16.mxu0 %v1402
    %1608 = vmatpush1.bf16.msra.mxu0 %v1401
    %1609 = vmatprep.subr.bf16.mxu0 %v1398
    %1610 = vmatpush1.bf16.msra.mxu0 %v1397
    %1611 = vmatprep.subr.bf16.mxu0 %v1458
    %1612 = vmatpush2.bf16.msra.mxu0 %v1457
    %1613 = vmatprep.subr.bf16.mxu0 %v1454
    %1614 = vmatpush2.bf16.msra.mxu0 %v1453
    %1615 = vmatprep.subr.bf16.mxu0 %v1450
    %1616 = vmatpush2.bf16.msra.mxu0 %v1449
    %1617 = vmatprep.subr.bf16.mxu0 %v1446
    %1618 = vmatpush2.bf16.msra.mxu0 %v1445
    %1619 = vmatprep.subr.bf16.mxu0 %v1442
    %1620 = vmatpush2.bf16.msra.mxu0 %v1441
    %1621 = vmatprep.subr.bf16.mxu0 %v1438
    %1622 = vmatpush2.bf16.msra.mxu0 %v1437
    %1623 = vmatprep.subr.bf16.mxu0 %v1434
    %1624 = vmatpush2.bf16.msra.mxu0 %v1433
    %1625 = vmatprep.subr.bf16.mxu0 %v1430
    %1626 = vmatpush2.bf16.msra.mxu0 %v1429
    %1627 = vmatprep.mubr.bf16.mxu0 %v1590
    %1628 = vmatmul.mubr.bf16.gmra.mxu0 %v1589
    %v1629 = vpop.f32.mrf.mxu0
    %v1630 = vadd.f32 0.0, %v1629
    %v1631 = vpop.f32.mrf.mxu0
    %v1632 = vadd.f32 0.0, %v1631
    %v1633 = vpop.f32.mrf.mxu0
    %v1634 = vpop.f32.mrf.mxu0
    %1635 = vdwg.mxu0
    %1636 = vmatprep.subr.bf16.mxu0 %v1490
    %1637 = vmatpush1.bf16.msra.mxu0 %v1489
    %1638 = vmatprep.subr.bf16.mxu0 %v1486
    %1639 = vmatpush1.bf16.msra.mxu0 %v1485
    %1640 = vmatprep.subr.bf16.mxu0 %v1482
    %1641 = vmatpush1.bf16.msra.mxu0 %v1481
    %1642 = vmatprep.subr.bf16.mxu0 %v1478
    %1643 = vmatpush1.bf16.msra.mxu0 %v1477
    %1644 = vmatprep.subr.bf16.mxu0 %v1474
    %1645 = vmatpush1.bf16.msra.mxu0 %v1473
    %1646 = vmatprep.subr.bf16.mxu0 %v1470
    %1647 = vmatpush1.bf16.msra.mxu0 %v1469
    %1648 = vmatprep.subr.bf16.mxu0 %v1466
    %1649 = vmatpush1.bf16.msra.mxu0 %v1465
    %1650 = vmatprep.subr.bf16.mxu0 %v1462
    %1651 = vmatpush1.bf16.msra.mxu0 %v1461
    %1652 = vmatprep.subr.bf16.mxu0 %v1522
    %1653 = vmatpush2.bf16.msra.mxu0 %v1521
    %1654 = vmatprep.subr.bf16.mxu0 %v1518
    %1655 = vmatpush2.bf16.msra.mxu0 %v1517
    %1656 = vmatprep.subr.bf16.mxu0 %v1514
    %1657 = vmatpush2.bf16.msra.mxu0 %v1513
    %1658 = vmatprep.subr.bf16.mxu0 %v1510
    %1659 = vmatpush2.bf16.msra.mxu0 %v1509
    %1660 = vmatprep.subr.bf16.mxu0 %v1506
    %1661 = vmatpush2.bf16.msra.mxu0 %v1505
    %1662 = vmatprep.subr.bf16.mxu0 %v1502
    %1663 = vmatpush2.bf16.msra.mxu0 %v1501
    %1664 = vmatprep.subr.bf16.mxu0 %v1498
    %1665 = vmatpush2.bf16.msra.mxu0 %v1497
    %1666 = vmatprep.subr.bf16.mxu0 %v1494
    %1667 = vmatpush2.bf16.msra.mxu0 %v1493
    %1668 = vmatprep.mubr.bf16.mxu0 %v1592
    %1669 = vmatmul.mubr.bf16.gmra.mxu0 %v1591
    %v1670 = vpop.f32.mrf.mxu0
    %v1671 = vadd.f32 %v1630, %v1670
    %v1672 = vpop.f32.mrf.mxu0
    %v1673 = vadd.f32 %v1632, %v1672
    %v1674 = vpop.f32.mrf.mxu0
    %v1675 = vpop.f32.mrf.mxu0
    %1676 = vdwg.mxu0
    %1677 = vmatprep.subr.bf16.mxu0 %v1554
    %1678 = vmatpush1.bf16.msra.mxu0 %v1553
    %1679 = vmatprep.subr.bf16.mxu0 %v1550
    %1680 = vmatpush1.bf16.msra.mxu0 %v1549
    %1681 = vmatprep.subr.bf16.mxu0 %v1546
    %1682 = vmatpush1.bf16.msra.mxu0 %v1545
    %1683 = vmatprep.subr.bf16.mxu0 %v1542
    %1684 = vmatpush1.bf16.msra.mxu0 %v1541
    %1685 = vmatprep.subr.bf16.mxu0 %v1538
    %1686 = vmatpush1.bf16.msra.mxu0 %v1537
    %1687 = vmatprep.subr.bf16.mxu0 %v1534
    %1688 = vmatpush1.bf16.msra.mxu0 %v1533
    %1689 = vmatprep.subr.bf16.mxu0 %v1530
    %1690 = vmatpush1.bf16.msra.mxu0 %v1529
    %1691 = vmatprep.subr.bf16.mxu0 %v1526
    %1692 = vmatpush1.bf16.msra.mxu0 %v1525
    %1693 = vmatprep.subr.bf16.mxu0 %v1586
    %1694 = vmatpush2.bf16.msra.mxu0 %v1585
    %1695 = vmatprep.subr.bf16.mxu0 %v1582
    %1696 = vmatpush2.bf16.msra.mxu0 %v1581
    %1697 = vmatprep.subr.bf16.mxu0 %v1578
    %1698 = vmatpush2.bf16.msra.mxu0 %v1577
    %1699 = vmatprep.subr.bf16.mxu0 %v1574
    %1700 = vmatpush2.bf16.msra.mxu0 %v1573
    %1701 = vmatprep.subr.bf16.mxu0 %v1570
    %1702 = vmatpush2.bf16.msra.mxu0 %v1569
    %1703 = vmatprep.subr.bf16.mxu0 %v1566
    %1704 = vmatpush2.bf16.msra.mxu0 %v1565
    %1705 = vmatprep.subr.bf16.mxu0 %v1562
    %1706 = vmatpush2.bf16.msra.mxu0 %v1561
    %1707 = vmatprep.subr.bf16.mxu0 %v1558
    %1708 = vmatpush2.bf16.msra.mxu0 %v1557
    %1709 = vmatprep.mubr.bf16.mxu0 %v1594
    %1710 = vmatmul.mubr.bf16.gmra.mxu0 %v1593
    %v1711 = vpop.f32.mrf.mxu0
    %v1712 = vadd.f32 %v1671, %v1711
    %v1713 = vpop.f32.mrf.mxu0
    %v1714 = vadd.f32 %v1673, %v1713
    %v1715 = vpop.f32.mrf.mxu0
    %v1716 = vpop.f32.mrf.mxu0
    %1717 = vdwg.mxu0
    %1718 = vmatprep.subr.bf16.mxu0 %v1428
    %1719 = vmatpush1.bf16.msra.mxu0 %v1427
    %1720 = vmatprep.subr.bf16.mxu0 %v1424
    %1721 = vmatpush1.bf16.msra.mxu0 %v1423
    %1722 = vmatprep.subr.bf16.mxu0 %v1420
    %1723 = vmatpush1.bf16.msra.mxu0 %v1419
    %1724 = vmatprep.subr.bf16.mxu0 %v1416
    %1725 = vmatpush1.bf16.msra.mxu0 %v1415
    %1726 = vmatprep.subr.bf16.mxu0 %v1412
    %1727 = vmatpush1.bf16.msra.mxu0 %v1411
    %1728 = vmatprep.subr.bf16.mxu0 %v1408
    %1729 = vmatpush1.bf16.msra.mxu0 %v1407
    %1730 = vmatprep.subr.bf16.mxu0 %v1404
    %1731 = vmatpush1.bf16.msra.mxu0 %v1403
    %1732 = vmatprep.subr.bf16.mxu0 %v1400
    %1733 = vmatpush1.bf16.msra.mxu0 %v1399
    %1734 = vmatprep.subr.bf16.mxu0 %v1460
    %1735 = vmatpush2.bf16.msra.mxu0 %v1459
    %1736 = vmatprep.subr.bf16.mxu0 %v1456
    %1737 = vmatpush2.bf16.msra.mxu0 %v1455
    %1738 = vmatprep.subr.bf16.mxu0 %v1452
    %1739 = vmatpush2.bf16.msra.mxu0 %v1451
    %1740 = vmatprep.subr.bf16.mxu0 %v1448
    %1741 = vmatpush2.bf16.msra.mxu0 %v1447
    %1742 = vmatprep.subr.bf16.mxu0 %v1444
    %1743 = vmatpush2.bf16.msra.mxu0 %v1443
    %1744 = vmatprep.subr.bf16.mxu0 %v1440
    %1745 = vmatpush2.bf16.msra.mxu0 %v1439
    %1746 = vmatprep.subr.bf16.mxu0 %v1436
    %1747 = vmatpush2.bf16.msra.mxu0 %v1435
    %1748 = vmatprep.subr.bf16.mxu0 %v1432
    %1749 = vmatpush2.bf16.msra.mxu0 %v1431
    %1750 = vmatprep.mubr.bf16.mxu0 %v1590
    %1751 = vmatmul.mubr.bf16.gmra.mxu0 %v1589
    %v1752 = vpop.f32.mrf.mxu0
    %v1753 = vadd.f32 0.0, %v1752
    %v1754 = vpop.f32.mrf.mxu0
    %v1755 = vadd.f32 0.0, %v1754
    %v1756 = vpop.f32.mrf.mxu0
    %v1757 = vpop.f32.mrf.mxu0
    %1758 = vdwg.mxu0
    %1759 = vmatprep.subr.bf16.mxu0 %v1492
    %1760 = vmatpush1.bf16.msra.mxu0 %v1491
    %1761 = vmatprep.subr.bf16.mxu0 %v1488
    %1762 = vmatpush1.bf16.msra.mxu0 %v1487
    %1763 = vmatprep.subr.bf16.mxu0 %v1484
    %1764 = vmatpush1.bf16.msra.mxu0 %v1483
    %1765 = vmatprep.subr.bf16.mxu0 %v1480
    %1766 = vmatpush1.bf16.msra.mxu0 %v1479
    %1767 = vmatprep.subr.bf16.mxu0 %v1476
    %1768 = vmatpush1.bf16.msra.mxu0 %v1475
    %1769 = vmatprep.subr.bf16.mxu0 %v1472
    %1770 = vmatpush1.bf16.msra.mxu0 %v1471
    %1771 = vmatprep.subr.bf16.mxu0 %v1468
    %1772 = vmatpush1.bf16.msra.mxu0 %v1467
    %1773 = vmatprep.subr.bf16.mxu0 %v1464
    %1774 = vmatpush1.bf16.msra.mxu0 %v1463
    %1775 = vmatprep.subr.bf16.mxu0 %v1524
    %1776 = vmatpush2.bf16.msra.mxu0 %v1523
    %1777 = vmatprep.subr.bf16.mxu0 %v1520
    %1778 = vmatpush2.bf16.msra.mxu0 %v1519
    %1779 = vmatprep.subr.bf16.mxu0 %v1516
    %1780 = vmatpush2.bf16.msra.mxu0 %v1515
    %1781 = vmatprep.subr.bf16.mxu0 %v1512
    %1782 = vmatpush2.bf16.msra.mxu0 %v1511
    %1783 = vmatprep.subr.bf16.mxu0 %v1508
    %1784 = vmatpush2.bf16.msra.mxu0 %v1507
    %1785 = vmatprep.subr.bf16.mxu0 %v1504
    %1786 = vmatpush2.bf16.msra.mxu0 %v1503
    %1787 = vmatprep.subr.bf16.mxu0 %v1500
    %1788 = vmatpush2.bf16.msra.mxu0 %v1499
    %1789 = vmatprep.subr.bf16.mxu0 %v1496
    %1790 = vmatpush2.bf16.msra.mxu0 %v1495
    %1791 = vmatprep.mubr.bf16.mxu0 %v1592
    %1792 = vmatmul.mubr.bf16.gmra.mxu0 %v1591
    %v1793 = vpop.f32.mrf.mxu0
    %v1794 = vadd.f32 %v1753, %v1793
    %v1795 = vpop.f32.mrf.mxu0
    %v1796 = vadd.f32 %v1755, %v1795
    %v1797 = vpop.f32.mrf.mxu0
    %v1798 = vpop.f32.mrf.mxu0
    %1799 = vdwg.mxu0
    %1800 = vmatprep.subr.bf16.mxu0 %v1556
    %1801 = vmatpush1.bf16.msra.mxu0 %v1555
    %1802 = vmatprep.subr.bf16.mxu0 %v1552
    %1803 = vmatpush1.bf16.msra.mxu0 %v1551
    %1804 = vmatprep.subr.bf16.mxu0 %v1548
    %1805 = vmatpush1.bf16.msra.mxu0 %v1547
    %1806 = vmatprep.subr.bf16.mxu0 %v1544
    %1807 = vmatpush1.bf16.msra.mxu0 %v1543
    %1808 = vmatprep.subr.bf16.mxu0 %v1540
    %1809 = vmatpush1.bf16.msra.mxu0 %v1539
    %1810 = vmatprep.subr.bf16.mxu0 %v1536
    %1811 = vmatpush1.bf16.msra.mxu0 %v1535
    %1812 = vmatprep.subr.bf16.mxu0 %v1532
    %1813 = vmatpush1.bf16.msra.mxu0 %v1531
    %1814 = vmatprep.subr.bf16.mxu0 %v1528
    %1815 = vmatpush1.bf16.msra.mxu0 %v1527
    %1816 = vmatprep.subr.bf16.mxu0 %v1588
    %1817 = vmatpush2.bf16.msra.mxu0 %v1587
    %1818 = vmatprep.subr.bf16.mxu0 %v1584
    %1819 = vmatpush2.bf16.msra.mxu0 %v1583
    %1820 = vmatprep.subr.bf16.mxu0 %v1580
    %1821 = vmatpush2.bf16.msra.mxu0 %v1579
    %1822 = vmatprep.subr.bf16.mxu0 %v1576
    %1823 = vmatpush2.bf16.msra.mxu0 %v1575
    %1824 = vmatprep.subr.bf16.mxu0 %v1572
    %1825 = vmatpush2.bf16.msra.mxu0 %v1571
    %1826 = vmatprep.subr.bf16.mxu0 %v1568
    %1827 = vmatpush2.bf16.msra.mxu0 %v1567
    %1828 = vmatprep.subr.bf16.mxu0 %v1564
    %1829 = vmatpush2.bf16.msra.mxu0 %v1563
    %1830 = vmatprep.subr.bf16.mxu0 %v1560
    %1831 = vmatpush2.bf16.msra.mxu0 %v1559
    %1832 = vmatprep.mubr.bf16.mxu0 %v1594
    %1833 = vmatmul.mubr.bf16.gmra.mxu0 %v1593
    %v1834 = vpop.f32.mrf.mxu0
    %v1835 = vadd.f32 %v1794, %v1834
    %v1836 = vpop.f32.mrf.mxu0
    %v1837 = vadd.f32 %v1796, %v1836
    %v1838 = vpop.f32.mrf.mxu0
    %v1839 = vpop.f32.mrf.mxu0
    %1840 = vdwg.mxu0
    %s1841 = scalar_lea.vmem [#allocation11], 54
    %v1842 = vld [vmem:[%s1841] ss:$8 sm:$0xf]
    %s1843 = scalar_lea.vmem [#allocation11], 1
    %v1844 = vld [vmem:[%s1843] ss:$8 sm:$0xf]
    %v1846 = vlaneseq
    %v1847 = vshrl.u32 %v1846, 7
    %v1848 = vsub.s32 0, %v1847
    %v1849 = vrot.slane %v1842, %v1848
    %v1850 = vlaneseq
    %v1851 = vshrl.u32 %v1850, 7
    %v1852 = vsub.s32 1, %v1851
    %v1853 = vrot.slane %v1842, %v1852
    %v1854 = vlaneseq
    %v1855 = vshrl.u32 %v1854, 7
    %v1856 = vsub.s32 2, %v1855
    %v1857 = vrot.slane %v1842, %v1856
    %v1858 = vlaneseq
    %v1859 = vshrl.u32 %v1858, 7
    %v1860 = vsub.s32 3, %v1859
    %v1861 = vrot.slane %v1842, %v1860
    %v1866 = vmul.f32 %v1712, %v1849
    %v1867 = vmul.f32 %v1714, %v1853
    %v1868 = vmul.f32 %v1835, %v1857
    %v1869 = vmul.f32 %v1837, %v1861
    %v1871 = vlaneseq
    %v1872 = vshrl.u32 %v1871, 7
    %v1873 = vsub.s32 0, %v1872
    %v1874 = vrot.slane %v1844, %v1873
    %v1875 = vlaneseq
    %v1876 = vshrl.u32 %v1875, 7
    %v1877 = vsub.s32 1, %v1876
    %v1878 = vrot.slane %v1844, %v1877
    %v1879 = vlaneseq
    %v1880 = vshrl.u32 %v1879, 7
    %v1881 = vsub.s32 2, %v1880
    %v1882 = vrot.slane %v1844, %v1881
    %v1883 = vlaneseq
    %v1884 = vshrl.u32 %v1883, 7
    %v1885 = vsub.s32 3, %v1884
    %v1886 = vrot.slane %v1844, %v1885
    %v1891 = vadd.f32 %v1866, %v1874
    %v1892 = vadd.f32 %v1867, %v1878
    %v1893 = vadd.f32 %v1868, %v1882
    %v1894 = vadd.f32 %v1869, %v1886
    %v1895 = vmax.f32 %v1891, 0.0
    %v1896 = vmax.f32 %v1892, 0.0
    %v1897 = vmax.f32 %v1893, 0.0
    %v1898 = vmax.f32 %v1894, 0.0
    %s1899 = scalar_lea.vmem [#allocation11], 6
    %v1900 = vld [vmem:[%s1899] ss:$8 sm:$0xf]
    %s1901 = scalar_lea.vmem [#allocation11], 50
    %v1902 = vld [vmem:[%s1901] ss:$8 sm:$0xf]
    %v1903 = vrot.slane %v1895, 4
    %v1904 = vadd.f32 %v1895, %v1903
    %v1905 = vrot.slane %v1904, 2
    %v1906 = vadd.f32 %v1904, %v1905
    %v1907 = vrot.slane %v1906, 1
    %v1908 = vadd.f32 %v1906, %v1907
    %v1909 = vrot.slane %v1896, 4
    %v1910 = vadd.f32 %v1896, %v1909
    %v1911 = vrot.slane %v1910, 2
    %v1912 = vadd.f32 %v1910, %v1911
    %v1913 = vrot.slane %v1912, 1
    %v1914 = vadd.f32 %v1912, %v1913
    %v1915 = vrot.slane %v1897, 4
    %v1916 = vadd.f32 %v1897, %v1915
    %v1917 = vrot.slane %v1916, 2
    %v1918 = vadd.f32 %v1916, %v1917
    %v1919 = vrot.slane %v1918, 1
    %v1920 = vadd.f32 %v1918, %v1919
    %v1921 = vrot.slane %v1898, 4
    %v1922 = vadd.f32 %v1898, %v1921
    %v1923 = vrot.slane %v1922, 2
    %v1924 = vadd.f32 %v1922, %v1923
    %v1925 = vrot.slane %v1924, 1
    %v1926 = vadd.f32 %v1924, %v1925
    %v1927 = vmul.f32 %v1908, %v1106
    %v1928 = vmul.f32 %v1914, %v1106
    %v1929 = vmul.f32 %v1920, %v1106
    %v1930 = vmul.f32 %v1926, %v1106
    %v1931 = vsub.f32 %v1895, %v1927
    %v1932 = vsub.f32 %v1896, %v1928
    %v1933 = vsub.f32 %v1897, %v1929
    %v1934 = vsub.f32 %v1898, %v1930
    %v1935 = vmul.f32 %v1931, %v1931
    %v1936 = vmul.f32 %v1932, %v1932
    %v1937 = vmul.f32 %v1933, %v1933
    %v1938 = vmul.f32 %v1934, %v1934
    %v1939 = vrot.slane %v1935, 4
    %v1940 = vadd.f32 %v1935, %v1939
    %v1941 = vrot.slane %v1940, 2
    %v1942 = vadd.f32 %v1940, %v1941
    %v1943 = vrot.slane %v1942, 1
    %v1944 = vadd.f32 %v1942, %v1943
    %v1945 = vrot.slane %v1936, 4
    %v1946 = vadd.f32 %v1936, %v1945
    %v1947 = vrot.slane %v1946, 2
    %v1948 = vadd.f32 %v1946, %v1947
    %v1949 = vrot.slane %v1948, 1
    %v1950 = vadd.f32 %v1948, %v1949
    %v1951 = vrot.slane %v1937, 4
    %v1952 = vadd.f32 %v1937, %v1951
    %v1953 = vrot.slane %v1952, 2
    %v1954 = vadd.f32 %v1952, %v1953
    %v1955 = vrot.slane %v1954, 1
    %v1956 = vadd.f32 %v1954, %v1955
    %v1957 = vrot.slane %v1938, 4
    %v1958 = vadd.f32 %v1938, %v1957
    %v1959 = vrot.slane %v1958, 2
    %v1960 = vadd.f32 %v1958, %v1959
    %v1961 = vrot.slane %v1960, 1
    %v1962 = vadd.f32 %v1960, %v1961
    %v1963 = vmul.f32 %v1944, %v1106
    %v1964 = vmul.f32 %v1950, %v1106
    %v1965 = vmul.f32 %v1956, %v1106
    %v1966 = vmul.f32 %v1962, %v1106
    %v1967 = vadd.f32 %v1963, 1e-05
    %v1968 = vadd.f32 %v1964, 1e-05
    %v1969 = vadd.f32 %v1965, 1e-05
    %v1970 = vadd.f32 %v1966, 1e-05
    %v1971 = vrsqrt.pop %v1967
    %v1972 = vrsqrt.pop %v1968
    %v1973 = vrsqrt.pop %v1969
    %v1974 = vrsqrt.pop %v1970
    %v1979 = vcombine.low %v1971, %v1972
    %v1980 = vcombine.low %v1973, %v1974
    %v1982 = vunpack.c.l.s4 1966171168
    %v1983 = vunpack.c.0.s8 %v1982
    %v1984 = vlaneseq
    %v1985 = vshrl.u32 %v1984, 7
    %v1986 = vsub.s32 %v1983, %v1985
    %v1987 = vrot.slane %v1979, %v1986
    %v1989 = vunpack.c.l.s4 1966171168
    %v1990 = vunpack.c.0.s8 %v1989
    %v1991 = vlaneseq
    %v1992 = vshrl.u32 %v1991, 7
    %v1993 = vsub.s32 %v1990, %v1992
    %v1994 = vrot.slane %v1980, %v1993
    %v1995 = vcombine.low %v1987, %v1994
    %v1997 = vunpack.c.l.s4 1966171168
    %v1998 = vunpack.c.0.s8 %v1997
    %v1999 = vlaneseq
    %v2000 = vshrl.u32 %v1999, 7
    %v2001 = vsub.s32 %v1998, %v2000
    %v2002 = vrot.slane %v1995, %v2001
    %v2004 = vmul.f32 %v1900, %v2002
    %v2006 = vlaneseq
    %v2007 = vshrl.u32 %v2006, 7
    %v2008 = vsub.s32 0, %v2007
    %v2009 = vrot.slane %v2004, %v2008
    %v2010 = vlaneseq
    %v2011 = vshrl.u32 %v2010, 7
    %v2012 = vsub.s32 1, %v2011
    %v2013 = vrot.slane %v2004, %v2012
    %v2014 = vlaneseq
    %v2015 = vshrl.u32 %v2014, 7
    %v2016 = vsub.s32 2, %v2015
    %v2017 = vrot.slane %v2004, %v2016
    %v2018 = vlaneseq
    %v2019 = vshrl.u32 %v2018, 7
    %v2020 = vsub.s32 3, %v2019
    %v2021 = vrot.slane %v2004, %v2020
    %v2026 = vmul.f32 %v1931, %v2009
    %v2027 = vmul.f32 %v1932, %v2013
    %v2028 = vmul.f32 %v1933, %v2017
    %v2029 = vmul.f32 %v1934, %v2021
    %v2031 = vlaneseq
    %v2032 = vshrl.u32 %v2031, 7
    %v2033 = vsub.s32 0, %v2032
    %v2034 = vrot.slane %v1902, %v2033
    %v2035 = vlaneseq
    %v2036 = vshrl.u32 %v2035, 7
    %v2037 = vsub.s32 1, %v2036
    %v2038 = vrot.slane %v1902, %v2037
    %v2039 = vlaneseq
    %v2040 = vshrl.u32 %v2039, 7
    %v2041 = vsub.s32 2, %v2040
    %v2042 = vrot.slane %v1902, %v2041
    %v2043 = vlaneseq
    %v2044 = vshrl.u32 %v2043, 7
    %v2045 = vsub.s32 3, %v2044
    %v2046 = vrot.slane %v1902, %v2045
    %v2051 = vadd.f32 %v2026, %v2034
    %v2052 = vadd.f32 %v2027, %v2038
    %v2053 = vadd.f32 %v2028, %v2042
    %v2054 = vadd.f32 %v2029, %v2046
    %v2055 = vld [vmem:[#allocation7] sm:$0xff]
    %v2056 = vld [vmem:[#allocation7 + $0x8] sm:$0xff]
    %v2057 = vld [vmem:[#allocation7 + $0x10] sm:$0xff]
    %v2058 = vld [vmem:[#allocation7 + $0x18] sm:$0xff]
    %v2059 = vld [vmem:[#allocation7 + $0x20] sm:$0xff]
    %v2060 = vld [vmem:[#allocation7 + $0x28] sm:$0xff]
    %v2061 = vld [vmem:[#allocation7 + $0x30] sm:$0xff]
    %v2062 = vld [vmem:[#allocation7 + $0x38] sm:$0xff]
    %v2063 = vld [vmem:[#allocation7 + $0x40] sm:$0xff]
    %v2064 = vld [vmem:[#allocation7 + $0x48] sm:$0xff]
    %v2065 = vld [vmem:[#allocation7 + $0x50] sm:$0xff]
    %v2066 = vld [vmem:[#allocation7 + $0x58] sm:$0xff]
    %v2067 = vld [vmem:[#allocation7 + $0x60] sm:$0xff]
    %v2068 = vld [vmem:[#allocation7 + $0x68] sm:$0xff]
    %v2069 = vld [vmem:[#allocation7 + $0x70] sm:$0xff]
    %v2070 = vld [vmem:[#allocation7 + $0x78] sm:$0xff]
    %v2071 = vld [vmem:[#allocation7 + $0x80] sm:$0xff]
    %v2072 = vld [vmem:[#allocation7 + $0x88] sm:$0xff]
    %v2073 = vld [vmem:[#allocation7 + $0x90] sm:$0xff]
    %v2074 = vld [vmem:[#allocation7 + $0x98] sm:$0xff]
    %v2075 = vld [vmem:[#allocation7 + $0xa0] sm:$0xff]
    %v2076 = vld [vmem:[#allocation7 + $0xa8] sm:$0xff]
    %v2077 = vld [vmem:[#allocation7 + $0xb0] sm:$0xff]
    %v2078 = vld [vmem:[#allocation7 + $0xb8] sm:$0xff]
    %v2079 = vld [vmem:[#allocation7 + $0xc0] sm:$0xff]
    %v2080 = vld [vmem:[#allocation7 + $0xc8] sm:$0xff]
    %v2081 = vld [vmem:[#allocation7 + $0xd0] sm:$0xff]
    %v2082 = vld [vmem:[#allocation7 + $0xd8] sm:$0xff]
    %v2083 = vld [vmem:[#allocation7 + $0xe0] sm:$0xff]
    %v2084 = vld [vmem:[#allocation7 + $0xe8] sm:$0xff]
    %v2085 = vld [vmem:[#allocation7 + $0xf0] sm:$0xff]
    %v2086 = vld [vmem:[#allocation7 + $0xf8] sm:$0xff]
    %v2087 = vld [vmem:[#allocation7 + $0x100] sm:$0xff]
    %v2088 = vld [vmem:[#allocation7 + $0x108] sm:$0xff]
    %v2089 = vld [vmem:[#allocation7 + $0x110] sm:$0xff]
    %v2090 = vld [vmem:[#allocation7 + $0x118] sm:$0xff]
    %v2091 = vld [vmem:[#allocation7 + $0x120] sm:$0xff]
    %v2092 = vld [vmem:[#allocation7 + $0x128] sm:$0xff]
    %v2093 = vld [vmem:[#allocation7 + $0x130] sm:$0xff]
    %v2094 = vld [vmem:[#allocation7 + $0x138] sm:$0xff]
    %v2095 = vld [vmem:[#allocation7 + $0x140] sm:$0xff]
    %v2096 = vld [vmem:[#allocation7 + $0x148] sm:$0xff]
    %v2097 = vld [vmem:[#allocation7 + $0x150] sm:$0xff]
    %v2098 = vld [vmem:[#allocation7 + $0x158] sm:$0xff]
    %v2099 = vld [vmem:[#allocation7 + $0x160] sm:$0xff]
    %v2100 = vld [vmem:[#allocation7 + $0x168] sm:$0xff]
    %v2101 = vld [vmem:[#allocation7 + $0x170] sm:$0xff]
    %v2102 = vld [vmem:[#allocation7 + $0x178] sm:$0xff]
    %v2103 = vunpack.c.l.s8.bf16 %v2055
    %v2104 = vunpack.c.l.s8.bf16 %v2056
    %v2105 = vunpack.c.l.s8.bf16 %v2057
    %v2106 = vunpack.c.h.s8.bf16 %v2055
    %v2107 = vunpack.c.h.s8.bf16 %v2056
    %v2108 = vunpack.c.h.s8.bf16 %v2057
    %v2109 = vunpack.c.l.s8.bf16 %v2058
    %v2110 = vunpack.c.l.s8.bf16 %v2059
    %v2111 = vunpack.c.l.s8.bf16 %v2060
    %v2112 = vunpack.c.h.s8.bf16 %v2058
    %v2113 = vunpack.c.h.s8.bf16 %v2059
    %v2114 = vunpack.c.h.s8.bf16 %v2060
    %v2115 = vunpack.c.l.s8.bf16 %v2061
    %v2116 = vunpack.c.l.s8.bf16 %v2062
    %v2117 = vunpack.c.l.s8.bf16 %v2063
    %v2118 = vunpack.c.h.s8.bf16 %v2061
    %v2119 = vunpack.c.h.s8.bf16 %v2062
    %v2120 = vunpack.c.h.s8.bf16 %v2063
    %v2121 = vunpack.c.l.s8.bf16 %v2064
    %v2122 = vunpack.c.l.s8.bf16 %v2065
    %v2123 = vunpack.c.l.s8.bf16 %v2066
    %v2124 = vunpack.c.h.s8.bf16 %v2064
    %v2125 = vunpack.c.h.s8.bf16 %v2065
    %v2126 = vunpack.c.h.s8.bf16 %v2066
    %v2127 = vunpack.c.l.s8.bf16 %v2067
    %v2128 = vunpack.c.l.s8.bf16 %v2068
    %v2129 = vunpack.c.l.s8.bf16 %v2069
    %v2130 = vunpack.c.h.s8.bf16 %v2067
    %v2131 = vunpack.c.h.s8.bf16 %v2068
    %v2132 = vunpack.c.h.s8.bf16 %v2069
    %v2133 = vunpack.c.l.s8.bf16 %v2070
    %v2134 = vunpack.c.l.s8.bf16 %v2071
    %v2135 = vunpack.c.l.s8.bf16 %v2072
    %v2136 = vunpack.c.h.s8.bf16 %v2070
    %v2137 = vunpack.c.h.s8.bf16 %v2071
    %v2138 = vunpack.c.h.s8.bf16 %v2072
    %v2139 = vunpack.c.l.s8.bf16 %v2073
    %v2140 = vunpack.c.l.s8.bf16 %v2074
    %v2141 = vunpack.c.l.s8.bf16 %v2075
    %v2142 = vunpack.c.h.s8.bf16 %v2073
    %v2143 = vunpack.c.h.s8.bf16 %v2074
    %v2144 = vunpack.c.h.s8.bf16 %v2075
    %v2145 = vunpack.c.l.s8.bf16 %v2076
    %v2146 = vunpack.c.l.s8.bf16 %v2077
    %v2147 = vunpack.c.l.s8.bf16 %v2078
    %v2148 = vunpack.c.h.s8.bf16 %v2076
    %v2149 = vunpack.c.h.s8.bf16 %v2077
    %v2150 = vunpack.c.h.s8.bf16 %v2078
    %v2151 = vunpack.c.l.s8.bf16 %v2079
    %v2152 = vunpack.c.l.s8.bf16 %v2080
    %v2153 = vunpack.c.l.s8.bf16 %v2081
    %v2154 = vunpack.c.h.s8.bf16 %v2079
    %v2155 = vunpack.c.h.s8.bf16 %v2080
    %v2156 = vunpack.c.h.s8.bf16 %v2081
    %v2157 = vunpack.c.l.s8.bf16 %v2082
    %v2158 = vunpack.c.l.s8.bf16 %v2083
    %v2159 = vunpack.c.l.s8.bf16 %v2084
    %v2160 = vunpack.c.h.s8.bf16 %v2082
    %v2161 = vunpack.c.h.s8.bf16 %v2083
    %v2162 = vunpack.c.h.s8.bf16 %v2084
    %v2163 = vunpack.c.l.s8.bf16 %v2085
    %v2164 = vunpack.c.l.s8.bf16 %v2086
    %v2165 = vunpack.c.l.s8.bf16 %v2087
    %v2166 = vunpack.c.h.s8.bf16 %v2085
    %v2167 = vunpack.c.h.s8.bf16 %v2086
    %v2168 = vunpack.c.h.s8.bf16 %v2087
    %v2169 = vunpack.c.l.s8.bf16 %v2088
    %v2170 = vunpack.c.l.s8.bf16 %v2089
    %v2171 = vunpack.c.l.s8.bf16 %v2090
    %v2172 = vunpack.c.h.s8.bf16 %v2088
    %v2173 = vunpack.c.h.s8.bf16 %v2089
    %v2174 = vunpack.c.h.s8.bf16 %v2090
    %v2175 = vunpack.c.l.s8.bf16 %v2091
    %v2176 = vunpack.c.l.s8.bf16 %v2092
    %v2177 = vunpack.c.l.s8.bf16 %v2093
    %v2178 = vunpack.c.h.s8.bf16 %v2091
    %v2179 = vunpack.c.h.s8.bf16 %v2092
    %v2180 = vunpack.c.h.s8.bf16 %v2093
    %v2181 = vunpack.c.l.s8.bf16 %v2094
    %v2182 = vunpack.c.l.s8.bf16 %v2095
    %v2183 = vunpack.c.l.s8.bf16 %v2096
    %v2184 = vunpack.c.h.s8.bf16 %v2094
    %v2185 = vunpack.c.h.s8.bf16 %v2095
    %v2186 = vunpack.c.h.s8.bf16 %v2096
    %v2187 = vunpack.c.l.s8.bf16 %v2097
    %v2188 = vunpack.c.l.s8.bf16 %v2098
    %v2189 = vunpack.c.l.s8.bf16 %v2099
    %v2190 = vunpack.c.h.s8.bf16 %v2097
    %v2191 = vunpack.c.h.s8.bf16 %v2098
    %v2192 = vunpack.c.h.s8.bf16 %v2099
    %v2193 = vunpack.c.l.s8.bf16 %v2100
    %v2194 = vunpack.c.l.s8.bf16 %v2101
    %v2195 = vunpack.c.l.s8.bf16 %v2102
    %v2196 = vunpack.c.h.s8.bf16 %v2100
    %v2197 = vunpack.c.h.s8.bf16 %v2101
    %v2198 = vunpack.c.h.s8.bf16 %v2102
    %v2199 = vpack.c.bf16 %v2051, %v2051
    %v2200 = vpack.c.bf16 %v2052, %v2052
    %v2201 = vpack.c.bf16 %v2053, %v2053
    %v2202 = vpack.c.bf16 %v2054, %v2054
    %2203 = vmatprep.subr.bf16.mxu0 %v2125
    %2204 = vmatpush1.bf16.msra.mxu0 %v2124
    %2205 = vmatprep.subr.bf16.mxu0 %v2122
    %2206 = vmatpush1.bf16.msra.mxu0 %v2121
    %2207 = vmatprep.subr.bf16.mxu0 %v2119
    %2208 = vmatpush1.bf16.msra.mxu0 %v2118
    %2209 = vmatprep.subr.bf16.mxu0 %v2116
    %2210 = vmatpush1.bf16.msra.mxu0 %v2115
    %2211 = vmatprep.subr.bf16.mxu0 %v2113
    %2212 = vmatpush1.bf16.msra.mxu0 %v2112
    %2213 = vmatprep.subr.bf16.mxu0 %v2110
    %2214 = vmatpush1.bf16.msra.mxu0 %v2109
    %2215 = vmatprep.subr.bf16.mxu0 %v2107
    %2216 = vmatpush1.bf16.msra.mxu0 %v2106
    %2217 = vmatprep.subr.bf16.mxu0 %v2104
    %2218 = vmatpush1.bf16.msra.mxu0 %v2103
    %2219 = vmatprep.subr.bf16.mxu0 %v2149
    %2220 = vmatpush2.bf16.msra.mxu0 %v2148
    %2221 = vmatprep.subr.bf16.mxu0 %v2146
    %2222 = vmatpush2.bf16.msra.mxu0 %v2145
    %2223 = vmatprep.subr.bf16.mxu0 %v2143
    %2224 = vmatpush2.bf16.msra.mxu0 %v2142
    %2225 = vmatprep.subr.bf16.mxu0 %v2140
    %2226 = vmatpush2.bf16.msra.mxu0 %v2139
    %2227 = vmatprep.subr.bf16.mxu0 %v2137
    %2228 = vmatpush2.bf16.msra.mxu0 %v2136
    %2229 = vmatprep.subr.bf16.mxu0 %v2134
    %2230 = vmatpush2.bf16.msra.mxu0 %v2133
    %2231 = vmatprep.subr.bf16.mxu0 %v2131
    %2232 = vmatpush2.bf16.msra.mxu0 %v2130
    %2233 = vmatprep.subr.bf16.mxu0 %v2128
    %2234 = vmatpush2.bf16.msra.mxu0 %v2127
    %2235 = vmatprep.mubr.bf16.mxu0 %v2200
    %2236 = vmatmul.mubr.bf16.gmra.mxu0 %v2199
    %v2237 = vpop.f32.mrf.mxu0
    %v2238 = vadd.f32 0.0, %v2237
    %v2239 = vpop.f32.mrf.mxu0
    %v2240 = vadd.f32 0.0, %v2239
    %v2241 = vpop.f32.mrf.mxu0
    %v2242 = vpop.f32.mrf.mxu0
    %2243 = vdwg.mxu0
    %2244 = vmatprep.subr.bf16.mxu0 %v2173
    %2245 = vmatpush1.bf16.msra.mxu0 %v2172
    %2246 = vmatprep.subr.bf16.mxu0 %v2170
    %2247 = vmatpush1.bf16.msra.mxu0 %v2169
    %2248 = vmatprep.subr.bf16.mxu0 %v2167
    %2249 = vmatpush1.bf16.msra.mxu0 %v2166
    %2250 = vmatprep.subr.bf16.mxu0 %v2164
    %2251 = vmatpush1.bf16.msra.mxu0 %v2163
    %2252 = vmatprep.subr.bf16.mxu0 %v2161
    %2253 = vmatpush1.bf16.msra.mxu0 %v2160
    %2254 = vmatprep.subr.bf16.mxu0 %v2158
    %2255 = vmatpush1.bf16.msra.mxu0 %v2157
    %2256 = vmatprep.subr.bf16.mxu0 %v2155
    %2257 = vmatpush1.bf16.msra.mxu0 %v2154
    %2258 = vmatprep.subr.bf16.mxu0 %v2152
    %2259 = vmatpush1.bf16.msra.mxu0 %v2151
    %2260 = vmatprep.subr.bf16.mxu0 %v2197
    %2261 = vmatpush2.bf16.msra.mxu0 %v2196
    %2262 = vmatprep.subr.bf16.mxu0 %v2194
    %2263 = vmatpush2.bf16.msra.mxu0 %v2193
    %2264 = vmatprep.subr.bf16.mxu0 %v2191
    %2265 = vmatpush2.bf16.msra.mxu0 %v2190
    %2266 = vmatprep.subr.bf16.mxu0 %v2188
    %2267 = vmatpush2.bf16.msra.mxu0 %v2187
    %2268 = vmatprep.subr.bf16.mxu0 %v2185
    %2269 = vmatpush2.bf16.msra.mxu0 %v2184
    %2270 = vmatprep.subr.bf16.mxu0 %v2182
    %2271 = vmatpush2.bf16.msra.mxu0 %v2181
    %2272 = vmatprep.subr.bf16.mxu0 %v2179
    %2273 = vmatpush2.bf16.msra.mxu0 %v2178
    %2274 = vmatprep.subr.bf16.mxu0 %v2176
    %2275 = vmatpush2.bf16.msra.mxu0 %v2175
    %2276 = vmatprep.mubr.bf16.mxu0 %v2202
    %2277 = vmatmul.mubr.bf16.gmra.mxu0 %v2201
    %v2278 = vpop.f32.mrf.mxu0
    %v2279 = vadd.f32 %v2238, %v2278
    %v2280 = vpop.f32.mrf.mxu0
    %v2281 = vadd.f32 %v2240, %v2280
    %v2282 = vpop.f32.mrf.mxu0
    %v2283 = vpop.f32.mrf.mxu0
    %2284 = vdwg.mxu0
    %2285 = vmatprep.subr.bf16.mxu0 0
    %2286 = vmatpush1.bf16.msra.mxu0 %v2126
    %2287 = vmatprep.subr.bf16.mxu0 0
    %2288 = vmatpush1.bf16.msra.mxu0 %v2123
    %2289 = vmatprep.subr.bf16.mxu0 0
    %2290 = vmatpush1.bf16.msra.mxu0 %v2120
    %2291 = vmatprep.subr.bf16.mxu0 0
    %2292 = vmatpush1.bf16.msra.mxu0 %v2117
    %2293 = vmatprep.subr.bf16.mxu0 0
    %2294 = vmatpush1.bf16.msra.mxu0 %v2114
    %2295 = vmatprep.subr.bf16.mxu0 0
    %2296 = vmatpush1.bf16.msra.mxu0 %v2111
    %2297 = vmatprep.subr.bf16.mxu0 0
    %2298 = vmatpush1.bf16.msra.mxu0 %v2108
    %2299 = vmatprep.subr.bf16.mxu0 0
    %2300 = vmatpush1.bf16.msra.mxu0 %v2105
    %2301 = vmatprep.subr.bf16.mxu0 0
    %2302 = vmatpush2.bf16.msra.mxu0 %v2150
    %2303 = vmatprep.subr.bf16.mxu0 0
    %2304 = vmatpush2.bf16.msra.mxu0 %v2147
    %2305 = vmatprep.subr.bf16.mxu0 0
    %2306 = vmatpush2.bf16.msra.mxu0 %v2144
    %2307 = vmatprep.subr.bf16.mxu0 0
    %2308 = vmatpush2.bf16.msra.mxu0 %v2141
    %2309 = vmatprep.subr.bf16.mxu0 0
    %2310 = vmatpush2.bf16.msra.mxu0 %v2138
    %2311 = vmatprep.subr.bf16.mxu0 0
    %2312 = vmatpush2.bf16.msra.mxu0 %v2135
    %2313 = vmatprep.subr.bf16.mxu0 0
    %2314 = vmatpush2.bf16.msra.mxu0 %v2132
    %2315 = vmatprep.subr.bf16.mxu0 0
    %2316 = vmatpush2.bf16.msra.mxu0 %v2129
    %2317 = vmatprep.mubr.bf16.mxu0 %v2200
    %2318 = vmatmul.mubr.bf16.gmra.mxu0 %v2199
    %v2319 = vpop.f32.mrf.mxu0
    %v2320 = vadd.f32 0.0, %v2319
    %v2321 = vpop.f32.mrf.mxu0
    %v2322 = vpop.f32.mrf.mxu0
    %v2323 = vpop.f32.mrf.mxu0
    %2324 = vdwg.mxu0
    %2325 = vmatprep.subr.bf16.mxu0 0
    %2326 = vmatpush1.bf16.msra.mxu0 %v2174
    %2327 = vmatprep.subr.bf16.mxu0 0
    %2328 = vmatpush1.bf16.msra.mxu0 %v2171
    %2329 = vmatprep.subr.bf16.mxu0 0
    %2330 = vmatpush1.bf16.msra.mxu0 %v2168
    %2331 = vmatprep.subr.bf16.mxu0 0
    %2332 = vmatpush1.bf16.msra.mxu0 %v2165
    %2333 = vmatprep.subr.bf16.mxu0 0
    %2334 = vmatpush1.bf16.msra.mxu0 %v2162
    %2335 = vmatprep.subr.bf16.mxu0 0
    %2336 = vmatpush1.bf16.msra.mxu0 %v2159
    %2337 = vmatprep.subr.bf16.mxu0 0
    %2338 = vmatpush1.bf16.msra.mxu0 %v2156
    %2339 = vmatprep.subr.bf16.mxu0 0
    %2340 = vmatpush1.bf16.msra.mxu0 %v2153
    %2341 = vmatprep.subr.bf16.mxu0 0
    %2342 = vmatpush2.bf16.msra.mxu0 %v2198
    %2343 = vmatprep.subr.bf16.mxu0 0
    %2344 = vmatpush2.bf16.msra.mxu0 %v2195
    %2345 = vmatprep.subr.bf16.mxu0 0
    %2346 = vmatpush2.bf16.msra.mxu0 %v2192
    %2347 = vmatprep.subr.bf16.mxu0 0
    %2348 = vmatpush2.bf16.msra.mxu0 %v2189
    %2349 = vmatprep.subr.bf16.mxu0 0
    %2350 = vmatpush2.bf16.msra.mxu0 %v2186
    %2351 = vmatprep.subr.bf16.mxu0 0
    %2352 = vmatpush2.bf16.msra.mxu0 %v2183
    %2353 = vmatprep.subr.bf16.mxu0 0
    %2354 = vmatpush2.bf16.msra.mxu0 %v2180
    %2355 = vmatprep.subr.bf16.mxu0 0
    %2356 = vmatpush2.bf16.msra.mxu0 %v2177
    %2357 = vmatprep.mubr.bf16.mxu0 %v2202
    %2358 = vmatmul.mubr.bf16.gmra.mxu0 %v2201
    %v2359 = vpop.f32.mrf.mxu0
    %v2360 = vadd.f32 %v2320, %v2359
    %v2361 = vpop.f32.mrf.mxu0
    %v2362 = vpop.f32.mrf.mxu0
    %v2363 = vpop.f32.mrf.mxu0
    %2364 = vdwg.mxu0
    %s2365 = scalar_lea.vmem [#allocation11], 55
    %v2366 = vld [vmem:[%s2365] ss:$8 sm:$0x7]
    %s2367 = scalar_lea.vmem [#allocation11], 2
    %v2368 = vld [vmem:[%s2367] ss:$8 sm:$0x7]
    %v2370 = vlaneseq
    %v2371 = vshrl.u32 %v2370, 7
    %v2372 = vsub.s32 0, %v2371
    %v2373 = vrot.slane %v2366, %v2372
    %v2374 = vlaneseq
    %v2375 = vshrl.u32 %v2374, 7
    %v2376 = vsub.s32 1, %v2375
    %v2377 = vrot.slane %v2366, %v2376
    %v2378 = vlaneseq
    %v2379 = vshrl.u32 %v2378, 7
    %v2380 = vsub.s32 2, %v2379
    %v2381 = vrot.slane %v2366, %v2380
    %v2385 = vmul.f32 %v2279, %v2373
    %v2386 = vmul.f32 %v2281, %v2377
    %v2387 = vmul.f32 %v2360, %v2381
    %v2389 = vlaneseq
    %v2390 = vshrl.u32 %v2389, 7
    %v2391 = vsub.s32 0, %v2390
    %v2392 = vrot.slane %v2368, %v2391
    %v2393 = vlaneseq
    %v2394 = vshrl.u32 %v2393, 7
    %v2395 = vsub.s32 1, %v2394
    %v2396 = vrot.slane %v2368, %v2395
    %v2397 = vlaneseq
    %v2398 = vshrl.u32 %v2397, 7
    %v2399 = vsub.s32 2, %v2398
    %v2400 = vrot.slane %v2368, %v2399
    %v2404 = vadd.f32 %v2385, %v2392
    %v2405 = vadd.f32 %v2386, %v2396
    %v2406 = vadd.f32 %v2387, %v2400
    %v2407 = vmax.f32 %v2404, 0.0
    %v2408 = vmax.f32 %v2405, 0.0
    %v2409 = vmax.f32 %v2406, 0.0
    %s2410 = scalar_lea.vmem [#allocation11], 7
    %v2411 = vld [vmem:[%s2410] ss:$8 sm:$0x7]
    %s2412 = scalar_lea.vmem [#allocation11], 51
    %v2413 = vld [vmem:[%s2412] ss:$8 sm:$0x7]
    %v2414 = vrot.slane %v2407, 4
    %v2415 = vadd.f32 %v2407, %v2414
    %v2416 = vrot.slane %v2415, 2
    %v2417 = vadd.f32 %v2415, %v2416
    %v2418 = vrot.slane %v2417, 1
    %v2419 = vadd.f32 %v2417, %v2418
    %v2420 = vrot.slane %v2408, 4
    %v2421 = vadd.f32 %v2408, %v2420
    %v2422 = vrot.slane %v2421, 2
    %v2423 = vadd.f32 %v2421, %v2422
    %v2424 = vrot.slane %v2423, 1
    %v2425 = vadd.f32 %v2423, %v2424
    %v2426 = vrot.slane %v2409, 4
    %v2427 = vadd.f32 %v2409, %v2426
    %v2428 = vrot.slane %v2427, 2
    %v2429 = vadd.f32 %v2427, %v2428
    %v2430 = vrot.slane %v2429, 1
    %v2431 = vadd.f32 %v2429, %v2430
    %v2432 = vmul.f32 %v2419, %v1106
    %v2433 = vmul.f32 %v2425, %v1106
    %v2434 = vmul.f32 %v2431, %v1106
    %v2435 = vsub.f32 %v2407, %v2432
    %v2436 = vsub.f32 %v2408, %v2433
    %v2437 = vsub.f32 %v2409, %v2434
    %v2438 = vmul.f32 %v2435, %v2435
    %v2439 = vmul.f32 %v2436, %v2436
    %v2440 = vmul.f32 %v2437, %v2437
    %v2441 = vrot.slane %v2438, 4
    %v2442 = vadd.f32 %v2438, %v2441
    %v2443 = vrot.slane %v2442, 2
    %v2444 = vadd.f32 %v2442, %v2443
    %v2445 = vrot.slane %v2444, 1
    %v2446 = vadd.f32 %v2444, %v2445
    %v2447 = vrot.slane %v2439, 4
    %v2448 = vadd.f32 %v2439, %v2447
    %v2449 = vrot.slane %v2448, 2
    %v2450 = vadd.f32 %v2448, %v2449
    %v2451 = vrot.slane %v2450, 1
    %v2452 = vadd.f32 %v2450, %v2451
    %v2453 = vrot.slane %v2440, 4
    %v2454 = vadd.f32 %v2440, %v2453
    %v2455 = vrot.slane %v2454, 2
    %v2456 = vadd.f32 %v2454, %v2455
    %v2457 = vrot.slane %v2456, 1
    %v2458 = vadd.f32 %v2456, %v2457
    %v2459 = vmul.f32 %v2446, %v1106
    %v2460 = vmul.f32 %v2452, %v1106
    %v2461 = vmul.f32 %v2458, %v1106
    %v2462 = vadd.f32 %v2459, 1e-05
    %v2463 = vadd.f32 %v2460, 1e-05
    %v2464 = vadd.f32 %v2461, 1e-05
    %v2465 = vrsqrt.pop %v2462
    %v2466 = vrsqrt.pop %v2463
    %v2467 = vrsqrt.pop %v2464
    %v2471 = vcombine.low %v2465, %v2466
    %v2473 = vunpack.c.l.s4 1966171168
    %v2474 = vunpack.c.0.s8 %v2473
    %v2475 = vlaneseq
    %v2476 = vshrl.u32 %v2475, 7
    %v2477 = vsub.s32 %v2474, %v2476
    %v2478 = vrot.slane %v2471, %v2477
    %v2480 = vunpack.c.l.s4 1966171168
    %v2481 = vunpack.c.0.s8 %v2480
    %v2482 = vlaneseq
    %v2483 = vshrl.u32 %v2482, 7
    %v2484 = vsub.s32 %v2481, %v2483
    %v2485 = vrot.slane %v2467, %v2484
    %v2486 = vcombine.low %v2478, %v2485
    %v2488 = vunpack.c.l.s4 1966171168
    %v2489 = vunpack.c.0.s8 %v2488
    %v2490 = vlaneseq
    %v2491 = vshrl.u32 %v2490, 7
    %v2492 = vsub.s32 %v2489, %v2491
    %v2493 = vrot.slane %v2486, %v2492
    %v2495 = vmul.f32 %v2411, %v2493
    %v2497 = vlaneseq
    %v2498 = vshrl.u32 %v2497, 7
    %v2499 = vsub.s32 0, %v2498
    %v2500 = vrot.slane %v2495, %v2499
    %v2501 = vlaneseq
    %v2502 = vshrl.u32 %v2501, 7
    %v2503 = vsub.s32 1, %v2502
    %v2504 = vrot.slane %v2495, %v2503
    %v2505 = vlaneseq
    %v2506 = vshrl.u32 %v2505, 7
    %v2507 = vsub.s32 2, %v2506
    %v2508 = vrot.slane %v2495, %v2507
    %v2512 = vmul.f32 %v2435, %v2500
    %v2513 = vmul.f32 %v2436, %v2504
    %v2514 = vmul.f32 %v2437, %v2508
    %v2516 = vlaneseq
    %v2517 = vshrl.u32 %v2516, 7
    %v2518 = vsub.s32 0, %v2517
    %v2519 = vrot.slane %v2413, %v2518
    %v2520 = vlaneseq
    %v2521 = vshrl.u32 %v2520, 7
    %v2522 = vsub.s32 1, %v2521
    %v2523 = vrot.slane %v2413, %v2522
    %v2524 = vlaneseq
    %v2525 = vshrl.u32 %v2524, 7
    %v2526 = vsub.s32 2, %v2525
    %v2527 = vrot.slane %v2413, %v2526
    %v2531 = vadd.f32 %v2512, %v2519
    %v2532 = vadd.f32 %v2513, %v2523
    %v2533 = vadd.f32 %v2514, %v2527
    %v2534 = vld [vmem:[#allocation8] sm:$0xff]
    %v2535 = vld [vmem:[#allocation8 + $0x8] sm:$0xff]
    %v2536 = vld [vmem:[#allocation8 + $0x10] sm:$0xff]
    %v2537 = vld [vmem:[#allocation8 + $0x18] sm:$0xff]
    %v2538 = vld [vmem:[#allocation8 + $0x20] sm:$0xff]
    %v2539 = vld [vmem:[#allocation8 + $0x28] sm:$0xff]
    %v2540 = vld [vmem:[#allocation8 + $0x30] sm:$0xff]
    %v2541 = vld [vmem:[#allocation8 + $0x38] sm:$0xff]
    %v2542 = vld [vmem:[#allocation8 + $0x40] sm:$0xff]
    %v2543 = vld [vmem:[#allocation8 + $0x48] sm:$0xff]
    %v2544 = vld [vmem:[#allocation8 + $0x50] sm:$0xff]
    %v2545 = vld [vmem:[#allocation8 + $0x58] sm:$0xff]
    %v2546 = vld [vmem:[#allocation8 + $0x60] sm:$0xff]
    %v2547 = vld [vmem:[#allocation8 + $0x68] sm:$0xff]
    %v2548 = vld [vmem:[#allocation8 + $0x70] sm:$0xff]
    %v2549 = vld [vmem:[#allocation8 + $0x78] sm:$0xff]
    %v2550 = vld [vmem:[#allocation8 + $0x80] sm:$0xff]
    %v2551 = vld [vmem:[#allocation8 + $0x88] sm:$0xff]
    %v2552 = vld [vmem:[#allocation8 + $0x90] sm:$0xff]
    %v2553 = vld [vmem:[#allocation8 + $0x98] sm:$0xff]
    %v2554 = vld [vmem:[#allocation8 + $0xa0] sm:$0xff]
    %v2555 = vld [vmem:[#allocation8 + $0xa8] sm:$0xff]
    %v2556 = vld [vmem:[#allocation8 + $0xb0] sm:$0xff]
    %v2557 = vld [vmem:[#allocation8 + $0xb8] sm:$0xff]
    %v2558 = vld [vmem:[#allocation8 + $0xc0] sm:$0xff]
    %v2559 = vld [vmem:[#allocation8 + $0xc8] sm:$0xff]
    %v2560 = vld [vmem:[#allocation8 + $0xd0] sm:$0xff]
    %v2561 = vld [vmem:[#allocation8 + $0xd8] sm:$0xff]
    %v2562 = vld [vmem:[#allocation8 + $0xe0] sm:$0xff]
    %v2563 = vld [vmem:[#allocation8 + $0xe8] sm:$0xff]
    %v2564 = vld [vmem:[#allocation8 + $0xf0] sm:$0xff]
    %v2565 = vld [vmem:[#allocation8 + $0xf8] sm:$0xff]
    %v2566 = vld [vmem:[#allocation8 + $0x100] sm:$0xff]
    %v2567 = vld [vmem:[#allocation8 + $0x108] sm:$0xff]
    %v2568 = vld [vmem:[#allocation8 + $0x110] sm:$0xff]
    %v2569 = vld [vmem:[#allocation8 + $0x118] sm:$0xff]
    %v2570 = vunpack.c.l.s8.bf16 %v2534
    %v2571 = vunpack.c.l.s8.bf16 %v2535
    %v2572 = vunpack.c.l.s8.bf16 %v2536
    %v2573 = vunpack.c.h.s8.bf16 %v2534
    %v2574 = vunpack.c.h.s8.bf16 %v2535
    %v2575 = vunpack.c.h.s8.bf16 %v2536
    %v2576 = vunpack.c.l.s8.bf16 %v2537
    %v2577 = vunpack.c.l.s8.bf16 %v2538
    %v2578 = vunpack.c.l.s8.bf16 %v2539
    %v2579 = vunpack.c.h.s8.bf16 %v2537
    %v2580 = vunpack.c.h.s8.bf16 %v2538
    %v2581 = vunpack.c.h.s8.bf16 %v2539
    %v2582 = vunpack.c.l.s8.bf16 %v2540
    %v2583 = vunpack.c.l.s8.bf16 %v2541
    %v2584 = vunpack.c.l.s8.bf16 %v2542
    %v2585 = vunpack.c.h.s8.bf16 %v2540
    %v2586 = vunpack.c.h.s8.bf16 %v2541
    %v2587 = vunpack.c.h.s8.bf16 %v2542
    %v2588 = vunpack.c.l.s8.bf16 %v2543
    %v2589 = vunpack.c.l.s8.bf16 %v2544
    %v2590 = vunpack.c.l.s8.bf16 %v2545
    %v2591 = vunpack.c.h.s8.bf16 %v2543
    %v2592 = vunpack.c.h.s8.bf16 %v2544
    %v2593 = vunpack.c.h.s8.bf16 %v2545
    %v2594 = vunpack.c.l.s8.bf16 %v2546
    %v2595 = vunpack.c.l.s8.bf16 %v2547
    %v2596 = vunpack.c.l.s8.bf16 %v2548
    %v2597 = vunpack.c.h.s8.bf16 %v2546
    %v2598 = vunpack.c.h.s8.bf16 %v2547
    %v2599 = vunpack.c.h.s8.bf16 %v2548
    %v2600 = vunpack.c.l.s8.bf16 %v2549
    %v2601 = vunpack.c.l.s8.bf16 %v2550
    %v2602 = vunpack.c.l.s8.bf16 %v2551
    %v2603 = vunpack.c.h.s8.bf16 %v2549
    %v2604 = vunpack.c.h.s8.bf16 %v2550
    %v2605 = vunpack.c.h.s8.bf16 %v2551
    %v2606 = vunpack.c.l.s8.bf16 %v2552
    %v2607 = vunpack.c.l.s8.bf16 %v2553
    %v2608 = vunpack.c.l.s8.bf16 %v2554
    %v2609 = vunpack.c.h.s8.bf16 %v2552
    %v2610 = vunpack.c.h.s8.bf16 %v2553
    %v2611 = vunpack.c.h.s8.bf16 %v2554
    %v2612 = vunpack.c.l.s8.bf16 %v2555
    %v2613 = vunpack.c.l.s8.bf16 %v2556
    %v2614 = vunpack.c.l.s8.bf16 %v2557
    %v2615 = vunpack.c.h.s8.bf16 %v2555
    %v2616 = vunpack.c.h.s8.bf16 %v2556
    %v2617 = vunpack.c.h.s8.bf16 %v2557
    %v2618 = vunpack.c.l.s8.bf16 %v2558
    %v2619 = vunpack.c.l.s8.bf16 %v2559
    %v2620 = vunpack.c.l.s8.bf16 %v2560
    %v2621 = vunpack.c.h.s8.bf16 %v2558
    %v2622 = vunpack.c.h.s8.bf16 %v2559
    %v2623 = vunpack.c.h.s8.bf16 %v2560
    %v2624 = vunpack.c.l.s8.bf16 %v2561
    %v2625 = vunpack.c.l.s8.bf16 %v2562
    %v2626 = vunpack.c.l.s8.bf16 %v2563
    %v2627 = vunpack.c.h.s8.bf16 %v2561
    %v2628 = vunpack.c.h.s8.bf16 %v2562
    %v2629 = vunpack.c.h.s8.bf16 %v2563
    %v2630 = vunpack.c.l.s8.bf16 %v2564
    %v2631 = vunpack.c.l.s8.bf16 %v2565
    %v2632 = vunpack.c.l.s8.bf16 %v2566
    %v2633 = vunpack.c.h.s8.bf16 %v2564
    %v2634 = vunpack.c.h.s8.bf16 %v2565
    %v2635 = vunpack.c.h.s8.bf16 %v2566
    %v2636 = vunpack.c.l.s8.bf16 %v2567
    %v2637 = vunpack.c.l.s8.bf16 %v2568
    %v2638 = vunpack.c.l.s8.bf16 %v2569
    %v2639 = vunpack.c.h.s8.bf16 %v2567
    %v2640 = vunpack.c.h.s8.bf16 %v2568
    %v2641 = vunpack.c.h.s8.bf16 %v2569
    %v2642 = vpack.c.bf16 %v2531, %v2531
    %v2643 = vpack.c.bf16 %v2532, %v2532
    %v2644 = vpack.c.bf16 %v2533, %v2533
    %2645 = vmatprep.subr.bf16.mxu0 %v2592
    %2646 = vmatpush1.bf16.msra.mxu0 %v2591
    %2647 = vmatprep.subr.bf16.mxu0 %v2589
    %2648 = vmatpush1.bf16.msra.mxu0 %v2588
    %2649 = vmatprep.subr.bf16.mxu0 %v2586
    %2650 = vmatpush1.bf16.msra.mxu0 %v2585
    %2651 = vmatprep.subr.bf16.mxu0 %v2583
    %2652 = vmatpush1.bf16.msra.mxu0 %v2582
    %2653 = vmatprep.subr.bf16.mxu0 %v2580
    %2654 = vmatpush1.bf16.msra.mxu0 %v2579
    %2655 = vmatprep.subr.bf16.mxu0 %v2577
    %2656 = vmatpush1.bf16.msra.mxu0 %v2576
    %2657 = vmatprep.subr.bf16.mxu0 %v2574
    %2658 = vmatpush1.bf16.msra.mxu0 %v2573
    %2659 = vmatprep.subr.bf16.mxu0 %v2571
    %2660 = vmatpush1.bf16.msra.mxu0 %v2570
    %2661 = vmatprep.subr.bf16.mxu0 %v2616
    %2662 = vmatpush2.bf16.msra.mxu0 %v2615
    %2663 = vmatprep.subr.bf16.mxu0 %v2613
    %2664 = vmatpush2.bf16.msra.mxu0 %v2612
    %2665 = vmatprep.subr.bf16.mxu0 %v2610
    %2666 = vmatpush2.bf16.msra.mxu0 %v2609
    %2667 = vmatprep.subr.bf16.mxu0 %v2607
    %2668 = vmatpush2.bf16.msra.mxu0 %v2606
    %2669 = vmatprep.subr.bf16.mxu0 %v2604
    %2670 = vmatpush2.bf16.msra.mxu0 %v2603
    %2671 = vmatprep.subr.bf16.mxu0 %v2601
    %2672 = vmatpush2.bf16.msra.mxu0 %v2600
    %2673 = vmatprep.subr.bf16.mxu0 %v2598
    %2674 = vmatpush2.bf16.msra.mxu0 %v2597
    %2675 = vmatprep.subr.bf16.mxu0 %v2595
    %2676 = vmatpush2.bf16.msra.mxu0 %v2594
    %2677 = vmatprep.mubr.bf16.mxu0 %v2643
    %2678 = vmatmul.mubr.bf16.gmra.mxu0 %v2642
    %v2679 = vpop.f32.mrf.mxu0
    %v2680 = vadd.f32 0.0, %v2679
    %v2681 = vpop.f32.mrf.mxu0
    %v2682 = vadd.f32 0.0, %v2681
    %v2683 = vpop.f32.mrf.mxu0
    %v2684 = vpop.f32.mrf.mxu0
    %2685 = vdwg.mxu0
    %2686 = vmatprep.subr.bf16.mxu0 %v2640
    %2687 = vmatpush1.bf16.msra.mxu0 %v2639
    %2688 = vmatprep.subr.bf16.mxu0 %v2637
    %2689 = vmatpush1.bf16.msra.mxu0 %v2636
    %2690 = vmatprep.subr.bf16.mxu0 %v2634
    %2691 = vmatpush1.bf16.msra.mxu0 %v2633
    %2692 = vmatprep.subr.bf16.mxu0 %v2631
    %2693 = vmatpush1.bf16.msra.mxu0 %v2630
    %2694 = vmatprep.subr.bf16.mxu0 %v2628
    %2695 = vmatpush1.bf16.msra.mxu0 %v2627
    %2696 = vmatprep.subr.bf16.mxu0 %v2625
    %2697 = vmatpush1.bf16.msra.mxu0 %v2624
    %2698 = vmatprep.subr.bf16.mxu0 %v2622
    %2699 = vmatpush1.bf16.msra.mxu0 %v2621
    %2700 = vmatprep.subr.bf16.mxu0 %v2619
    %2701 = vmatpush1.bf16.msra.mxu0 %v2618
    %2702 = vmatprep.subr.bf16.mxu0 0
    %2703 = vmatpush2.bf16.msra.mxu0 0
    %2704 = vmatprep.subr.bf16.mxu0 0
    %2705 = vmatpush2.bf16.msra.mxu0 0
    %2706 = vmatprep.subr.bf16.mxu0 0
    %2707 = vmatpush2.bf16.msra.mxu0 0
    %2708 = vmatprep.subr.bf16.mxu0 0
    %2709 = vmatpush2.bf16.msra.mxu0 0
    %2710 = vmatprep.subr.bf16.mxu0 0
    %2711 = vmatpush2.bf16.msra.mxu0 0
    %2712 = vmatprep.subr.bf16.mxu0 0
    %2713 = vmatpush2.bf16.msra.mxu0 0
    %2714 = vmatprep.subr.bf16.mxu0 0
    %2715 = vmatpush2.bf16.msra.mxu0 0
    %2716 = vmatprep.subr.bf16.mxu0 0
    %2717 = vmatpush2.bf16.msra.mxu0 0
    %2718 = vmatprep.mubr.bf16.mxu0 0
    %2719 = vmatmul.mubr.bf16.gmra.mxu0 %v2644
    %v2720 = vpop.f32.mrf.mxu0
    %v2721 = vadd.f32 %v2680, %v2720
    %v2722 = vpop.f32.mrf.mxu0
    %v2723 = vadd.f32 %v2682, %v2722
    %v2724 = vpop.f32.mrf.mxu0
    %v2725 = vpop.f32.mrf.mxu0
    %2726 = vdwg.mxu0
    %2727 = vmatprep.subr.bf16.mxu0 0
    %2728 = vmatpush1.bf16.msra.mxu0 %v2593
    %2729 = vmatprep.subr.bf16.mxu0 0
    %2730 = vmatpush1.bf16.msra.mxu0 %v2590
    %2731 = vmatprep.subr.bf16.mxu0 0
    %2732 = vmatpush1.bf16.msra.mxu0 %v2587
    %2733 = vmatprep.subr.bf16.mxu0 0
    %2734 = vmatpush1.bf16.msra.mxu0 %v2584
    %2735 = vmatprep.subr.bf16.mxu0 0
    %2736 = vmatpush1.bf16.msra.mxu0 %v2581
    %2737 = vmatprep.subr.bf16.mxu0 0
    %2738 = vmatpush1.bf16.msra.mxu0 %v2578
    %2739 = vmatprep.subr.bf16.mxu0 0
    %2740 = vmatpush1.bf16.msra.mxu0 %v2575
    %2741 = vmatprep.subr.bf16.mxu0 0
    %2742 = vmatpush1.bf16.msra.mxu0 %v2572
    %2743 = vmatprep.subr.bf16.mxu0 0
    %2744 = vmatpush2.bf16.msra.mxu0 %v2617
    %2745 = vmatprep.subr.bf16.mxu0 0
    %2746 = vmatpush2.bf16.msra.mxu0 %v2614
    %2747 = vmatprep.subr.bf16.mxu0 0
    %2748 = vmatpush2.bf16.msra.mxu0 %v2611
    %2749 = vmatprep.subr.bf16.mxu0 0
    %2750 = vmatpush2.bf16.msra.mxu0 %v2608
    %2751 = vmatprep.subr.bf16.mxu0 0
    %2752 = vmatpush2.bf16.msra.mxu0 %v2605
    %2753 = vmatprep.subr.bf16.mxu0 0
    %2754 = vmatpush2.bf16.msra.mxu0 %v2602
    %2755 = vmatprep.subr.bf16.mxu0 0
    %2756 = vmatpush2.bf16.msra.mxu0 %v2599
    %2757 = vmatprep.subr.bf16.mxu0 0
    %2758 = vmatpush2.bf16.msra.mxu0 %v2596
    %2759 = vmatprep.mubr.bf16.mxu0 %v2643
    %2760 = vmatmul.mubr.bf16.gmra.mxu0 %v2642
    %v2761 = vpop.f32.mrf.mxu0
    %v2762 = vadd.f32 0.0, %v2761
    %v2763 = vpop.f32.mrf.mxu0
    %v2764 = vpop.f32.mrf.mxu0
    %v2765 = vpop.f32.mrf.mxu0
    %2766 = vdwg.mxu0
    %2767 = vmatprep.subr.bf16.mxu0 0
    %2768 = vmatpush1.bf16.msra.mxu0 %v2641
    %2769 = vmatprep.subr.bf16.mxu0 0
    %2770 = vmatpush1.bf16.msra.mxu0 %v2638
    %2771 = vmatprep.subr.bf16.mxu0 0
    %2772 = vmatpush1.bf16.msra.mxu0 %v2635
    %2773 = vmatprep.subr.bf16.mxu0 0
    %2774 = vmatpush1.bf16.msra.mxu0 %v2632
    %2775 = vmatprep.subr.bf16.mxu0 0
    %2776 = vmatpush1.bf16.msra.mxu0 %v2629
    %2777 = vmatprep.subr.bf16.mxu0 0
    %2778 = vmatpush1.bf16.msra.mxu0 %v2626
    %2779 = vmatprep.subr.bf16.mxu0 0
    %2780 = vmatpush1.bf16.msra.mxu0 %v2623
    %2781 = vmatprep.subr.bf16.mxu0 0
    %2782 = vmatpush1.bf16.msra.mxu0 %v2620
    %2783 = vmatprep.subr.bf16.mxu0 0
    %2784 = vmatpush2.bf16.msra.mxu0 0
    %2785 = vmatprep.subr.bf16.mxu0 0
    %2786 = vmatpush2.bf16.msra.mxu0 0
    %2787 = vmatprep.subr.bf16.mxu0 0
    %2788 = vmatpush2.bf16.msra.mxu0 0
    %2789 = vmatprep.subr.bf16.mxu0 0
    %2790 = vmatpush2.bf16.msra.mxu0 0
    %2791 = vmatprep.subr.bf16.mxu0 0
    %2792 = vmatpush2.bf16.msra.mxu0 0
    %2793 = vmatprep.subr.bf16.mxu0 0
    %2794 = vmatpush2.bf16.msra.mxu0 0
    %2795 = vmatprep.subr.bf16.mxu0 0
    %2796 = vmatpush2.bf16.msra.mxu0 0
    %2797 = vmatprep.subr.bf16.mxu0 0
    %2798 = vmatpush2.bf16.msra.mxu0 0
    %2799 = vmatprep.mubr.bf16.mxu0 0
    %2800 = vmatmul.mubr.bf16.gmra.mxu0 %v2644
    %v2801 = vpop.f32.mrf.mxu0
    %v2802 = vadd.f32 %v2762, %v2801
    %v2803 = vpop.f32.mrf.mxu0
    %v2804 = vpop.f32.mrf.mxu0
    %v2805 = vpop.f32.mrf.mxu0
    %2806 = vdwg.mxu0
    %s2807 = scalar_lea.vmem [#allocation11], 96
    %v2808 = vld [vmem:[%s2807] ss:$8 sm:$0x7]
    %s2809 = scalar_lea.vmem [#allocation11], 3
    %v2810 = vld [vmem:[%s2809] ss:$8 sm:$0x7]
    %v2812 = vlaneseq
    %v2813 = vshrl.u32 %v2812, 7
    %v2814 = vsub.s32 0, %v2813
    %v2815 = vrot.slane %v2808, %v2814
    %v2816 = vlaneseq
    %v2817 = vshrl.u32 %v2816, 7
    %v2818 = vsub.s32 1, %v2817
    %v2819 = vrot.slane %v2808, %v2818
    %v2820 = vlaneseq
    %v2821 = vshrl.u32 %v2820, 7
    %v2822 = vsub.s32 2, %v2821
    %v2823 = vrot.slane %v2808, %v2822
    %v2827 = vmul.f32 %v2721, %v2815
    %v2828 = vmul.f32 %v2723, %v2819
    %v2829 = vmul.f32 %v2802, %v2823
    %v2831 = vlaneseq
    %v2832 = vshrl.u32 %v2831, 7
    %v2833 = vsub.s32 0, %v2832
    %v2834 = vrot.slane %v2810, %v2833
    %v2835 = vlaneseq
    %v2836 = vshrl.u32 %v2835, 7
    %v2837 = vsub.s32 1, %v2836
    %v2838 = vrot.slane %v2810, %v2837
    %v2839 = vlaneseq
    %v2840 = vshrl.u32 %v2839, 7
    %v2841 = vsub.s32 2, %v2840
    %v2842 = vrot.slane %v2810, %v2841
    %v2846 = vadd.f32 %v2827, %v2834
    %v2847 = vadd.f32 %v2828, %v2838
    %v2848 = vadd.f32 %v2829, %v2842
    %v2849 = vmax.f32 %v2846, 0.0
    %v2850 = vmax.f32 %v2847, 0.0
    %v2851 = vmax.f32 %v2848, 0.0
    %s2852 = scalar_lea.vmem [#allocation11], 48
    %v2853 = vld [vmem:[%s2852] ss:$8 sm:$0x7]
    %s2854 = scalar_lea.vmem [#allocation11], 52
    %v2855 = vld [vmem:[%s2854] ss:$8 sm:$0x7]
    %v2856 = vrot.slane %v2849, 4
    %v2857 = vadd.f32 %v2849, %v2856
    %v2858 = vrot.slane %v2857, 2
    %v2859 = vadd.f32 %v2857, %v2858
    %v2860 = vrot.slane %v2859, 1
    %v2861 = vadd.f32 %v2859, %v2860
    %v2862 = vrot.slane %v2850, 4
    %v2863 = vadd.f32 %v2850, %v2862
    %v2864 = vrot.slane %v2863, 2
    %v2865 = vadd.f32 %v2863, %v2864
    %v2866 = vrot.slane %v2865, 1
    %v2867 = vadd.f32 %v2865, %v2866
    %v2868 = vrot.slane %v2851, 4
    %v2869 = vadd.f32 %v2851, %v2868
    %v2870 = vrot.slane %v2869, 2
    %v2871 = vadd.f32 %v2869, %v2870
    %v2872 = vrot.slane %v2871, 1
    %v2873 = vadd.f32 %v2871, %v2872
    %v2874 = vmul.f32 %v2861, %v1106
    %v2875 = vmul.f32 %v2867, %v1106
    %v2876 = vmul.f32 %v2873, %v1106
    %v2877 = vsub.f32 %v2849, %v2874
    %v2878 = vsub.f32 %v2850, %v2875
    %v2879 = vsub.f32 %v2851, %v2876
    %v2880 = vmul.f32 %v2877, %v2877
    %v2881 = vmul.f32 %v2878, %v2878
    %v2882 = vmul.f32 %v2879, %v2879
    %v2883 = vrot.slane %v2880, 4
    %v2884 = vadd.f32 %v2880, %v2883
    %v2885 = vrot.slane %v2884, 2
    %v2886 = vadd.f32 %v2884, %v2885
    %v2887 = vrot.slane %v2886, 1
    %v2888 = vadd.f32 %v2886, %v2887
    %v2889 = vrot.slane %v2881, 4
    %v2890 = vadd.f32 %v2881, %v2889
    %v2891 = vrot.slane %v2890, 2
    %v2892 = vadd.f32 %v2890, %v2891
    %v2893 = vrot.slane %v2892, 1
    %v2894 = vadd.f32 %v2892, %v2893
    %v2895 = vrot.slane %v2882, 4
    %v2896 = vadd.f32 %v2882, %v2895
    %v2897 = vrot.slane %v2896, 2
    %v2898 = vadd.f32 %v2896, %v2897
    %v2899 = vrot.slane %v2898, 1
    %v2900 = vadd.f32 %v2898, %v2899
    %v2901 = vmul.f32 %v2888, %v1106
    %v2902 = vmul.f32 %v2894, %v1106
    %v2903 = vmul.f32 %v2900, %v1106
    %v2904 = vadd.f32 %v2901, 1e-05
    %v2905 = vadd.f32 %v2902, 1e-05
    %v2906 = vadd.f32 %v2903, 1e-05
    %v2907 = vrsqrt.pop %v2904
    %v2908 = vrsqrt.pop %v2905
    %v2909 = vrsqrt.pop %v2906
    %v2913 = vcombine.low %v2907, %v2908
    %v2915 = vunpack.c.l.s4 1966171168
    %v2916 = vunpack.c.0.s8 %v2915
    %v2917 = vlaneseq
    %v2918 = vshrl.u32 %v2917, 7
    %v2919 = vsub.s32 %v2916, %v2918
    %v2920 = vrot.slane %v2913, %v2919
    %v2922 = vunpack.c.l.s4 1966171168
    %v2923 = vunpack.c.0.s8 %v2922
    %v2924 = vlaneseq
    %v2925 = vshrl.u32 %v2924, 7
    %v2926 = vsub.s32 %v2923, %v2925
    %v2927 = vrot.slane %v2909, %v2926
    %v2928 = vcombine.low %v2920, %v2927
    %v2930 = vunpack.c.l.s4 1966171168
    %v2931 = vunpack.c.0.s8 %v2930
    %v2932 = vlaneseq
    %v2933 = vshrl.u32 %v2932, 7
    %v2934 = vsub.s32 %v2931, %v2933
    %v2935 = vrot.slane %v2928, %v2934
    %v2937 = vmul.f32 %v2853, %v2935
    %v2939 = vlaneseq
    %v2940 = vshrl.u32 %v2939, 7
    %v2941 = vsub.s32 0, %v2940
    %v2942 = vrot.slane %v2937, %v2941
    %v2943 = vlaneseq
    %v2944 = vshrl.u32 %v2943, 7
    %v2945 = vsub.s32 1, %v2944
    %v2946 = vrot.slane %v2937, %v2945
    %v2947 = vlaneseq
    %v2948 = vshrl.u32 %v2947, 7
    %v2949 = vsub.s32 2, %v2948
    %v2950 = vrot.slane %v2937, %v2949
    %v2954 = vmul.f32 %v2877, %v2942
    %v2955 = vmul.f32 %v2878, %v2946
    %v2956 = vmul.f32 %v2879, %v2950
    %v2958 = vlaneseq
    %v2959 = vshrl.u32 %v2958, 7
    %v2960 = vsub.s32 0, %v2959
    %v2961 = vrot.slane %v2855, %v2960
    %v2962 = vlaneseq
    %v2963 = vshrl.u32 %v2962, 7
    %v2964 = vsub.s32 1, %v2963
    %v2965 = vrot.slane %v2855, %v2964
    %v2966 = vlaneseq
    %v2967 = vshrl.u32 %v2966, 7
    %v2968 = vsub.s32 2, %v2967
    %v2969 = vrot.slane %v2855, %v2968
    %v2973 = vadd.f32 %v2954, %v2961
    %v2974 = vadd.f32 %v2955, %v2965
    %v2975 = vadd.f32 %v2956, %v2969
    %v2976 = vld [vmem:[#allocation10] sm:$0xff]
    %v2977 = vld [vmem:[#allocation10 + $0x8] sm:$0xff]
    %v2978 = vld [vmem:[#allocation10 + $0x10] sm:$0xff]
    %v2979 = vld [vmem:[#allocation10 + $0x18] sm:$0xff]
    %v2980 = vld [vmem:[#allocation10 + $0x20] sm:$0xff]
    %v2981 = vld [vmem:[#allocation10 + $0x28] sm:$0xff]
    %v2982 = vld [vmem:[#allocation10 + $0x30] sm:$0xff]
    %v2983 = vld [vmem:[#allocation10 + $0x38] sm:$0xff]
    %v2984 = vld [vmem:[#allocation10 + $0x40] sm:$0xff]
    %v2985 = vld [vmem:[#allocation10 + $0x48] sm:$0xff]
    %v2986 = vld [vmem:[#allocation10 + $0x50] sm:$0xff]
    %v2987 = vld [vmem:[#allocation10 + $0x58] sm:$0xff]
    %v2988 = vld [vmem:[#allocation10 + $0x60] sm:$0xff]
    %v2989 = vld [vmem:[#allocation10 + $0x68] sm:$0xff]
    %v2990 = vld [vmem:[#allocation10 + $0x70] sm:$0xff]
    %v2991 = vld [vmem:[#allocation10 + $0x78] sm:$0xff]
    %v2992 = vld [vmem:[#allocation10 + $0x80] sm:$0xff]
    %v2993 = vld [vmem:[#allocation10 + $0x88] sm:$0xff]
    %v2994 = vld [vmem:[#allocation10 + $0x90] sm:$0xff]
    %v2995 = vld [vmem:[#allocation10 + $0x98] sm:$0xff]
    %v2996 = vld [vmem:[#allocation10 + $0xa0] sm:$0xff]
    %v2997 = vld [vmem:[#allocation10 + $0xa8] sm:$0xff]
    %v2998 = vld [vmem:[#allocation10 + $0xb0] sm:$0xff]
    %v2999 = vld [vmem:[#allocation10 + $0xb8] sm:$0xff]
    %v3000 = vld [vmem:[#allocation10 + $0xc0] sm:$0xff]
    %v3001 = vld [vmem:[#allocation10 + $0xc8] sm:$0xff]
    %v3002 = vld [vmem:[#allocation10 + $0xd0] sm:$0xff]
    %v3003 = vld [vmem:[#allocation10 + $0xd8] sm:$0xff]
    %v3004 = vld [vmem:[#allocation10 + $0xe0] sm:$0xff]
    %v3005 = vld [vmem:[#allocation10 + $0xe8] sm:$0xff]
    %v3006 = vld [vmem:[#allocation10 + $0xf0] sm:$0xff]
    %v3007 = vld [vmem:[#allocation10 + $0xf8] sm:$0xff]
    %v3008 = vld [vmem:[#allocation10 + $0x100] sm:$0xff]
    %v3009 = vld [vmem:[#allocation10 + $0x108] sm:$0xff]
    %v3010 = vld [vmem:[#allocation10 + $0x110] sm:$0xff]
    %v3011 = vld [vmem:[#allocation10 + $0x118] sm:$0xff]
    %v3012 = vunpack.c.l.s8.bf16 %v2976
    %v3013 = vunpack.c.l.s8.bf16 %v2977
    %v3014 = vunpack.c.l.s8.bf16 %v2978
    %v3015 = vunpack.c.h.s8.bf16 %v2976
    %v3016 = vunpack.c.h.s8.bf16 %v2977
    %v3017 = vunpack.c.h.s8.bf16 %v2978
    %v3018 = vunpack.c.l.s8.bf16 %v2979
    %v3019 = vunpack.c.l.s8.bf16 %v2980
    %v3020 = vunpack.c.l.s8.bf16 %v2981
    %v3021 = vunpack.c.h.s8.bf16 %v2979
    %v3022 = vunpack.c.h.s8.bf16 %v2980
    %v3023 = vunpack.c.h.s8.bf16 %v2981
    %v3024 = vunpack.c.l.s8.bf16 %v2982
    %v3025 = vunpack.c.l.s8.bf16 %v2983
    %v3026 = vunpack.c.l.s8.bf16 %v2984
    %v3027 = vunpack.c.h.s8.bf16 %v2982
    %v3028 = vunpack.c.h.s8.bf16 %v2983
    %v3029 = vunpack.c.h.s8.bf16 %v2984
    %v3030 = vunpack.c.l.s8.bf16 %v2985
    %v3031 = vunpack.c.l.s8.bf16 %v2986
    %v3032 = vunpack.c.l.s8.bf16 %v2987
    %v3033 = vunpack.c.h.s8.bf16 %v2985
    %v3034 = vunpack.c.h.s8.bf16 %v2986
    %v3035 = vunpack.c.h.s8.bf16 %v2987
    %v3036 = vunpack.c.l.s8.bf16 %v2988
    %v3037 = vunpack.c.l.s8.bf16 %v2989
    %v3038 = vunpack.c.l.s8.bf16 %v2990
    %v3039 = vunpack.c.h.s8.bf16 %v2988
    %v3040 = vunpack.c.h.s8.bf16 %v2989
    %v3041 = vunpack.c.h.s8.bf16 %v2990
    %v3042 = vunpack.c.l.s8.bf16 %v2991
    %v3043 = vunpack.c.l.s8.bf16 %v2992
    %v3044 = vunpack.c.l.s8.bf16 %v2993
    %v3045 = vunpack.c.h.s8.bf16 %v2991
    %v3046 = vunpack.c.h.s8.bf16 %v2992
    %v3047 = vunpack.c.h.s8.bf16 %v2993
    %v3048 = vunpack.c.l.s8.bf16 %v2994
    %v3049 = vunpack.c.l.s8.bf16 %v2995
    %v3050 = vunpack.c.l.s8.bf16 %v2996
    %v3051 = vunpack.c.h.s8.bf16 %v2994
    %v3052 = vunpack.c.h.s8.bf16 %v2995
    %v3053 = vunpack.c.h.s8.bf16 %v2996
    %v3054 = vunpack.c.l.s8.bf16 %v2997
    %v3055 = vunpack.c.l.s8.bf16 %v2998
    %v3056 = vunpack.c.l.s8.bf16 %v2999
    %v3057 = vunpack.c.h.s8.bf16 %v2997
    %v3058 = vunpack.c.h.s8.bf16 %v2998
    %v3059 = vunpack.c.h.s8.bf16 %v2999
    %v3060 = vunpack.c.l.s8.bf16 %v3000
    %v3061 = vunpack.c.l.s8.bf16 %v3001
    %v3062 = vunpack.c.l.s8.bf16 %v3002
    %v3063 = vunpack.c.h.s8.bf16 %v3000
    %v3064 = vunpack.c.h.s8.bf16 %v3001
    %v3065 = vunpack.c.h.s8.bf16 %v3002
    %v3066 = vunpack.c.l.s8.bf16 %v3003
    %v3067 = vunpack.c.l.s8.bf16 %v3004
    %v3068 = vunpack.c.l.s8.bf16 %v3005
    %v3069 = vunpack.c.h.s8.bf16 %v3003
    %v3070 = vunpack.c.h.s8.bf16 %v3004
    %v3071 = vunpack.c.h.s8.bf16 %v3005
    %v3072 = vunpack.c.l.s8.bf16 %v3006
    %v3073 = vunpack.c.l.s8.bf16 %v3007
    %v3074 = vunpack.c.l.s8.bf16 %v3008
    %v3075 = vunpack.c.h.s8.bf16 %v3006
    %v3076 = vunpack.c.h.s8.bf16 %v3007
    %v3077 = vunpack.c.h.s8.bf16 %v3008
    %v3078 = vunpack.c.l.s8.bf16 %v3009
    %v3079 = vunpack.c.l.s8.bf16 %v3010
    %v3080 = vunpack.c.l.s8.bf16 %v3011
    %v3081 = vunpack.c.h.s8.bf16 %v3009
    %v3082 = vunpack.c.h.s8.bf16 %v3010
    %v3083 = vunpack.c.h.s8.bf16 %v3011
    %v3084 = vpack.c.bf16 %v2973, %v2973
    %v3085 = vpack.c.bf16 %v2974, %v2974
    %v3086 = vpack.c.bf16 %v2975, %v2975
    %3087 = vmatprep.subr.bf16.mxu0 %v3034
    %3088 = vmatpush1.bf16.msra.mxu0 %v3033
    %3089 = vmatprep.subr.bf16.mxu0 %v3031
    %3090 = vmatpush1.bf16.msra.mxu0 %v3030
    %3091 = vmatprep.subr.bf16.mxu0 %v3028
    %3092 = vmatpush1.bf16.msra.mxu0 %v3027
    %3093 = vmatprep.subr.bf16.mxu0 %v3025
    %3094 = vmatpush1.bf16.msra.mxu0 %v3024
    %3095 = vmatprep.subr.bf16.mxu0 %v3022
    %3096 = vmatpush1.bf16.msra.mxu0 %v3021
    %3097 = vmatprep.subr.bf16.mxu0 %v3019
    %3098 = vmatpush1.bf16.msra.mxu0 %v3018
    %3099 = vmatprep.subr.bf16.mxu0 %v3016
    %3100 = vmatpush1.bf16.msra.mxu0 %v3015
    %3101 = vmatprep.subr.bf16.mxu0 %v3013
    %3102 = vmatpush1.bf16.msra.mxu0 %v3012
    %3103 = vmatprep.subr.bf16.mxu0 %v3058
    %3104 = vmatpush2.bf16.msra.mxu0 %v3057
    %3105 = vmatprep.subr.bf16.mxu0 %v3055
    %3106 = vmatpush2.bf16.msra.mxu0 %v3054
    %3107 = vmatprep.subr.bf16.mxu0 %v3052
    %3108 = vmatpush2.bf16.msra.mxu0 %v3051
    %3109 = vmatprep.subr.bf16.mxu0 %v3049
    %3110 = vmatpush2.bf16.msra.mxu0 %v3048
    %3111 = vmatprep.subr.bf16.mxu0 %v3046
    %3112 = vmatpush2.bf16.msra.mxu0 %v3045
    %3113 = vmatprep.subr.bf16.mxu0 %v3043
    %3114 = vmatpush2.bf16.msra.mxu0 %v3042
    %3115 = vmatprep.subr.bf16.mxu0 %v3040
    %3116 = vmatpush2.bf16.msra.mxu0 %v3039
    %3117 = vmatprep.subr.bf16.mxu0 %v3037
    %3118 = vmatpush2.bf16.msra.mxu0 %v3036
    %3119 = vmatprep.mubr.bf16.mxu0 %v3085
    %3120 = vmatmul.mubr.bf16.gmra.mxu0 %v3084
    %v3121 = vpop.f32.mrf.mxu0
    %v3122 = vadd.f32 0.0, %v3121
    %v3123 = vpop.f32.mrf.mxu0
    %v3124 = vadd.f32 0.0, %v3123
    %v3125 = vpop.f32.mrf.mxu0
    %v3126 = vpop.f32.mrf.mxu0
    %3127 = vdwg.mxu0
    %3128 = vmatprep.subr.bf16.mxu0 %v3082
    %3129 = vmatpush1.bf16.msra.mxu0 %v3081
    %3130 = vmatprep.subr.bf16.mxu0 %v3079
    %3131 = vmatpush1.bf16.msra.mxu0 %v3078
    %3132 = vmatprep.subr.bf16.mxu0 %v3076
    %3133 = vmatpush1.bf16.msra.mxu0 %v3075
    %3134 = vmatprep.subr.bf16.mxu0 %v3073
    %3135 = vmatpush1.bf16.msra.mxu0 %v3072
    %3136 = vmatprep.subr.bf16.mxu0 %v3070
    %3137 = vmatpush1.bf16.msra.mxu0 %v3069
    %3138 = vmatprep.subr.bf16.mxu0 %v3067
    %3139 = vmatpush1.bf16.msra.mxu0 %v3066
    %3140 = vmatprep.subr.bf16.mxu0 %v3064
    %3141 = vmatpush1.bf16.msra.mxu0 %v3063
    %3142 = vmatprep.subr.bf16.mxu0 %v3061
    %3143 = vmatpush1.bf16.msra.mxu0 %v3060
    %3144 = vmatprep.subr.bf16.mxu0 0
    %3145 = vmatpush2.bf16.msra.mxu0 0
    %3146 = vmatprep.subr.bf16.mxu0 0
    %3147 = vmatpush2.bf16.msra.mxu0 0
    %3148 = vmatprep.subr.bf16.mxu0 0
    %3149 = vmatpush2.bf16.msra.mxu0 0
    %3150 = vmatprep.subr.bf16.mxu0 0
    %3151 = vmatpush2.bf16.msra.mxu0 0
    %3152 = vmatprep.subr.bf16.mxu0 0
    %3153 = vmatpush2.bf16.msra.mxu0 0
    %3154 = vmatprep.subr.bf16.mxu0 0
    %3155 = vmatpush2.bf16.msra.mxu0 0
    %3156 = vmatprep.subr.bf16.mxu0 0
    %3157 = vmatpush2.bf16.msra.mxu0 0
    %3158 = vmatprep.subr.bf16.mxu0 0
    %3159 = vmatpush2.bf16.msra.mxu0 0
    %3160 = vmatprep.mubr.bf16.mxu0 0
    %3161 = vmatmul.mubr.bf16.gmra.mxu0 %v3086
    %v3162 = vpop.f32.mrf.mxu0
    %v3163 = vadd.f32 %v3122, %v3162
    %v3164 = vpop.f32.mrf.mxu0
    %v3165 = vadd.f32 %v3124, %v3164
    %v3166 = vpop.f32.mrf.mxu0
    %v3167 = vpop.f32.mrf.mxu0
    %3168 = vdwg.mxu0
    %3169 = vmatprep.subr.bf16.mxu0 0
    %3170 = vmatpush1.bf16.msra.mxu0 %v3035
    %3171 = vmatprep.subr.bf16.mxu0 0
    %3172 = vmatpush1.bf16.msra.mxu0 %v3032
    %3173 = vmatprep.subr.bf16.mxu0 0
    %3174 = vmatpush1.bf16.msra.mxu0 %v3029
    %3175 = vmatprep.subr.bf16.mxu0 0
    %3176 = vmatpush1.bf16.msra.mxu0 %v3026
    %3177 = vmatprep.subr.bf16.mxu0 0
    %3178 = vmatpush1.bf16.msra.mxu0 %v3023
    %3179 = vmatprep.subr.bf16.mxu0 0
    %3180 = vmatpush1.bf16.msra.mxu0 %v3020
    %3181 = vmatprep.subr.bf16.mxu0 0
    %3182 = vmatpush1.bf16.msra.mxu0 %v3017
    %3183 = vmatprep.subr.bf16.mxu0 0
    %3184 = vmatpush1.bf16.msra.mxu0 %v3014
    %3185 = vmatprep.subr.bf16.mxu0 0
    %3186 = vmatpush2.bf16.msra.mxu0 %v3059
    %3187 = vmatprep.subr.bf16.mxu0 0
    %3188 = vmatpush2.bf16.msra.mxu0 %v3056
    %3189 = vmatprep.subr.bf16.mxu0 0
    %3190 = vmatpush2.bf16.msra.mxu0 %v3053
    %3191 = vmatprep.subr.bf16.mxu0 0
    %3192 = vmatpush2.bf16.msra.mxu0 %v3050
    %3193 = vmatprep.subr.bf16.mxu0 0
    %3194 = vmatpush2.bf16.msra.mxu0 %v3047
    %3195 = vmatprep.subr.bf16.mxu0 0
    %3196 = vmatpush2.bf16.msra.mxu0 %v3044
    %3197 = vmatprep.subr.bf16.mxu0 0
    %3198 = vmatpush2.bf16.msra.mxu0 %v3041
    %3199 = vmatprep.subr.bf16.mxu0 0
    %3200 = vmatpush2.bf16.msra.mxu0 %v3038
    %3201 = vmatprep.mubr.bf16.mxu0 %v3085
    %3202 = vmatmul.mubr.bf16.gmra.mxu0 %v3084
    %v3203 = vpop.f32.mrf.mxu0
    %v3204 = vadd.f32 0.0, %v3203
    %v3205 = vpop.f32.mrf.mxu0
    %v3206 = vpop.f32.mrf.mxu0
    %v3207 = vpop.f32.mrf.mxu0
    %3208 = vdwg.mxu0
    %3209 = vmatprep.subr.bf16.mxu0 0
    %3210 = vmatpush1.bf16.msra.mxu0 %v3083
    %3211 = vmatprep.subr.bf16.mxu0 0
    %3212 = vmatpush1.bf16.msra.mxu0 %v3080
    %3213 = vmatprep.subr.bf16.mxu0 0
    %3214 = vmatpush1.bf16.msra.mxu0 %v3077
    %3215 = vmatprep.subr.bf16.mxu0 0
    %3216 = vmatpush1.bf16.msra.mxu0 %v3074
    %3217 = vmatprep.subr.bf16.mxu0 0
    %3218 = vmatpush1.bf16.msra.mxu0 %v3071
    %3219 = vmatprep.subr.bf16.mxu0 0
    %3220 = vmatpush1.bf16.msra.mxu0 %v3068
    %3221 = vmatprep.subr.bf16.mxu0 0
    %3222 = vmatpush1.bf16.msra.mxu0 %v3065
    %3223 = vmatprep.subr.bf16.mxu0 0
    %3224 = vmatpush1.bf16.msra.mxu0 %v3062
    %3225 = vmatprep.subr.bf16.mxu0 0
    %3226 = vmatpush2.bf16.msra.mxu0 0
    %3227 = vmatprep.subr.bf16.mxu0 0
    %3228 = vmatpush2.bf16.msra.mxu0 0
    %3229 = vmatprep.subr.bf16.mxu0 0
    %3230 = vmatpush2.bf16.msra.mxu0 0
    %3231 = vmatprep.subr.bf16.mxu0 0
    %3232 = vmatpush2.bf16.msra.mxu0 0
    %3233 = vmatprep.subr.bf16.mxu0 0
    %3234 = vmatpush2.bf16.msra.mxu0 0
    %3235 = vmatprep.subr.bf16.mxu0 0
    %3236 = vmatpush2.bf16.msra.mxu0 0
    %3237 = vmatprep.subr.bf16.mxu0 0
    %3238 = vmatpush2.bf16.msra.mxu0 0
    %3239 = vmatprep.subr.bf16.mxu0 0
    %3240 = vmatpush2.bf16.msra.mxu0 0
    %3241 = vmatprep.mubr.bf16.mxu0 0
    %3242 = vmatmul.mubr.bf16.gmra.mxu0 %v3086
    %v3243 = vpop.f32.mrf.mxu0
    %v3244 = vadd.f32 %v3204, %v3243
    %v3245 = vpop.f32.mrf.mxu0
    %v3246 = vpop.f32.mrf.mxu0
    %v3247 = vpop.f32.mrf.mxu0
    %3248 = vdwg.mxu0
    %s3249 = scalar_lea.vmem [#allocation11], 97
    %v3250 = vld [vmem:[%s3249] ss:$8 sm:$0x7]
    %s3251 = scalar_lea.vmem [#allocation11], 4
    %v3252 = vld [vmem:[%s3251] ss:$8 sm:$0x7]
    %v3254 = vlaneseq
    %v3255 = vshrl.u32 %v3254, 7
    %v3256 = vsub.s32 0, %v3255
    %v3257 = vrot.slane %v3250, %v3256
    %v3258 = vlaneseq
    %v3259 = vshrl.u32 %v3258, 7
    %v3260 = vsub.s32 1, %v3259
    %v3261 = vrot.slane %v3250, %v3260
    %v3262 = vlaneseq
    %v3263 = vshrl.u32 %v3262, 7
    %v3264 = vsub.s32 2, %v3263
    %v3265 = vrot.slane %v3250, %v3264
    %v3269 = vmul.f32 %v3163, %v3257
    %v3270 = vmul.f32 %v3165, %v3261
    %v3271 = vmul.f32 %v3244, %v3265
    %v3273 = vlaneseq
    %v3274 = vshrl.u32 %v3273, 7
    %v3275 = vsub.s32 0, %v3274
    %v3276 = vrot.slane %v3252, %v3275
    %v3277 = vlaneseq
    %v3278 = vshrl.u32 %v3277, 7
    %v3279 = vsub.s32 1, %v3278
    %v3280 = vrot.slane %v3252, %v3279
    %v3281 = vlaneseq
    %v3282 = vshrl.u32 %v3281, 7
    %v3283 = vsub.s32 2, %v3282
    %v3284 = vrot.slane %v3252, %v3283
    %v3288 = vadd.f32 %v3269, %v3276
    %v3289 = vadd.f32 %v3270, %v3280
    %v3290 = vadd.f32 %v3271, %v3284
    %v3291 = vtanh.pop %v3288
    %v3292 = vtanh.pop %v3289
    %v3293 = vtanh.pop %v3290
    %3294 = vst [vmem:[#allocation13] sm:$0xff] %v3291
    %3295 = vst [vmem:[#allocation13 + $0x8] sm:$0xff] %v3292
    %3296 = vst [vmem:[#allocation13 + $0x10] sm:$0xff] %v3293
    // Predicated region
    $region54: #{embedding_layers_forward.2} parent=1 // pred_check
      _
    $region55: #{embedding_layers_forward.2} parent=1 // pred_check_branch
      %3298 = sbr.rel (0) target = $region57
    $region56: #{embedding_layers_forward.2} parent=1 // pred_region
      %s3300 = ssub.s32 384, 384
      %3301 = vsyncadd [#allocation4], %s3300
      %s3303 = sshll.u32 [#allocation13], 4
      %s3304 = int_to_ptr.vmem [resolvable:$true] %s3303
      %3306 = dma.vmem_to_hbm [thread:$0]  %s3304, 384, %s7, [#allocation4]
    $region57: #{embedding_layers_forward.2} parent=1 // pred_fallthru
      _
    // Predicated region
    $region58: #{embedding_layers_forward.2} parent=1 // pred_check
      _
    $region59: #{embedding_layers_forward.2} parent=1 // pred_check_branch
      %3308 = sbr.rel (0) target = $region61
    $region60: #{embedding_layers_forward.2} parent=1 // pred_region
      %3309 = dma.done [#allocation4], 384
    $region61: #{embedding_layers_forward.2} parent=1 // pred_fallthru
      _
    %3310 = vsyncpa [#allocation3], 1
    %3311 = vsyncpa [#allocation6], 1
    %3312 = vsyncpa [#allocation9], 1
    %3313 = vsyncpa [#allocation12], 1
    %3314 = vsyncpa [#allocation4], 1

</llo_original>
